<compile_context>
chip_gen: v7x
topology: tpu7x:2x2x1
jax: 0.10.0
libtpu: 0.0.40
codegen_flags: <defaults>
</compile_context>

<pallas_src>
import functools

import jax
import jax.numpy as jnp
import numpy as np
from jax import lax
from jax.experimental import pallas as pl
from jax.experimental.pallas import tpu as pltpu


# ---------------------------------------------------------------------------
# Kernel
# ---------------------------------------------------------------------------
def _lstm_fc_kernel(x_ref, w_ih_ref, w_hh_ref, b_ref, fcw_ref, fcb_ref,
                    out_ref, xproj_sc, h_sc, c_sc, *, t_total, unroll):
    tc = pl.program_id(1)
    n_tc = pl.num_programs(1)
    t_chunk, bt, e = x_ref.shape
    hp = w_hh_ref.shape[0]
    # Masking only needed if T was zero-padded to a multiple of T_CHUNK.
    need_mask = (t_total % t_chunk) != 0

    @pl.when(tc == 0)
    def _init():
        h_sc[...] = jnp.zeros_like(h_sc)
        c_sc[...] = jnp.zeros_like(c_sc)

    # ---- Chunk prologue: x-projection for T_CHUNK timesteps in one MXU matmul.
    # The reshape only merges leading dims (E is 128-aligned) -> no relayout.
    x_flat = x_ref[...].reshape(t_chunk * bt, e)
    xp = jnp.dot(x_flat, w_ih_ref[...], preferred_element_type=jnp.float32)
    xproj_sc[...] = (xp.reshape(t_chunk, bt, 4 * hp)
                     + b_ref[...]).astype(xproj_sc.dtype)

    w_hh = w_hh_ref[...]  # grid-invariant, single-buffered

    # ---- Serial recurrence over this chunk; h/c updated in place in VMEM.
    def one_step(t):
        gates = xproj_sc[t].astype(jnp.float32) + jnp.dot(
            h_sc[...].astype(w_hh.dtype), w_hh,
            preferred_element_type=jnp.float32)              # (bt, 4hp)
        sig = jax.nn.sigmoid(gates[:, :3 * hp])              # fused [i | f | o]
        i_g = sig[:, 0 * hp:1 * hp]
        f_g = sig[:, 1 * hp:2 * hp]
        o_g = sig[:, 2 * hp:3 * hp]
        g_g = jnp.tanh(gates[:, 3 * hp:4 * hp])
        c_new = f_g * c_sc[...] + i_g * g_g
        h_new = o_g * jnp.tanh(c_new)
        if need_mask:  # zero-padded tail timesteps must not update the state
            valid = (tc * t_chunk + t) < t_total
            c_new = jnp.where(valid, c_new, c_sc[...])
            h_new = jnp.where(valid, h_new, h_sc[...])
        c_sc[...] = c_new
        h_sc[...] = h_new

    def body(it, carry):  # manual partial unroll (unroll divides t_chunk)
        base = it * unroll
        for u in range(unroll):
            one_step(base + u)
        return carry

    lax.fori_loop(0, t_chunk // unroll, body, 0)

    # ---- Classifier head on the final hidden state (lane-dense output).
    @pl.when(tc == n_tc - 1)
    def _fc_head():
        out_ref[...] = (jnp.dot(h_sc[...].astype(fcw_ref.dtype), fcw_ref[...],
                                preferred_element_type=jnp.float32)
                        + fcb_ref[...]).astype(out_ref.dtype)


# ---------------------------------------------------------------------------
# Wrapper: embedding gather (JAX glue) + padding + pallas_call
# ---------------------------------------------------------------------------
def _round_up(n, m):
    return ((n + m - 1) // m) * m


def _pad_axis(x, target, axis):
    pad = target - x.shape[axis]
    if pad <= 0:
        return x
    widths = [(0, 0)] * x.ndim
    widths[axis] = (0, pad)
    return jnp.pad(x, widths)


def _reorder_pad_gate_rows(w, H, Hp):
    """(4H, ...) in PyTorch order [i,f,g,o] -> (4Hp, ...) in order [i,f,o,g],
    each gate block zero-padded H -> Hp (padding is mathematically inert)."""
    i, f, g, o = (w[k * H:(k + 1) * H] for k in range(4))
    pad = ((0, Hp - H),) + ((0, 0),) * (w.ndim - 1)
    return jnp.concatenate([jnp.pad(p, pad) for p in (i, f, o, g)], axis=0)


def text_rnn_classifier_forward(text, params, *, t_chunk_target=16,
                                b_tile_max=256, use_bf16=False):
    """Forward: embedding (JAX gather) -> LSTM + fc head (single Pallas kernel)."""
    B, T = text.shape
    emb_table = params["embedding"]
    E = emb_table.shape[1]
    H = params["w_hh"].shape[1]          # w_hh: (4H, H)
    O = params["fc_w"].shape[0]          # fc_w: (O, H)

    # Hardware-friendly padded sizes.
    Hp = _round_up(H, 128)               # per-gate lane alignment
    Ep = _round_up(E, 128)               # lane-dense x / unmasked MXU K dim
    Op = _round_up(O, 128)               # lane-dense final store

    # Batch tiling: fill sublanes; cap tile size; prefer >=2 tiles (v7x
    # megacore) once the batch can be split at sublane granularity.
    Bp = _round_up(B, 8)
    B_TILE = min(Bp, b_tile_max)
    if Bp // B_TILE < 2 and Bp >= 16:
        B_TILE = _round_up(pl.cdiv(Bp, 2), 8)
    Bp = _round_up(Bp, B_TILE)

    # Time chunking: bounds VMEM; padded tail timesteps are masked in-kernel.
    T_CHUNK = min(T, t_chunk_target)
    T_pad = _round_up(T, T_CHUNK)
    unroll = 4 if T_CHUNK % 4 == 0 else (2 if T_CHUNK % 2 == 0 else 1)

    compute_dtype = jnp.bfloat16 if use_bf16 else jnp.float32

    # Embedded sequence, time-major: gather on transposed int32 indices.
    x = jnp.take(emb_table, text.T, axis=0).astype(compute_dtype)  # (T, B, E)
    x = _pad_axis(x, T_pad, 0)
    x = _pad_axis(x, Bp, 1)
    x = _pad_axis(x, Ep, 2)                                        # (Tp, Bp, Ep)

    # Weights: reorder gates, pad per gate to Hp, pre-transpose for jnp.dot.
    w_ih_t = _pad_axis(_reorder_pad_gate_rows(params["w_ih"], H, Hp).T,
                       Ep, 0).astype(compute_dtype)                # (Ep, 4Hp)
    w_hh_t = _pad_axis(_reorder_pad_gate_rows(params["w_hh"], H, Hp),
                       Hp, 1).T.astype(compute_dtype)              # (Hp, 4Hp)
    b = _reorder_pad_gate_rows((params["b_ih"] + params["b_hh"])[:, None],
                               H, Hp).reshape(1, 4 * Hp).astype(jnp.float32)
    fcw_t = _pad_axis(_pad_axis(params["fc_w"], Hp, 1),
                      Op, 0).T.astype(compute_dtype)               # (Hp, Op)
    fcb = _pad_axis(params["fc_b"], Op, 0).reshape(1, Op).astype(jnp.float32)

    # Explicit scoped-VMEM budget from the chunked buffer sizes (+ headroom).
    item = 2 if use_bf16 else 4
    est = (2 * T_CHUNK * B_TILE * Ep * item          # x chunks (double-buffered)
           + T_CHUNK * B_TILE * 4 * Hp * item        # xproj scratch
           + (Ep + Hp) * 4 * Hp * item               # W_ih^T + W_hh^T (single)
           + Hp * Op * item + 4 * Hp * 4 + Op * 4    # fc weights + biases
           + 2 * B_TILE * Op * 4                     # output (double-buffered)
           + 2 * B_TILE * Hp * 4)                    # h/c scratch
    vmem_limit = min(max(int(est * 1.5) + (4 << 20), 16 << 20), 120 << 20)

    kernel = functools.partial(_lstm_fc_kernel, t_total=T, unroll=unroll)

    def build(single_buffer_weights):
        def wspec(shape):
            if single_buffer_weights:
                # Grid-invariant operands: no double buffering needed.
                return pl.BlockSpec(shape, lambda bi, ti: (0, 0),
                                    pipeline_mode=pl.Buffered(1))
            return pl.BlockSpec(shape, lambda bi, ti: (0, 0))

        return pl.pallas_call(
            kernel,
            out_shape=jax.ShapeDtypeStruct((Bp, Op), jnp.float32),
            grid_spec=pltpu.PrefetchScalarGridSpec(
                num_scalar_prefetch=0,
                grid=(Bp // B_TILE, T_pad // T_CHUNK),   # (batch tiles, time chunks)
                in_specs=[
                    pl.BlockSpec((T_CHUNK, B_TILE, Ep),
                                 lambda bi, ti: (ti, bi, 0)),   # x chunk
                    wspec((Ep, 4 * Hp)),                        # W_ih^T
                    wspec((Hp, 4 * Hp)),                        # W_hh^T
                    wspec((1, 4 * Hp)),                         # combined bias
                    wspec((Hp, Op)),                            # fc W^T
                    wspec((1, Op)),                             # fc b
                ],
                out_specs=pl.BlockSpec((B_TILE, Op), lambda bi, ti: (bi, 0)),
                scratch_shapes=[
                    pltpu.VMEM((T_CHUNK, B_TILE, 4 * Hp), compute_dtype),  # xproj
                    pltpu.VMEM((B_TILE, Hp), jnp.float32),                 # h
                    pltpu.VMEM((B_TILE, Hp), jnp.float32),                 # c
                ],
            ),
            compiler_params=pltpu.CompilerParams(
                dimension_semantics=("parallel", "arbitrary"),
                vmem_limit_bytes=vmem_limit),
        )

    try:
        out_padded = build(True)(x, w_ih_t, w_hh_t, b, fcw_t, fcb)
    except Exception:
        # Fallback for jax versions without BlockSpec(pipeline_mode=...).
        out_padded = build(False)(x, w_ih_t, w_hh_t, b, fcw_t, fcb)

    return out_padded[:B, :O]


# ---------------------------------------------------------------------------
# Params + pure-JAX reference (mirrors the PyTorch module)
# ---------------------------------------------------------------------------
def make_params(key, vocab_size, embed_dim, hidden_dim, output_dim):
    """Deterministic init mirroring nn.Embedding / nn.LSTM / nn.Linear shapes."""
    ks = jax.random.split(key, 7)
    emb = jax.random.normal(ks[0], (vocab_size, embed_dim), jnp.float32)
    emb = emb.at[0].set(0.0)                       # padding_idx=0 row is zero
    k = 1.0 / np.sqrt(hidden_dim)

    def u(kk, shape):
        return jax.random.uniform(kk, shape, jnp.float32, -k, k)

    return {
        "embedding": emb,
        "w_ih": u(ks[1], (4 * hidden_dim, embed_dim)),
        "w_hh": u(ks[2], (4 * hidden_dim, hidden_dim)),
        "b_ih": u(ks[3], (4 * hidden_dim,)),
        "b_hh": u(ks[4], (4 * hidden_dim,)),
        "fc_w": u(ks[5], (output_dim, hidden_dim)),
        "fc_b": u(ks[6], (output_dim,)),
    }


def reference_forward(text, params):
    """Pure-JAX reference of the PyTorch forward (LSTM, num_layers=1)."""
    B, T = text.shape
    H = params["w_hh"].shape[1]
    x = jnp.take(params["embedding"], text, axis=0)        # (B, T, E)
    h = jnp.zeros((B, H), jnp.float32)
    c = jnp.zeros((B, H), jnp.float32)
    w_ih_t = params["w_ih"].T
    w_hh_t = params["w_hh"].T
    b = params["b_ih"] + params["b_hh"]
    for t in range(T):
        gates = x[:, t, :] @ w_ih_t + h @ w_hh_t + b
        i = jax.nn.sigmoid(gates[:, 0 * H:1 * H])
        f = jax.nn.sigmoid(gates[:, 1 * H:2 * H])
        g = jnp.tanh(gates[:, 2 * H:3 * H])
        o = jax.nn.sigmoid(gates[:, 3 * H:4 * H])
        c = f * c + i * g
        h = o * jnp.tanh(c)
    return h @ params["fc_w"].T + params["fc_b"]


if __name__ == "__main__":
    VOCAB, EMBED, HIDDEN, OUT = 20, 16, 32, 4
    B, T = 2, 8

    key = jax.random.PRNGKey(0)
    pkey, tkey = jax.random.split(key)
    params = make_params(pkey, VOCAB, EMBED, HIDDEN, OUT)
    text = jax.random.randint(tkey, (B, T), 0, VOCAB, dtype=jnp.int32)

    logits = text_rnn_classifier_forward(text, params)
    logits = jax.block_until_ready(logits)

    ref = reference_forward(text, params)
    np.testing.assert_allclose(np.asarray(logits), np.asarray(ref),
                               rtol=1e-5, atol=1e-5)
    print("KERNEL_OK")
</pallas_src>

<mosaic_0001>
module attributes {stable_mosaic.version = 11 : i64} {
  func.func @_lstm_fc_kernel(%arg0: i32, %arg1: i32, %arg2: memref<8x8x128xf32, #tpu.memory_space<vmem>>, %arg3: memref<128x512xf32, #tpu.memory_space<vmem>>, %arg4: memref<128x512xf32, #tpu.memory_space<vmem>>, %arg5: memref<1x512xf32, #tpu.memory_space<vmem>>, %arg6: memref<128x128xf32, #tpu.memory_space<vmem>>, %arg7: memref<1x128xf32, #tpu.memory_space<vmem>>, %arg8: memref<8x128xf32, #tpu.memory_space<vmem>>, %arg9: memref<8x8x512xf32, #tpu.memory_space<vmem>>, %arg10: memref<8x128xf32, #tpu.memory_space<vmem>>, %arg11: memref<8x128xf32, #tpu.memory_space<vmem>>) attributes {dimension_semantics = [#tpu.dimension_semantics<parallel>, #tpu.dimension_semantics<arbitrary>], iteration_bounds = array<i64: 1, 1>, scalar_prefetch = 0 : i64, scratch_operands = 3 : i64, tpu.core_type = #tpu.core_type<tc>, window_params = [{transform_indices = @transform_0, window_bounds = array<i64: 8, 8, 128>}, {pipeline_mode = #tpu.pipeline_mode<synchronous>, transform_indices = @transform_1, window_bounds = array<i64: 128, 512>}, {pipeline_mode = #tpu.pipeline_mode<synchronous>, transform_indices = @transform_2, window_bounds = array<i64: 128, 512>}, {pipeline_mode = #tpu.pipeline_mode<synchronous>, transform_indices = @transform_3, window_bounds = array<i64: 1, 512>}, {pipeline_mode = #tpu.pipeline_mode<synchronous>, transform_indices = @transform_4, window_bounds = array<i64: 128, 128>}, {pipeline_mode = #tpu.pipeline_mode<synchronous>, transform_indices = @transform_5, window_bounds = array<i64: 1, 128>}, {transform_indices = @transform_6, window_bounds = array<i64: 8, 128>}]} {
    %c0_i32 = arith.constant 0 : i32
    %0 = arith.cmpi eq, %arg1, %c0_i32 : i32
    %1 = arith.extui %0 : i1 to i32
    %c0_i32_0 = arith.constant 0 : i32
    %2 = arith.cmpi ne, %1, %c0_i32_0 : i32
    scf.if %2 {
      %cst_16 = arith.constant 0.000000e+00 : f32
      %18 = vector.broadcast %cst_16 : f32 to vector<8x128xf32>
      %c0_17 = arith.constant 0 : index
      %c0_18 = arith.constant 0 : index
      %19 = vector.load %arg10[%c0_17, %c0_18] : memref<8x128xf32, #tpu.memory_space<vmem>>, vector<8x128xf32>
      tpu.vector_store %arg10[%c0_17, %c0_18], %18 {strides = array<i32>} : memref<8x128xf32, #tpu.memory_space<vmem>>, vector<8x128xf32>,
      %cst_19 = arith.constant 0.000000e+00 : f32
      %20 = vector.broadcast %cst_19 : f32 to vector<8x128xf32>
      %c0_20 = arith.constant 0 : index
      %c0_21 = arith.constant 0 : index
      %21 = vector.load %arg11[%c0_20, %c0_21] : memref<8x128xf32, #tpu.memory_space<vmem>>, vector<8x128xf32>
      tpu.vector_store %arg11[%c0_20, %c0_21], %20 {strides = array<i32>} : memref<8x128xf32, #tpu.memory_space<vmem>>, vector<8x128xf32>,
    } else {
    }
    %c0 = arith.constant 0 : index
    %c0_1 = arith.constant 0 : index
    %c0_2 = arith.constant 0 : index
    %3 = vector.load %arg2[%c0, %c0_1, %c0_2] : memref<8x8x128xf32, #tpu.memory_space<vmem>>, vector<8x8x128xf32>
    %4 = vector.shape_cast %3 : vector<8x8x128xf32> to vector<64x128xf32>
    %c0_3 = arith.constant 0 : index
    %c0_4 = arith.constant 0 : index
    %5 = vector.load %arg3[%c0_3, %c0_4] : memref<128x512xf32, #tpu.memory_space<vmem>>, vector<128x512xf32>
    %cst = arith.constant dense<0.000000e+00> : vector<64x512xf32>
    %6 = tpu.matmul %4, %5, %cst {dimension_numbers = #tpu.dot_dimension_numbers<[1], [0], [0], [1], [0, 0, 1, 1], [], []>} : vector<64x128xf32>, vector<128x512xf32>, vector<64x512xf32> -> vector<64x512xf32>
    %7 = vector.shape_cast %6 : vector<64x512xf32> to vector<8x8x512xf32>
    %c0_5 = arith.constant 0 : index
    %c0_6 = arith.constant 0 : index
    %8 = vector.load %arg5[%c0_5, %c0_6] : memref<1x512xf32, #tpu.memory_space<vmem>>, vector<1x512xf32>
    %9 = vector.shape_cast %8 : vector<1x512xf32> to vector<1x1x512xf32>
    %10 = vector.broadcast %9 : vector<1x1x512xf32> to vector<8x8x512xf32>
    %11 = arith.addf %7, %10 : vector<8x8x512xf32>
    %c0_7 = arith.constant 0 : index
    %c0_8 = arith.constant 0 : index
    %c0_9 = arith.constant 0 : index
    %12 = vector.load %arg9[%c0_7, %c0_8, %c0_9] : memref<8x8x512xf32, #tpu.memory_space<vmem>>, vector<8x8x512xf32>
    tpu.vector_store %arg9[%c0_7, %c0_8, %c0_9], %11 {strides = array<i32>} : memref<8x8x512xf32, #tpu.memory_space<vmem>>, vector<8x8x512xf32>,
    %c0_10 = arith.constant 0 : index
    %c0_11 = arith.constant 0 : index
    %13 = vector.load %arg4[%c0_10, %c0_11] : memref<128x512xf32, #tpu.memory_space<vmem>>, vector<128x512xf32>
    %c0_i32_12 = arith.constant 0 : i32
    %c2_i32 = arith.constant 2 : i32
    %14 = arith.addi %c0_i32_12, %c2_i32 : i32
    %c1_i32 = arith.constant 1 : i32
    scf.for %arg12 = %c0_i32_12 to %14 step %c1_i32  : i32 {
      %c4_i32 = arith.constant 4 : i32
      %18 = arith.muli %arg12, %c4_i32 : i32
      %c0_i32_16 = arith.constant 0 : i32
      %19 = arith.addi %18, %c0_i32_16 : i32
      %20 = arith.index_cast %19 : i32 to index
      %c0_17 = arith.constant 0 : index
      %c0_18 = arith.constant 0 : index
      %21 = vector.load %arg9[%20, %c0_17, %c0_18] : memref<8x8x512xf32, #tpu.memory_space<vmem>>, vector<1x8x512xf32>
      %22 = vector.shape_cast %21 : vector<1x8x512xf32> to vector<8x512xf32>
      %c0_19 = arith.constant 0 : index
      %c0_20 = arith.constant 0 : index
      %23 = vector.load %arg10[%c0_19, %c0_20] : memref<8x128xf32, #tpu.memory_space<vmem>>, vector<8x128xf32>
      %cst_21 = arith.constant dense<0.000000e+00> : vector<8x512xf32>
      %24 = tpu.matmul %23, %13, %cst_21 {dimension_numbers = #tpu.dot_dimension_numbers<[1], [0], [0], [1], [0, 0, 1, 1], [], []>} : vector<8x128xf32>, vector<128x512xf32>, vector<8x512xf32> -> vector<8x512xf32>
      %25 = arith.addf %22, %24 : vector<8x512xf32>
      %26 = vector.extract_strided_slice %25 {offsets = [0, 0], sizes = [8, 384], strides = [1, 1]} : vector<8x512xf32> to vector<8x384xf32>
      %27 = arith.negf %26 : vector<8x384xf32>
      %28 = math.exp %27 : vector<8x384xf32>
      %cst_22 = arith.constant 1.000000e+00 : f32
      %29 = vector.broadcast %cst_22 : f32 to vector<8x384xf32>
      %30 = arith.addf %29, %28 : vector<8x384xf32>
      %31 = arith.divf %29, %30 : vector<8x384xf32>
      %32 = vector.extract_strided_slice %31 {offsets = [0, 0], sizes = [8, 128], strides = [1, 1]} : vector<8x384xf32> to vector<8x128xf32>
      %33 = vector.extract_strided_slice %31 {offsets = [0, 128], sizes = [8, 128], strides = [1, 1]} : vector<8x384xf32> to vector<8x128xf32>
      %34 = vector.extract_strided_slice %31 {offsets = [0, 256], sizes = [8, 128], strides = [1, 1]} : vector<8x384xf32> to vector<8x128xf32>
      %35 = vector.extract_strided_slice %25 {offsets = [0, 384], sizes = [8, 128], strides = [1, 1]} : vector<8x512xf32> to vector<8x128xf32>
      %36 = math.tanh %35 : vector<8x128xf32>
      %c0_23 = arith.constant 0 : index
      %c0_24 = arith.constant 0 : index
      %37 = vector.load %arg11[%c0_23, %c0_24] : memref<8x128xf32, #tpu.memory_space<vmem>>, vector<8x128xf32>
      %38 = arith.mulf %33, %37 : vector<8x128xf32>
      %39 = arith.mulf %32, %36 : vector<8x128xf32>
      %40 = arith.addf %38, %39 : vector<8x128xf32>
      %41 = math.tanh %40 : vector<8x128xf32>
      %42 = arith.mulf %34, %41 : vector<8x128xf32>
      %c0_25 = arith.constant 0 : index
      %c0_26 = arith.constant 0 : index
      %43 = vector.load %arg11[%c0_25, %c0_26] : memref<8x128xf32, #tpu.memory_space<vmem>>, vector<8x128xf32>
      tpu.vector_store %arg11[%c0_25, %c0_26], %40 {strides = array<i32>} : memref<8x128xf32, #tpu.memory_space<vmem>>, vector<8x128xf32>,
      %c0_27 = arith.constant 0 : index
      %c0_28 = arith.constant 0 : index
      %44 = vector.load %arg10[%c0_27, %c0_28] : memref<8x128xf32, #tpu.memory_space<vmem>>, vector<8x128xf32>
      tpu.vector_store %arg10[%c0_27, %c0_28], %42 {strides = array<i32>} : memref<8x128xf32, #tpu.memory_space<vmem>>, vector<8x128xf32>,
      %c1_i32_29 = arith.constant 1 : i32
      %45 = arith.addi %18, %c1_i32_29 : i32
      %46 = arith.index_cast %45 : i32 to index
      %c0_30 = arith.constant 0 : index
      %c0_31 = arith.constant 0 : index
      %47 = vector.load %arg9[%46, %c0_30, %c0_31] : memref<8x8x512xf32, #tpu.memory_space<vmem>>, vector<1x8x512xf32>
      %48 = vector.shape_cast %47 : vector<1x8x512xf32> to vector<8x512xf32>
      %c0_32 = arith.constant 0 : index
      %c0_33 = arith.constant 0 : index
      %49 = vector.load %arg10[%c0_32, %c0_33] : memref<8x128xf32, #tpu.memory_space<vmem>>, vector<8x128xf32>
      %cst_34 = arith.constant dense<0.000000e+00> : vector<8x512xf32>
      %50 = tpu.matmul %49, %13, %cst_34 {dimension_numbers = #tpu.dot_dimension_numbers<[1], [0], [0], [1], [0, 0, 1, 1], [], []>} : vector<8x128xf32>, vector<128x512xf32>, vector<8x512xf32> -> vector<8x512xf32>
      %51 = arith.addf %48, %50 : vector<8x512xf32>
      %52 = vector.extract_strided_slice %51 {offsets = [0, 0], sizes = [8, 384], strides = [1, 1]} : vector<8x512xf32> to vector<8x384xf32>
      %53 = arith.negf %52 : vector<8x384xf32>
      %54 = math.exp %53 : vector<8x384xf32>
      %cst_35 = arith.constant 1.000000e+00 : f32
      %55 = vector.broadcast %cst_35 : f32 to vector<8x384xf32>
      %56 = arith.addf %55, %54 : vector<8x384xf32>
      %57 = arith.divf %55, %56 : vector<8x384xf32>
      %58 = vector.extract_strided_slice %57 {offsets = [0, 0], sizes = [8, 128], strides = [1, 1]} : vector<8x384xf32> to vector<8x128xf32>
      %59 = vector.extract_strided_slice %57 {offsets = [0, 128], sizes = [8, 128], strides = [1, 1]} : vector<8x384xf32> to vector<8x128xf32>
      %60 = vector.extract_strided_slice %57 {offsets = [0, 256], sizes = [8, 128], strides = [1, 1]} : vector<8x384xf32> to vector<8x128xf32>
      %61 = vector.extract_strided_slice %51 {offsets = [0, 384], sizes = [8, 128], strides = [1, 1]} : vector<8x512xf32> to vector<8x128xf32>
      %62 = math.tanh %61 : vector<8x128xf32>
      %c0_36 = arith.constant 0 : index
      %c0_37 = arith.constant 0 : index
      %63 = vector.load %arg11[%c0_36, %c0_37] : memref<8x128xf32, #tpu.memory_space<vmem>>, vector<8x128xf32>
      %64 = arith.mulf %59, %63 : vector<8x128xf32>
      %65 = arith.mulf %58, %62 : vector<8x128xf32>
      %66 = arith.addf %64, %65 : vector<8x128xf32>
      %67 = math.tanh %66 : vector<8x128xf32>
      %68 = arith.mulf %60, %67 : vector<8x128xf32>
      %c0_38 = arith.constant 0 : index
      %c0_39 = arith.constant 0 : index
      %69 = vector.load %arg11[%c0_38, %c0_39] : memref<8x128xf32, #tpu.memory_space<vmem>>, vector<8x128xf32>
      tpu.vector_store %arg11[%c0_38, %c0_39], %66 {strides = array<i32>} : memref<8x128xf32, #tpu.memory_space<vmem>>, vector<8x128xf32>,
      %c0_40 = arith.constant 0 : index
      %c0_41 = arith.constant 0 : index
      %70 = vector.load %arg10[%c0_40, %c0_41] : memref<8x128xf32, #tpu.memory_space<vmem>>, vector<8x128xf32>
      tpu.vector_store %arg10[%c0_40, %c0_41], %68 {strides = array<i32>} : memref<8x128xf32, #tpu.memory_space<vmem>>, vector<8x128xf32>,
      %c2_i32_42 = arith.constant 2 : i32
      %71 = arith.addi %18, %c2_i32_42 : i32
      %72 = arith.index_cast %71 : i32 to index
      %c0_43 = arith.constant 0 : index
      %c0_44 = arith.constant 0 : index
      %73 = vector.load %arg9[%72, %c0_43, %c0_44] : memref<8x8x512xf32, #tpu.memory_space<vmem>>, vector<1x8x512xf32>
      %74 = vector.shape_cast %73 : vector<1x8x512xf32> to vector<8x512xf32>
      %c0_45 = arith.constant 0 : index
      %c0_46 = arith.constant 0 : index
      %75 = vector.load %arg10[%c0_45, %c0_46] : memref<8x128xf32, #tpu.memory_space<vmem>>, vector<8x128xf32>
      %cst_47 = arith.constant dense<0.000000e+00> : vector<8x512xf32>
      %76 = tpu.matmul %75, %13, %cst_47 {dimension_numbers = #tpu.dot_dimension_numbers<[1], [0], [0], [1], [0, 0, 1, 1], [], []>} : vector<8x128xf32>, vector<128x512xf32>, vector<8x512xf32> -> vector<8x512xf32>
      %77 = arith.addf %74, %76 : vector<8x512xf32>
      %78 = vector.extract_strided_slice %77 {offsets = [0, 0], sizes = [8, 384], strides = [1, 1]} : vector<8x512xf32> to vector<8x384xf32>
      %79 = arith.negf %78 : vector<8x384xf32>
      %80 = math.exp %79 : vector<8x384xf32>
      %cst_48 = arith.constant 1.000000e+00 : f32
      %81 = vector.broadcast %cst_48 : f32 to vector<8x384xf32>
      %82 = arith.addf %81, %80 : vector<8x384xf32>
      %83 = arith.divf %81, %82 : vector<8x384xf32>
      %84 = vector.extract_strided_slice %83 {offsets = [0, 0], sizes = [8, 128], strides = [1, 1]} : vector<8x384xf32> to vector<8x128xf32>
      %85 = vector.extract_strided_slice %83 {offsets = [0, 128], sizes = [8, 128], strides = [1, 1]} : vector<8x384xf32> to vector<8x128xf32>
      %86 = vector.extract_strided_slice %83 {offsets = [0, 256], sizes = [8, 128], strides = [1, 1]} : vector<8x384xf32> to vector<8x128xf32>
      %87 = vector.extract_strided_slice %77 {offsets = [0, 384], sizes = [8, 128], strides = [1, 1]} : vector<8x512xf32> to vector<8x128xf32>
      %88 = math.tanh %87 : vector<8x128xf32>
      %c0_49 = arith.constant 0 : index
      %c0_50 = arith.constant 0 : index
      %89 = vector.load %arg11[%c0_49, %c0_50] : memref<8x128xf32, #tpu.memory_space<vmem>>, vector<8x128xf32>
      %90 = arith.mulf %85, %89 : vector<8x128xf32>
      %91 = arith.mulf %84, %88 : vector<8x128xf32>
      %92 = arith.addf %90, %91 : vector<8x128xf32>
      %93 = math.tanh %92 : vector<8x128xf32>
      %94 = arith.mulf %86, %93 : vector<8x128xf32>
      %c0_51 = arith.constant 0 : index
      %c0_52 = arith.constant 0 : index
      %95 = vector.load %arg11[%c0_51, %c0_52] : memref<8x128xf32, #tpu.memory_space<vmem>>, vector<8x128xf32>
      tpu.vector_store %arg11[%c0_51, %c0_52], %92 {strides = array<i32>} : memref<8x128xf32, #tpu.memory_space<vmem>>, vector<8x128xf32>,
      %c0_53 = arith.constant 0 : index
      %c0_54 = arith.constant 0 : index
      %96 = vector.load %arg10[%c0_53, %c0_54] : memref<8x128xf32, #tpu.memory_space<vmem>>, vector<8x128xf32>
      tpu.vector_store %arg10[%c0_53, %c0_54], %94 {strides = array<i32>} : memref<8x128xf32, #tpu.memory_space<vmem>>, vector<8x128xf32>,
      %c3_i32 = arith.constant 3 : i32
      %97 = arith.addi %18, %c3_i32 : i32
      %98 = arith.index_cast %97 : i32 to index
      %c0_55 = arith.constant 0 : index
      %c0_56 = arith.constant 0 : index
      %99 = vector.load %arg9[%98, %c0_55, %c0_56] : memref<8x8x512xf32, #tpu.memory_space<vmem>>, vector<1x8x512xf32>
      %100 = vector.shape_cast %99 : vector<1x8x512xf32> to vector<8x512xf32>
      %c0_57 = arith.constant 0 : index
      %c0_58 = arith.constant 0 : index
      %101 = vector.load %arg10[%c0_57, %c0_58] : memref<8x128xf32, #tpu.memory_space<vmem>>, vector<8x128xf32>
      %cst_59 = arith.constant dense<0.000000e+00> : vector<8x512xf32>
      %102 = tpu.matmul %101, %13, %cst_59 {dimension_numbers = #tpu.dot_dimension_numbers<[1], [0], [0], [1], [0, 0, 1, 1], [], []>} : vector<8x128xf32>, vector<128x512xf32>, vector<8x512xf32> -> vector<8x512xf32>
      %103 = arith.addf %100, %102 : vector<8x512xf32>
      %104 = vector.extract_strided_slice %103 {offsets = [0, 0], sizes = [8, 384], strides = [1, 1]} : vector<8x512xf32> to vector<8x384xf32>
      %105 = arith.negf %104 : vector<8x384xf32>
      %106 = math.exp %105 : vector<8x384xf32>
      %cst_60 = arith.constant 1.000000e+00 : f32
      %107 = vector.broadcast %cst_60 : f32 to vector<8x384xf32>
      %108 = arith.addf %107, %106 : vector<8x384xf32>
      %109 = arith.divf %107, %108 : vector<8x384xf32>
      %110 = vector.extract_strided_slice %109 {offsets = [0, 0], sizes = [8, 128], strides = [1, 1]} : vector<8x384xf32> to vector<8x128xf32>
      %111 = vector.extract_strided_slice %109 {offsets = [0, 128], sizes = [8, 128], strides = [1, 1]} : vector<8x384xf32> to vector<8x128xf32>
      %112 = vector.extract_strided_slice %109 {offsets = [0, 256], sizes = [8, 128], strides = [1, 1]} : vector<8x384xf32> to vector<8x128xf32>
      %113 = vector.extract_strided_slice %103 {offsets = [0, 384], sizes = [8, 128], strides = [1, 1]} : vector<8x512xf32> to vector<8x128xf32>
      %114 = math.tanh %113 : vector<8x128xf32>
      %c0_61 = arith.constant 0 : index
      %c0_62 = arith.constant 0 : index
      %115 = vector.load %arg11[%c0_61, %c0_62] : memref<8x128xf32, #tpu.memory_space<vmem>>, vector<8x128xf32>
      %116 = arith.mulf %111, %115 : vector<8x128xf32>
      %117 = arith.mulf %110, %114 : vector<8x128xf32>
      %118 = arith.addf %116, %117 : vector<8x128xf32>
      %119 = math.tanh %118 : vector<8x128xf32>
      %120 = arith.mulf %112, %119 : vector<8x128xf32>
      %c0_63 = arith.constant 0 : index
      %c0_64 = arith.constant 0 : index
      %121 = vector.load %arg11[%c0_63, %c0_64] : memref<8x128xf32, #tpu.memory_space<vmem>>, vector<8x128xf32>
      tpu.vector_store %arg11[%c0_63, %c0_64], %118 {strides = array<i32>} : memref<8x128xf32, #tpu.memory_space<vmem>>, vector<8x128xf32>,
      %c0_65 = arith.constant 0 : index
      %c0_66 = arith.constant 0 : index
      %122 = vector.load %arg10[%c0_65, %c0_66] : memref<8x128xf32, #tpu.memory_space<vmem>>, vector<8x128xf32>
      tpu.vector_store %arg10[%c0_65, %c0_66], %120 {strides = array<i32>} : memref<8x128xf32, #tpu.memory_space<vmem>>, vector<8x128xf32>,
    }
    %c2_i32_13 = arith.constant 2 : i32
    %c0_i32_14 = arith.constant 0 : i32
    %15 = arith.cmpi eq, %arg1, %c0_i32_14 : i32
    %16 = arith.extui %15 : i1 to i32
    %c0_i32_15 = arith.constant 0 : i32
    %17 = arith.cmpi ne, %16, %c0_i32_15 : i32
    scf.if %17 {
      %c0_16 = arith.constant 0 : index
      %c0_17 = arith.constant 0 : index
      %18 = vector.load %arg10[%c0_16, %c0_17] : memref<8x128xf32, #tpu.memory_space<vmem>>, vector<8x128xf32>
      %c0_18 = arith.constant 0 : index
      %c0_19 = arith.constant 0 : index
      %19 = vector.load %arg6[%c0_18, %c0_19] : memref<128x128xf32, #tpu.memory_space<vmem>>, vector<128x128xf32>
      %cst_20 = arith.constant dense<0.000000e+00> : vector<8x128xf32>
      %20 = tpu.matmul %18, %19, %cst_20 {dimension_numbers = #tpu.dot_dimension_numbers<[1], [0], [0], [1], [0, 0, 1, 1], [], []>} : vector<8x128xf32>, vector<128x128xf32>, vector<8x128xf32> -> vector<8x128xf32>
      %c0_21 = arith.constant 0 : index
      %c0_22 = arith.constant 0 : index
      %21 = vector.load %arg7[%c0_21, %c0_22] : memref<1x128xf32, #tpu.memory_space<vmem>>, vector<1x128xf32>
      %22 = vector.broadcast %21 : vector<1x128xf32> to vector<8x128xf32>
      %23 = arith.addf %20, %22 : vector<8x128xf32>
      %c0_23 = arith.constant 0 : index
      %c0_24 = arith.constant 0 : index
      %24 = vector.load %arg8[%c0_23, %c0_24] : memref<8x128xf32, #tpu.memory_space<vmem>>, vector<8x128xf32>
      tpu.vector_store %arg8[%c0_23, %c0_24], %23 {strides = array<i32>} : memref<8x128xf32, #tpu.memory_space<vmem>>, vector<8x128xf32>,
    } else {
    }
    return
  }
  func.func @transform_0(%arg0: i32, %arg1: i32) -> (i32, i32, i32) {
    %c0_i32 = arith.constant 0 : i32
    %c0_i32_0 = arith.constant 0 : i32
    return %arg1, %arg0, %c0_i32 : i32, i32, i32
  }
  func.func @transform_1(%arg0: i32, %arg1: i32) -> (i32, i32) {
    %c0_i32 = arith.constant 0 : i32
    %c0_i32_0 = arith.constant 0 : i32
    %c0_i32_1 = arith.constant 0 : i32
    return %c0_i32, %c0_i32_0 : i32, i32
  }
  func.func @transform_2(%arg0: i32, %arg1: i32) -> (i32, i32) {
    %c0_i32 = arith.constant 0 : i32
    %c0_i32_0 = arith.constant 0 : i32
    %c0_i32_1 = arith.constant 0 : i32
    return %c0_i32, %c0_i32_0 : i32, i32
  }
  func.func @transform_3(%arg0: i32, %arg1: i32) -> (i32, i32) {
    %c0_i32 = arith.constant 0 : i32
    %c0_i32_0 = arith.constant 0 : i32
    %c0_i32_1 = arith.constant 0 : i32
    return %c0_i32, %c0_i32_0 : i32, i32
  }
  func.func @transform_4(%arg0: i32, %arg1: i32) -> (i32, i32) {
    %c0_i32 = arith.constant 0 : i32
    %c0_i32_0 = arith.constant 0 : i32
    %c0_i32_1 = arith.constant 0 : i32
    return %c0_i32, %c0_i32_0 : i32, i32
  }
  func.func @transform_5(%arg0: i32, %arg1: i32) -> (i32, i32) {
    %c0_i32 = arith.constant 0 : i32
    %c0_i32_0 = arith.constant 0 : i32
    %c0_i32_1 = arith.constant 0 : i32
    return %c0_i32, %c0_i32_0 : i32, i32
  }
  func.func @transform_6(%arg0: i32, %arg1: i32) -> (i32, i32) {
    %c0_i32 = arith.constant 0 : i32
    %c0_i32_0 = arith.constant 0 : i32
    return %arg0, %c0_i32 : i32, i32
  }
}

module attributes {stable_mosaic.version = 11 : i64} {
  func.func @_lstm_fc_kernel(%arg0: i32, %arg1: i32, %arg2: memref<8x8x128xf32, #tpu.memory_space<vmem>>, %arg3: memref<128x512xf32, #tpu.memory_space<vmem>>, %arg4: memref<128x512xf32, #tpu.memory_space<vmem>>, %arg5: memref<1x512xf32, #tpu.memory_space<vmem>>, %arg6: memref<128x128xf32, #tpu.memory_space<vmem>>, %arg7: memref<1x128xf32, #tpu.memory_space<vmem>>, %arg8: memref<8x128xf32, #tpu.memory_space<vmem>>, %arg9: memref<8x8x512xf32, #tpu.memory_space<vmem>>, %arg10: memref<8x128xf32, #tpu.memory_space<vmem>>, %arg11: memref<8x128xf32, #tpu.memory_space<vmem>>) attributes {dimension_semantics = [#tpu.dimension_semantics<parallel>, #tpu.dimension_semantics<arbitrary>], iteration_bounds = array<i64: 1, 1>, scalar_prefetch = 0 : i64, scratch_operands = 3 : i64, tpu.core_type = #tpu.core_type<tc>, window_params = [{transform_indices = @transform_0, window_bounds = array<i64: 8, 8, 128>}, {pipeline_mode = #tpu.pipeline_mode<synchronous>, transform_indices = @transform_1, window_bounds = array<i64: 128, 512>}, {pipeline_mode = #tpu.pipeline_mode<synchronous>, transform_indices = @transform_2, window_bounds = array<i64: 128, 512>}, {pipeline_mode = #tpu.pipeline_mode<synchronous>, transform_indices = @transform_3, window_bounds = array<i64: 1, 512>}, {pipeline_mode = #tpu.pipeline_mode<synchronous>, transform_indices = @transform_4, window_bounds = array<i64: 128, 128>}, {pipeline_mode = #tpu.pipeline_mode<synchronous>, transform_indices = @transform_5, window_bounds = array<i64: 1, 128>}, {transform_indices = @transform_6, window_bounds = array<i64: 8, 128>}]} {
    %c0_i32 = arith.constant 0 : i32
    %0 = arith.cmpi eq, %arg1, %c0_i32 : i32
    %1 = arith.extui %0 : i1 to i32
    %c0_i32_0 = arith.constant 0 : i32
    %2 = arith.cmpi ne, %1, %c0_i32_0 : i32
    scf.if %2 {
      %cst_16 = arith.constant 0.000000e+00 : f32
      %18 = vector.broadcast %cst_16 : f32 to vector<8x128xf32>
      %c0_17 = arith.constant 0 : index
      %c0_18 = arith.constant 0 : index
      %19 = vector.load %arg10[%c0_17, %c0_18] : memref<8x128xf32, #tpu.memory_space<vmem>>, vector<8x128xf32>
      tpu.vector_store %arg10[%c0_17, %c0_18], %18 {strides = array<i32>} : memref<8x128xf32, #tpu.memory_space<vmem>>, vector<8x128xf32>,
      %cst_19 = arith.constant 0.000000e+00 : f32
      %20 = vector.broadcast %cst_19 : f32 to vector<8x128xf32>
      %c0_20 = arith.constant 0 : index
      %c0_21 = arith.constant 0 : index
      %21 = vector.load %arg11[%c0_20, %c0_21] : memref<8x128xf32, #tpu.memory_space<vmem>>, vector<8x128xf32>
      tpu.vector_store %arg11[%c0_20, %c0_21], %20 {strides = array<i32>} : memref<8x128xf32, #tpu.memory_space<vmem>>, vector<8x128xf32>,
    } else {
    }
    %c0 = arith.constant 0 : index
    %c0_1 = arith.constant 0 : index
    %c0_2 = arith.constant 0 : index
    %3 = vector.load %arg2[%c0, %c0_1, %c0_2] : memref<8x8x128xf32, #tpu.memory_space<vmem>>, vector<8x8x128xf32>
    %4 = vector.shape_cast %3 : vector<8x8x128xf32> to vector<64x128xf32>
    %c0_3 = arith.constant 0 : index
    %c0_4 = arith.constant 0 : index
    %5 = vector.load %arg3[%c0_3, %c0_4] : memref<128x512xf32, #tpu.memory_space<vmem>>, vector<128x512xf32>
    %cst = arith.constant dense<0.000000e+00> : vector<64x512xf32>
    %6 = tpu.matmul %4, %5, %cst {dimension_numbers = #tpu.dot_dimension_numbers<[1], [0], [0], [1], [0, 0, 1, 1], [], []>} : vector<64x128xf32>, vector<128x512xf32>, vector<64x512xf32> -> vector<64x512xf32>
    %7 = vector.shape_cast %6 : vector<64x512xf32> to vector<8x8x512xf32>
    %c0_5 = arith.constant 0 : index
    %c0_6 = arith.constant 0 : index
    %8 = vector.load %arg5[%c0_5, %c0_6] : memref<1x512xf32, #tpu.memory_space<vmem>>, vector<1x512xf32>
    %9 = vector.shape_cast %8 : vector<1x512xf32> to vector<1x1x512xf32>
    %10 = vector.broadcast %9 : vector<1x1x512xf32> to vector<8x8x512xf32>
    %11 = arith.addf %7, %10 : vector<8x8x512xf32>
    %c0_7 = arith.constant 0 : index
    %c0_8 = arith.constant 0 : index
    %c0_9 = arith.constant 0 : index
    %12 = vector.load %arg9[%c0_7, %c0_8, %c0_9] : memref<8x8x512xf32, #tpu.memory_space<vmem>>, vector<8x8x512xf32>
    tpu.vector_store %arg9[%c0_7, %c0_8, %c0_9], %11 {strides = array<i32>} : memref<8x8x512xf32, #tpu.memory_space<vmem>>, vector<8x8x512xf32>,
    %c0_10 = arith.constant 0 : index
    %c0_11 = arith.constant 0 : index
    %13 = vector.load %arg4[%c0_10, %c0_11] : memref<128x512xf32, #tpu.memory_space<vmem>>, vector<128x512xf32>
    %c0_i32_12 = arith.constant 0 : i32
    %c2_i32 = arith.constant 2 : i32
    %14 = arith.addi %c0_i32_12, %c2_i32 : i32
    %c1_i32 = arith.constant 1 : i32
    scf.for %arg12 = %c0_i32_12 to %14 step %c1_i32  : i32 {
      %c4_i32 = arith.constant 4 : i32
      %18 = arith.muli %arg12, %c4_i32 : i32
      %c0_i32_16 = arith.constant 0 : i32
      %19 = arith.addi %18, %c0_i32_16 : i32
      %20 = arith.index_cast %19 : i32 to index
      %c0_17 = arith.constant 0 : index
      %c0_18 = arith.constant 0 : index
      %21 = vector.load %arg9[%20, %c0_17, %c0_18] : memref<8x8x512xf32, #tpu.memory_space<vmem>>, vector<1x8x512xf32>
      %22 = vector.shape_cast %21 : vector<1x8x512xf32> to vector<8x512xf32>
      %c0_19 = arith.constant 0 : index
      %c0_20 = arith.constant 0 : index
      %23 = vector.load %arg10[%c0_19, %c0_20] : memref<8x128xf32, #tpu.memory_space<vmem>>, vector<8x128xf32>
      %cst_21 = arith.constant dense<0.000000e+00> : vector<8x512xf32>
      %24 = tpu.matmul %23, %13, %cst_21 {dimension_numbers = #tpu.dot_dimension_numbers<[1], [0], [0], [1], [0, 0, 1, 1], [], []>} : vector<8x128xf32>, vector<128x512xf32>, vector<8x512xf32> -> vector<8x512xf32>
      %25 = arith.addf %22, %24 : vector<8x512xf32>
      %26 = vector.extract_strided_slice %25 {offsets = [0, 0], sizes = [8, 384], strides = [1, 1]} : vector<8x512xf32> to vector<8x384xf32>
      %27 = arith.negf %26 : vector<8x384xf32>
      %28 = math.exp %27 : vector<8x384xf32>
      %cst_22 = arith.constant 1.000000e+00 : f32
      %29 = vector.broadcast %cst_22 : f32 to vector<8x384xf32>
      %30 = arith.addf %29, %28 : vector<8x384xf32>
      %31 = arith.divf %29, %30 : vector<8x384xf32>
      %32 = vector.extract_strided_slice %31 {offsets = [0, 0], sizes = [8, 128], strides = [1, 1]} : vector<8x384xf32> to vector<8x128xf32>
      %33 = vector.extract_strided_slice %31 {offsets = [0, 128], sizes = [8, 128], strides = [1, 1]} : vector<8x384xf32> to vector<8x128xf32>
      %34 = vector.extract_strided_slice %31 {offsets = [0, 256], sizes = [8, 128], strides = [1, 1]} : vector<8x384xf32> to vector<8x128xf32>
      %35 = vector.extract_strided_slice %25 {offsets = [0, 384], sizes = [8, 128], strides = [1, 1]} : vector<8x512xf32> to vector<8x128xf32>
      %36 = math.tanh %35 : vector<8x128xf32>
      %c0_23 = arith.constant 0 : index
      %c0_24 = arith.constant 0 : index
      %37 = vector.load %arg11[%c0_23, %c0_24] : memref<8x128xf32, #tpu.memory_space<vmem>>, vector<8x128xf32>
      %38 = arith.mulf %33, %37 : vector<8x128xf32>
      %39 = arith.mulf %32, %36 : vector<8x128xf32>
      %40 = arith.addf %38, %39 : vector<8x128xf32>
      %41 = math.tanh %40 : vector<8x128xf32>
      %42 = arith.mulf %34, %41 : vector<8x128xf32>
      %c0_25 = arith.constant 0 : index
      %c0_26 = arith.constant 0 : index
      %43 = vector.load %arg11[%c0_25, %c0_26] : memref<8x128xf32, #tpu.memory_space<vmem>>, vector<8x128xf32>
      tpu.vector_store %arg11[%c0_25, %c0_26], %40 {strides = array<i32>} : memref<8x128xf32, #tpu.memory_space<vmem>>, vector<8x128xf32>,
      %c0_27 = arith.constant 0 : index
      %c0_28 = arith.constant 0 : index
      %44 = vector.load %arg10[%c0_27, %c0_28] : memref<8x128xf32, #tpu.memory_space<vmem>>, vector<8x128xf32>
      tpu.vector_store %arg10[%c0_27, %c0_28], %42 {strides = array<i32>} : memref<8x128xf32, #tpu.memory_space<vmem>>, vector<8x128xf32>,
      %c1_i32_29 = arith.constant 1 : i32
      %45 = arith.addi %18, %c1_i32_29 : i32
      %46 = arith.index_cast %45 : i32 to index
      %c0_30 = arith.constant 0 : index
      %c0_31 = arith.constant 0 : index
      %47 = vector.load %arg9[%46, %c0_30, %c0_31] : memref<8x8x512xf32, #tpu.memory_space<vmem>>, vector<1x8x512xf32>
      %48 = vector.shape_cast %47 : vector<1x8x512xf32> to vector<8x512xf32>
      %c0_32 = arith.constant 0 : index
      %c0_33 = arith.constant 0 : index
      %49 = vector.load %arg10[%c0_32, %c0_33] : memref<8x128xf32, #tpu.memory_space<vmem>>, vector<8x128xf32>
      %cst_34 = arith.constant dense<0.000000e+00> : vector<8x512xf32>
      %50 = tpu.matmul %49, %13, %cst_34 {dimension_numbers = #tpu.dot_dimension_numbers<[1], [0], [0], [1], [0, 0, 1, 1], [], []>} : vector<8x128xf32>, vector<128x512xf32>, vector<8x512xf32> -> vector<8x512xf32>
      %51 = arith.addf %48, %50 : vector<8x512xf32>
      %52 = vector.extract_strided_slice %51 {offsets = [0, 0], sizes = [8, 384], strides = [1, 1]} : vector<8x512xf32> to vector<8x384xf32>
      %53 = arith.negf %52 : vector<8x384xf32>
      %54 = math.exp %53 : vector<8x384xf32>
      %cst_35 = arith.constant 1.000000e+00 : f32
      %55 = vector.broadcast %cst_35 : f32 to vector<8x384xf32>
      %56 = arith.addf %55, %54 : vector<8x384xf32>
      %57 = arith.divf %55, %56 : vector<8x384xf32>
      %58 = vector.extract_strided_slice %57 {offsets = [0, 0], sizes = [8, 128], strides = [1, 1]} : vector<8x384xf32> to vector<8x128xf32>
      %59 = vector.extract_strided_slice %57 {offsets = [0, 128], sizes = [8, 128], strides = [1, 1]} : vector<8x384xf32> to vector<8x128xf32>
      %60 = vector.extract_strided_slice %57 {offsets = [0, 256], sizes = [8, 128], strides = [1, 1]} : vector<8x384xf32> to vector<8x128xf32>
      %61 = vector.extract_strided_slice %51 {offsets = [0, 384], sizes = [8, 128], strides = [1, 1]} : vector<8x512xf32> to vector<8x128xf32>
      %62 = math.tanh %61 : vector<8x128xf32>
      %c0_36 = arith.constant 0 : index
      %c0_37 = arith.constant 0 : index
      %63 = vector.load %arg11[%c0_36, %c0_37] : memref<8x128xf32, #tpu.memory_space<vmem>>, vector<8x128xf32>
      %64 = arith.mulf %59, %63 : vector<8x128xf32>
      %65 = arith.mulf %58, %62 : vector<8x128xf32>
      %66 = arith.addf %64, %65 : vector<8x128xf32>
      %67 = math.tanh %66 : vector<8x128xf32>
      %68 = arith.mulf %60, %67 : vector<8x128xf32>
      %c0_38 = arith.constant 0 : index
      %c0_39 = arith.constant 0 : index
      %69 = vector.load %arg11[%c0_38, %c0_39] : memref<8x128xf32, #tpu.memory_space<vmem>>, vector<8x128xf32>
      tpu.vector_store %arg11[%c0_38, %c0_39], %66 {strides = array<i32>} : memref<8x128xf32, #tpu.memory_space<vmem>>, vector<8x128xf32>,
      %c0_40 = arith.constant 0 : index
      %c0_41 = arith.constant 0 : index
      %70 = vector.load %arg10[%c0_40, %c0_41] : memref<8x128xf32, #tpu.memory_space<vmem>>, vector<8x128xf32>
      tpu.vector_store %arg10[%c0_40, %c0_41], %68 {strides = array<i32>} : memref<8x128xf32, #tpu.memory_space<vmem>>, vector<8x128xf32>,
      %c2_i32_42 = arith.constant 2 : i32
      %71 = arith.addi %18, %c2_i32_42 : i32
      %72 = arith.index_cast %71 : i32 to index
      %c0_43 = arith.constant 0 : index
      %c0_44 = arith.constant 0 : index
      %73 = vector.load %arg9[%72, %c0_43, %c0_44] : memref<8x8x512xf32, #tpu.memory_space<vmem>>, vector<1x8x512xf32>
      %74 = vector.shape_cast %73 : vector<1x8x512xf32> to vector<8x512xf32>
      %c0_45 = arith.constant 0 : index
      %c0_46 = arith.constant 0 : index
      %75 = vector.load %arg10[%c0_45, %c0_46] : memref<8x128xf32, #tpu.memory_space<vmem>>, vector<8x128xf32>
      %cst_47 = arith.constant dense<0.000000e+00> : vector<8x512xf32>
      %76 = tpu.matmul %75, %13, %cst_47 {dimension_numbers = #tpu.dot_dimension_numbers<[1], [0], [0], [1], [0, 0, 1, 1], [], []>} : vector<8x128xf32>, vector<128x512xf32>, vector<8x512xf32> -> vector<8x512xf32>
      %77 = arith.addf %74, %76 : vector<8x512xf32>
      %78 = vector.extract_strided_slice %77 {offsets = [0, 0], sizes = [8, 384], strides = [1, 1]} : vector<8x512xf32> to vector<8x384xf32>
      %79 = arith.negf %78 : vector<8x384xf32>
      %80 = math.exp %79 : vector<8x384xf32>
      %cst_48 = arith.constant 1.000000e+00 : f32
      %81 = vector.broadcast %cst_48 : f32 to vector<8x384xf32>
      %82 = arith.addf %81, %80 : vector<8x384xf32>
      %83 = arith.divf %81, %82 : vector<8x384xf32>
      %84 = vector.extract_strided_slice %83 {offsets = [0, 0], sizes = [8, 128], strides = [1, 1]} : vector<8x384xf32> to vector<8x128xf32>
      %85 = vector.extract_strided_slice %83 {offsets = [0, 128], sizes = [8, 128], strides = [1, 1]} : vector<8x384xf32> to vector<8x128xf32>
      %86 = vector.extract_strided_slice %83 {offsets = [0, 256], sizes = [8, 128], strides = [1, 1]} : vector<8x384xf32> to vector<8x128xf32>
      %87 = vector.extract_strided_slice %77 {offsets = [0, 384], sizes = [8, 128], strides = [1, 1]} : vector<8x512xf32> to vector<8x128xf32>
      %88 = math.tanh %87 : vector<8x128xf32>
      %c0_49 = arith.constant 0 : index
      %c0_50 = arith.constant 0 : index
      %89 = vector.load %arg11[%c0_49, %c0_50] : memref<8x128xf32, #tpu.memory_space<vmem>>, vector<8x128xf32>
      %90 = arith.mulf %85, %89 : vector<8x128xf32>
      %91 = arith.mulf %84, %88 : vector<8x128xf32>
      %92 = arith.addf %90, %91 : vector<8x128xf32>
      %93 = math.tanh %92 : vector<8x128xf32>
      %94 = arith.mulf %86, %93 : vector<8x128xf32>
      %c0_51 = arith.constant 0 : index
      %c0_52 = arith.constant 0 : index
      %95 = vector.load %arg11[%c0_51, %c0_52] : memref<8x128xf32, #tpu.memory_space<vmem>>, vector<8x128xf32>
      tpu.vector_store %arg11[%c0_51, %c0_52], %92 {strides = array<i32>} : memref<8x128xf32, #tpu.memory_space<vmem>>, vector<8x128xf32>,
      %c0_53 = arith.constant 0 : index
      %c0_54 = arith.constant 0 : index
      %96 = vector.load %arg10[%c0_53, %c0_54] : memref<8x128xf32, #tpu.memory_space<vmem>>, vector<8x128xf32>
      tpu.vector_store %arg10[%c0_53, %c0_54], %94 {strides = array<i32>} : memref<8x128xf32, #tpu.memory_space<vmem>>, vector<8x128xf32>,
      %c3_i32 = arith.constant 3 : i32
      %97 = arith.addi %18, %c3_i32 : i32
      %98 = arith.index_cast %97 : i32 to index
      %c0_55 = arith.constant 0 : index
      %c0_56 = arith.constant 0 : index
      %99 = vector.load %arg9[%98, %c0_55, %c0_56] : memref<8x8x512xf32, #tpu.memory_space<vmem>>, vector<1x8x512xf32>
      %100 = vector.shape_cast %99 : vector<1x8x512xf32> to vector<8x512xf32>
      %c0_57 = arith.constant 0 : index
      %c0_58 = arith.constant 0 : index
      %101 = vector.load %arg10[%c0_57, %c0_58] : memref<8x128xf32, #tpu.memory_space<vmem>>, vector<8x128xf32>
      %cst_59 = arith.constant dense<0.000000e+00> : vector<8x512xf32>
      %102 = tpu.matmul %101, %13, %cst_59 {dimension_numbers = #tpu.dot_dimension_numbers<[1], [0], [0], [1], [0, 0, 1, 1], [], []>} : vector<8x128xf32>, vector<128x512xf32>, vector<8x512xf32> -> vector<8x512xf32>
      %103 = arith.addf %100, %102 : vector<8x512xf32>
      %104 = vector.extract_strided_slice %103 {offsets = [0, 0], sizes = [8, 384], strides = [1, 1]} : vector<8x512xf32> to vector<8x384xf32>
      %105 = arith.negf %104 : vector<8x384xf32>
      %106 = math.exp %105 : vector<8x384xf32>
      %cst_60 = arith.constant 1.000000e+00 : f32
      %107 = vector.broadcast %cst_60 : f32 to vector<8x384xf32>
      %108 = arith.addf %107, %106 : vector<8x384xf32>
      %109 = arith.divf %107, %108 : vector<8x384xf32>
      %110 = vector.extract_strided_slice %109 {offsets = [0, 0], sizes = [8, 128], strides = [1, 1]} : vector<8x384xf32> to vector<8x128xf32>
      %111 = vector.extract_strided_slice %109 {offsets = [0, 128], sizes = [8, 128], strides = [1, 1]} : vector<8x384xf32> to vector<8x128xf32>
      %112 = vector.extract_strided_slice %109 {offsets = [0, 256], sizes = [8, 128], strides = [1, 1]} : vector<8x384xf32> to vector<8x128xf32>
      %113 = vector.extract_strided_slice %103 {offsets = [0, 384], sizes = [8, 128], strides = [1, 1]} : vector<8x512xf32> to vector<8x128xf32>
      %114 = math.tanh %113 : vector<8x128xf32>
      %c0_61 = arith.constant 0 : index
      %c0_62 = arith.constant 0 : index
      %115 = vector.load %arg11[%c0_61, %c0_62] : memref<8x128xf32, #tpu.memory_space<vmem>>, vector<8x128xf32>
      %116 = arith.mulf %111, %115 : vector<8x128xf32>
      %117 = arith.mulf %110, %114 : vector<8x128xf32>
      %118 = arith.addf %116, %117 : vector<8x128xf32>
      %119 = math.tanh %118 : vector<8x128xf32>
      %120 = arith.mulf %112, %119 : vector<8x128xf32>
      %c0_63 = arith.constant 0 : index
      %c0_64 = arith.constant 0 : index
      %121 = vector.load %arg11[%c0_63, %c0_64] : memref<8x128xf32, #tpu.memory_space<vmem>>, vector<8x128xf32>
      tpu.vector_store %arg11[%c0_63, %c0_64], %118 {strides = array<i32>} : memref<8x128xf32, #tpu.memory_space<vmem>>, vector<8x128xf32>,
      %c0_65 = arith.constant 0 : index
      %c0_66 = arith.constant 0 : index
      %122 = vector.load %arg10[%c0_65, %c0_66] : memref<8x128xf32, #tpu.memory_space<vmem>>, vector<8x128xf32>
      tpu.vector_store %arg10[%c0_65, %c0_66], %120 {strides = array<i32>} : memref<8x128xf32, #tpu.memory_space<vmem>>, vector<8x128xf32>,
    }
    %c2_i32_13 = arith.constant 2 : i32
    %c0_i32_14 = arith.constant 0 : i32
    %15 = arith.cmpi eq, %arg1, %c0_i32_14 : i32
    %16 = arith.extui %15 : i1 to i32
    %c0_i32_15 = arith.constant 0 : i32
    %17 = arith.cmpi ne, %16, %c0_i32_15 : i32
    scf.if %17 {
      %c0_16 = arith.constant 0 : index
      %c0_17 = arith.constant 0 : index
      %18 = vector.load %arg10[%c0_16, %c0_17] : memref<8x128xf32, #tpu.memory_space<vmem>>, vector<8x128xf32>
      %c0_18 = arith.constant 0 : index
      %c0_19 = arith.constant 0 : index
      %19 = vector.load %arg6[%c0_18, %c0_19] : memref<128x128xf32, #tpu.memory_space<vmem>>, vector<128x128xf32>
      %cst_20 = arith.constant dense<0.000000e+00> : vector<8x128xf32>
      %20 = tpu.matmul %18, %19, %cst_20 {dimension_numbers = #tpu.dot_dimension_numbers<[1], [0], [0], [1], [0, 0, 1, 1], [], []>} : vector<8x128xf32>, vector<128x128xf32>, vector<8x128xf32> -> vector<8x128xf32>
      %c0_21 = arith.constant 0 : index
      %c0_22 = arith.constant 0 : index
      %21 = vector.load %arg7[%c0_21, %c0_22] : memref<1x128xf32, #tpu.memory_space<vmem>>, vector<1x128xf32>
      %22 = vector.broadcast %21 : vector<1x128xf32> to vector<8x128xf32>
      %23 = arith.addf %20, %22 : vector<8x128xf32>
      %c0_23 = arith.constant 0 : index
      %c0_24 = arith.constant 0 : index
      %24 = vector.load %arg8[%c0_23, %c0_24] : memref<8x128xf32, #tpu.memory_space<vmem>>, vector<8x128xf32>
      tpu.vector_store %arg8[%c0_23, %c0_24], %23 {strides = array<i32>} : memref<8x128xf32, #tpu.memory_space<vmem>>, vector<8x128xf32>,
    } else {
    }
    return
  }
  func.func @transform_0(%arg0: i32, %arg1: i32) -> (i32, i32, i32) {
    %c0_i32 = arith.constant 0 : i32
    %c0_i32_0 = arith.constant 0 : i32
    return %arg1, %arg0, %c0_i32 : i32, i32, i32
  }
  func.func @transform_1(%arg0: i32, %arg1: i32) -> (i32, i32) {
    %c0_i32 = arith.constant 0 : i32
    %c0_i32_0 = arith.constant 0 : i32
    %c0_i32_1 = arith.constant 0 : i32
    return %c0_i32, %c0_i32_0 : i32, i32
  }
  func.func @transform_2(%arg0: i32, %arg1: i32) -> (i32, i32) {
    %c0_i32 = arith.constant 0 : i32
    %c0_i32_0 = arith.constant 0 : i32
    %c0_i32_1 = arith.constant 0 : i32
    return %c0_i32, %c0_i32_0 : i32, i32
  }
  func.func @transform_3(%arg0: i32, %arg1: i32) -> (i32, i32) {
    %c0_i32 = arith.constant 0 : i32
    %c0_i32_0 = arith.constant 0 : i32
    %c0_i32_1 = arith.constant 0 : i32
    return %c0_i32, %c0_i32_0 : i32, i32
  }
  func.func @transform_4(%arg0: i32, %arg1: i32) -> (i32, i32) {
    %c0_i32 = arith.constant 0 : i32
    %c0_i32_0 = arith.constant 0 : i32
    %c0_i32_1 = arith.constant 0 : i32
    return %c0_i32, %c0_i32_0 : i32, i32
  }
  func.func @transform_5(%arg0: i32, %arg1: i32) -> (i32, i32) {
    %c0_i32 = arith.constant 0 : i32
    %c0_i32_0 = arith.constant 0 : i32
    %c0_i32_1 = arith.constant 0 : i32
    return %c0_i32, %c0_i32_0 : i32, i32
  }
  func.func @transform_6(%arg0: i32, %arg1: i32) -> (i32, i32) {
    %c0_i32 = arith.constant 0 : i32
    %c0_i32_0 = arith.constant 0 : i32
    return %arg0, %c0_i32 : i32, i32
  }
}

</mosaic_0001>

<llo_original>
// kernel: tpu_custom_call.1
$region0: #{tpu_custom_call.1}
  #allocation0 [shape = 'u32[]', space=smem, size = 0x4, offset = 0x4, fixed_abs, tag = 'smem constant byte address 0x4 - core index']
  #allocation1 [shape = 'u32[144,128]{1,0:T(1,128)}', space=vmem, size = 0x12000, scoped, tag = 'internal scratch']
  #allocation2 [shape = 'f32[8,8,512]{2,1,0:T(8,128)}', space=vmem, size = 0x20000, scoped, tag = 'scratch operand']
  #allocation3 [shape = 'f32[8,128]{1,0:T(8,128)}', space=vmem, size = 0x1000, scoped, tag = 'scratch operand']
  #allocation4 [shape = 'f32[8,128]{1,0:T(8,128)}', space=vmem, size = 0x1000, scoped, tag = 'scratch operand']
  %s0 = inlined_call_operand.hbm [shape: f32[8,8,128], index: 0, kind: input, shape index: {}]
  %s1 = inlined_call_operand.hbm [shape: f32[128,512], index: 1, kind: input, shape index: {}]
  %s2 = inlined_call_operand.hbm [shape: f32[128,512], index: 2, kind: input, shape index: {}]
  %s3 = inlined_call_operand.vmem [shape: f32[1,512], index: 3, kind: input, shape index: {}]
  %s4 = inlined_call_operand.hbm [shape: f32[128,128], index: 4, kind: input, shape index: {}]
  %s5 = inlined_call_operand.vmem [shape: f32[1,128], index: 5, kind: input, shape index: {}]
  %s6 = inlined_call_operand.hbm [shape: f32[8,128], index: 6, kind: output, shape index: {}]
  %s7 = sld [smem:[#allocation0]]
  $region65: #{tpu_custom_call.1} parent=0
    _
  %s9 = ssub.s32 1, %s7
  %s10 = scalar_select 0, %s9, %s7
  $region1: #{tpu_custom_call.1} parent=0
    #allocation5 [shape = 'u8[32768]{0}', space=vmem, size = 0x8000, scoped, tag = 'input window, operand 0, single buffered']
    #allocation6 [shape = 's32[1]{0}', space=sflag, size = 0x4, scoped, tag = 'scoped memory for tpu_custom_call.1']
    #allocation7 [shape = 's32[1]{0}', space=sflag, size = 0x4, scoped, tag = 'scoped memory for tpu_custom_call.1']
    #allocation8 [shape = 'u8[262144]{0}', space=vmem, size = 0x40000, scoped, tag = 'input window, operand 1, single buffered']
    #allocation9 [shape = 's32[1]{0}', space=sflag, size = 0x4, scoped, tag = 'scoped memory for tpu_custom_call.1']
    #allocation10 [shape = 'u8[262144]{0}', space=vmem, size = 0x40000, scoped, tag = 'input window, operand 2, single buffered']
    #allocation11 [shape = 'u8[65536]{0}', space=vmem, size = 0x10000, scoped, tag = 'input window, operand 4, single buffered']
    #allocation12 [shape = 's32[1]{0}', space=sflag, size = 0x4, scoped, tag = 'scoped memory for tpu_custom_call.1']
    #allocation13 [shape = 'u8[4096]{0}', space=vmem, size = 0x1000, scoped, tag = 'output window, operand 0, single buffered']
    %11 = vsyncpa [#allocation6], 0
    %12 = vsyncpa [#allocation9], 0
    %13 = vsyncpa [#allocation12], 0
    %14 = vsyncpa [#allocation7], 0
    // Predicated region
    $region2: #{tpu_custom_call.1} parent=1 // pred_check
      _
    $region3: #{tpu_custom_call.1} parent=1 // pred_check_branch
      %16 = sbr.rel (0) target = $region5
    $region4: #{tpu_custom_call.1} parent=1 // pred_region
      %s18 = ssub.s32 1024, 1024
      %19 = vsyncadd [#allocation6], %s18
      %s20 = sshll.u32 [#allocation5], 4
      %s21 = int_to_ptr.vmem [resolvable:$true] %s20
      %26 = dma.hbm_to_vmem [thread:$0]  %s0, 1024, %s21, [#allocation6], 128, 128, 8
    $region5: #{tpu_custom_call.1} parent=1 // pred_fallthru
      _
    // Predicated region
    $region6: #{tpu_custom_call.1} parent=1 // pred_check
      _
    $region7: #{tpu_custom_call.1} parent=1 // pred_check_branch
      %28 = sbr.rel (0) target = $region9
    $region8: #{tpu_custom_call.1} parent=1 // pred_region
      %s30 = ssub.s32 8192, 8192
      %31 = vsyncadd [#allocation9], %s30
      %s32 = sshll.u32 [#allocation8], 4
      %s33 = int_to_ptr.vmem [resolvable:$true] %s32
      %38 = dma.hbm_to_vmem [thread:$0]  %s1, 8192, %s33, [#allocation9], 512, 512, 32
    $region9: #{tpu_custom_call.1} parent=1 // pred_fallthru
      _
    // Predicated region
    $region10: #{tpu_custom_call.1} parent=1 // pred_check
      _
    $region11: #{tpu_custom_call.1} parent=1 // pred_check_branch
      %40 = sbr.rel (0) target = $region13
    $region12: #{tpu_custom_call.1} parent=1 // pred_region
      %s42 = ssub.s32 8192, 8192
      %43 = vsyncadd [#allocation9], %s42
      %s44 = sshll.u32 [#allocation10], 4
      %s45 = int_to_ptr.vmem [resolvable:$true] %s44
      %50 = dma.hbm_to_vmem [thread:$0]  %s2, 8192, %s45, [#allocation9], 512, 512, 32
    $region13: #{tpu_custom_call.1} parent=1 // pred_fallthru
      _
    // Predicated region
    $region14: #{tpu_custom_call.1} parent=1 // pred_check
      _
    $region15: #{tpu_custom_call.1} parent=1 // pred_check_branch
      %52 = sbr.rel (0) target = $region17
    $region16: #{tpu_custom_call.1} parent=1 // pred_region
      _
    $region17: #{tpu_custom_call.1} parent=1 // pred_fallthru
      _
    // Predicated region
    $region18: #{tpu_custom_call.1} parent=1 // pred_check
      _
    $region19: #{tpu_custom_call.1} parent=1 // pred_check_branch
      %54 = sbr.rel (0) target = $region21
    $region20: #{tpu_custom_call.1} parent=1 // pred_region
      %s56 = ssub.s32 2048, 2048
      %57 = vsyncadd [#allocation12], %s56
      %s58 = sshll.u32 [#allocation11], 4
      %s59 = int_to_ptr.vmem [resolvable:$true] %s58
      %64 = dma.hbm_to_vmem [thread:$0]  %s4, 2048, %s59, [#allocation12], 128, 128, 8
    $region21: #{tpu_custom_call.1} parent=1 // pred_fallthru
      _
    // Predicated region
    $region22: #{tpu_custom_call.1} parent=1 // pred_check
      _
    $region23: #{tpu_custom_call.1} parent=1 // pred_check_branch
      %66 = sbr.rel (0) target = $region25
    $region24: #{tpu_custom_call.1} parent=1 // pred_region
      _
    $region25: #{tpu_custom_call.1} parent=1 // pred_fallthru
      _
    // Predicated region
    $region26: #{tpu_custom_call.1} parent=1 // pred_check
      _
    $region27: #{tpu_custom_call.1} parent=1 // pred_check_branch
      %68 = sbr.rel (0) target = $region29
    $region28: #{tpu_custom_call.1} parent=1 // pred_region
      %69 = dma.done [#allocation6], 1024
    $region29: #{tpu_custom_call.1} parent=1 // pred_fallthru
      _
    // Predicated region
    $region30: #{tpu_custom_call.1} parent=1 // pred_check
      _
    $region31: #{tpu_custom_call.1} parent=1 // pred_check_branch
      %71 = sbr.rel (0) target = $region33
    $region32: #{tpu_custom_call.1} parent=1 // pred_region
      %72 = dma.done [#allocation9], 8192
    $region33: #{tpu_custom_call.1} parent=1 // pred_fallthru
      _
    // Predicated region
    $region34: #{tpu_custom_call.1} parent=1 // pred_check
      _
    $region35: #{tpu_custom_call.1} parent=1 // pred_check_branch
      %74 = sbr.rel (0) target = $region37
    $region36: #{tpu_custom_call.1} parent=1 // pred_region
      %75 = dma.done [#allocation9], 8192
    $region37: #{tpu_custom_call.1} parent=1 // pred_fallthru
      _
    // Predicated region
    $region38: #{tpu_custom_call.1} parent=1 // pred_check
      _
    $region39: #{tpu_custom_call.1} parent=1 // pred_check_branch
      %77 = sbr.rel (0) target = $region41
    $region40: #{tpu_custom_call.1} parent=1 // pred_region
      %78 = dma.done [#allocation12], 2048
    $region41: #{tpu_custom_call.1} parent=1 // pred_fallthru
      _
    %p79 = scmp.eq.s32.totalorder 0, 0
    // Predicated region
    $region42: #{tpu_custom_call.1} parent=1 // pred_check
      %p80 = pneg %p79
    $region43: #{tpu_custom_call.1} parent=1 // pred_check_branch
      %82 = sbr.rel (%p80) target = $region45
    $region44: #{tpu_custom_call.1} parent=1 // pred_region
      %83 = vst [vmem:[#allocation3] sm:$0xff] 0.0
      %84 = vst [vmem:[#allocation4] sm:$0xff] 0.0
    $region45: #{tpu_custom_call.1} parent=1 // pred_fallthru
      _
    %v85 = vld [vmem:[#allocation5] sm:$0xff]
    %v86 = vld [vmem:[#allocation5 + $0x8] sm:$0xff]
    %v87 = vld [vmem:[#allocation5 + $0x10] sm:$0xff]
    %v88 = vld [vmem:[#allocation5 + $0x18] sm:$0xff]
    %v89 = vld [vmem:[#allocation5 + $0x20] sm:$0xff]
    %v90 = vld [vmem:[#allocation5 + $0x28] sm:$0xff]
    %v91 = vld [vmem:[#allocation5 + $0x30] sm:$0xff]
    %v92 = vld [vmem:[#allocation5 + $0x38] sm:$0xff]
    %v93 = vld [vmem:[#allocation8] sm:$0xff]
    %v94 = vld [vmem:[#allocation8 + $0x8] sm:$0xff]
    %v95 = vld [vmem:[#allocation8 + $0x10] sm:$0xff]
    %v96 = vld [vmem:[#allocation8 + $0x18] sm:$0xff]
    %v97 = vld [vmem:[#allocation8 + $0x20] sm:$0xff]
    %v98 = vld [vmem:[#allocation8 + $0x28] sm:$0xff]
    %v99 = vld [vmem:[#allocation8 + $0x30] sm:$0xff]
    %v100 = vld [vmem:[#allocation8 + $0x38] sm:$0xff]
    %v101 = vld [vmem:[#allocation8 + $0x40] sm:$0xff]
    %v102 = vld [vmem:[#allocation8 + $0x48] sm:$0xff]
    %v103 = vld [vmem:[#allocation8 + $0x50] sm:$0xff]
    %v104 = vld [vmem:[#allocation8 + $0x58] sm:$0xff]
    %v105 = vld [vmem:[#allocation8 + $0x60] sm:$0xff]
    %v106 = vld [vmem:[#allocation8 + $0x68] sm:$0xff]
    %v107 = vld [vmem:[#allocation8 + $0x70] sm:$0xff]
    %v108 = vld [vmem:[#allocation8 + $0x78] sm:$0xff]
    %v109 = vld [vmem:[#allocation8 + $0x80] sm:$0xff]
    %v110 = vld [vmem:[#allocation8 + $0x88] sm:$0xff]
    %v111 = vld [vmem:[#allocation8 + $0x90] sm:$0xff]
    %v112 = vld [vmem:[#allocation8 + $0x98] sm:$0xff]
    %v113 = vld [vmem:[#allocation8 + $0xa0] sm:$0xff]
    %v114 = vld [vmem:[#allocation8 + $0xa8] sm:$0xff]
    %v115 = vld [vmem:[#allocation8 + $0xb0] sm:$0xff]
    %v116 = vld [vmem:[#allocation8 + $0xb8] sm:$0xff]
    %v117 = vld [vmem:[#allocation8 + $0xc0] sm:$0xff]
    %v118 = vld [vmem:[#allocation8 + $0xc8] sm:$0xff]
    %v119 = vld [vmem:[#allocation8 + $0xd0] sm:$0xff]
    %v120 = vld [vmem:[#allocation8 + $0xd8] sm:$0xff]
    %v121 = vld [vmem:[#allocation8 + $0xe0] sm:$0xff]
    %v122 = vld [vmem:[#allocation8 + $0xe8] sm:$0xff]
    %v123 = vld [vmem:[#allocation8 + $0xf0] sm:$0xff]
    %v124 = vld [vmem:[#allocation8 + $0xf8] sm:$0xff]
    %v125 = vld [vmem:[#allocation8 + $0x100] sm:$0xff]
    %v126 = vld [vmem:[#allocation8 + $0x108] sm:$0xff]
    %v127 = vld [vmem:[#allocation8 + $0x110] sm:$0xff]
    %v128 = vld [vmem:[#allocation8 + $0x118] sm:$0xff]
    %v129 = vld [vmem:[#allocation8 + $0x120] sm:$0xff]
    %v130 = vld [vmem:[#allocation8 + $0x128] sm:$0xff]
    %v131 = vld [vmem:[#allocation8 + $0x130] sm:$0xff]
    %v132 = vld [vmem:[#allocation8 + $0x138] sm:$0xff]
    %v133 = vld [vmem:[#allocation8 + $0x140] sm:$0xff]
    %v134 = vld [vmem:[#allocation8 + $0x148] sm:$0xff]
    %v135 = vld [vmem:[#allocation8 + $0x150] sm:$0xff]
    %v136 = vld [vmem:[#allocation8 + $0x158] sm:$0xff]
    %v137 = vld [vmem:[#allocation8 + $0x160] sm:$0xff]
    %v138 = vld [vmem:[#allocation8 + $0x168] sm:$0xff]
    %v139 = vld [vmem:[#allocation8 + $0x170] sm:$0xff]
    %v140 = vld [vmem:[#allocation8 + $0x178] sm:$0xff]
    %v141 = vld [vmem:[#allocation8 + $0x180] sm:$0xff]
    %v142 = vld [vmem:[#allocation8 + $0x188] sm:$0xff]
    %v143 = vld [vmem:[#allocation8 + $0x190] sm:$0xff]
    %v144 = vld [vmem:[#allocation8 + $0x198] sm:$0xff]
    %v145 = vld [vmem:[#allocation8 + $0x1a0] sm:$0xff]
    %v146 = vld [vmem:[#allocation8 + $0x1a8] sm:$0xff]
    %v147 = vld [vmem:[#allocation8 + $0x1b0] sm:$0xff]
    %v148 = vld [vmem:[#allocation8 + $0x1b8] sm:$0xff]
    %v149 = vld [vmem:[#allocation8 + $0x1c0] sm:$0xff]
    %v150 = vld [vmem:[#allocation8 + $0x1c8] sm:$0xff]
    %v151 = vld [vmem:[#allocation8 + $0x1d0] sm:$0xff]
    %v152 = vld [vmem:[#allocation8 + $0x1d8] sm:$0xff]
    %v153 = vld [vmem:[#allocation8 + $0x1e0] sm:$0xff]
    %v154 = vld [vmem:[#allocation8 + $0x1e8] sm:$0xff]
    %v155 = vld [vmem:[#allocation8 + $0x1f0] sm:$0xff]
    %v156 = vld [vmem:[#allocation8 + $0x1f8] sm:$0xff]
    %157 = vmatprep.subr.mxu0 %v94
    %158 = vmatpush1.msra.mxu0 %v93
    %159 = vmatprep.subr.mxu0 %v98
    %160 = vmatpush1.msra.mxu0 %v97
    %161 = vmatprep.subr.mxu0 %v102
    %162 = vmatpush1.msra.mxu0 %v101
    %163 = vmatprep.subr.mxu0 %v106
    %164 = vmatpush1.msra.mxu0 %v105
    %165 = vmatprep.subr.mxu0 %v110
    %166 = vmatpush1.msra.mxu0 %v109
    %167 = vmatprep.subr.mxu0 %v114
    %168 = vmatpush1.msra.mxu0 %v113
    %169 = vmatprep.subr.mxu0 %v118
    %170 = vmatpush1.msra.mxu0 %v117
    %171 = vmatprep.subr.mxu0 %v122
    %172 = vmatpush1.msra.mxu0 %v121
    %173 = vmatprep.subr.mxu0 %v126
    %174 = vmatpush1.msra.mxu0 %v125
    %175 = vmatprep.subr.mxu0 %v130
    %176 = vmatpush1.msra.mxu0 %v129
    %177 = vmatprep.subr.mxu0 %v134
    %178 = vmatpush1.msra.mxu0 %v133
    %179 = vmatprep.subr.mxu0 %v138
    %180 = vmatpush1.msra.mxu0 %v137
    %181 = vmatprep.subr.mxu0 %v142
    %182 = vmatpush1.msra.mxu0 %v141
    %183 = vmatprep.subr.mxu0 %v146
    %184 = vmatpush1.msra.mxu0 %v145
    %185 = vmatprep.subr.mxu0 %v150
    %186 = vmatpush1.msra.mxu0 %v149
    %187 = vmatprep.subr.mxu0 %v154
    %188 = vmatpush1.msra.mxu0 %v153
    %189 = vmatprep.subr.mxu0 0.0
    %190 = vmatpush1.msra.mxu0 0.0
    %191 = vmatprep.subr.mxu0 0.0
    %192 = vmatpush1.msra.mxu0 0.0
    %193 = vmatprep.subr.mxu0 0.0
    %194 = vmatpush1.msra.mxu0 0.0
    %195 = vmatprep.subr.mxu0 0.0
    %196 = vmatpush1.msra.mxu0 0.0
    %197 = vmatprep.subr.mxu0 0.0
    %198 = vmatpush1.msra.mxu0 0.0
    %199 = vmatprep.subr.mxu0 0.0
    %200 = vmatpush1.msra.mxu0 0.0
    %201 = vmatprep.subr.mxu0 0.0
    %202 = vmatpush1.msra.mxu0 0.0
    %203 = vmatprep.subr.mxu0 0.0
    %204 = vmatpush1.msra.mxu0 0.0
    %205 = vmatprep.subr.mxu0 0.0
    %206 = vmatpush1.msra.mxu0 0.0
    %207 = vmatprep.subr.mxu0 0.0
    %208 = vmatpush1.msra.mxu0 0.0
    %209 = vmatprep.subr.mxu0 0.0
    %210 = vmatpush1.msra.mxu0 0.0
    %211 = vmatprep.subr.mxu0 0.0
    %212 = vmatpush1.msra.mxu0 0.0
    %213 = vmatprep.subr.mxu0 0.0
    %214 = vmatpush1.msra.mxu0 0.0
    %215 = vmatprep.subr.mxu0 0.0
    %216 = vmatpush1.msra.mxu0 0.0
    %217 = vmatprep.subr.mxu0 0.0
    %218 = vmatpush1.msra.mxu0 0.0
    %219 = vmatprep.subr.mxu0 0.0
    %220 = vmatpush1.msra.mxu0 0.0
    %221 = vmatprep.mubr.f32.mxu0 0.0
    %222 = vmatmul.mubr.f32.gmra.mrb[0].mxu0 %v85
    %v223 = vpop.f32.mrb[0].mxu0
    %v224 = vadd.f32 0.0, %v223
    %v225 = vpop.f32.mrb[0].mxu0
    %v226 = vadd.f32 0.0, %v225
    %227 = vmatprep.mubr.f32.mxu0 0.0
    %228 = vmatmul.mubr.f32.gmra.mrb[0].mxu0 %v86
    %v229 = vpop.f32.mrb[0].mxu0
    %v230 = vadd.f32 0.0, %v229
    %v231 = vpop.f32.mrb[0].mxu0
    %v232 = vadd.f32 0.0, %v231
    %233 = vmatprep.mubr.f32.mxu0 0.0
    %234 = vmatmul.mubr.f32.gmra.mrb[0].mxu0 %v87
    %v235 = vpop.f32.mrb[0].mxu0
    %v236 = vadd.f32 0.0, %v235
    %v237 = vpop.f32.mrb[0].mxu0
    %v238 = vadd.f32 0.0, %v237
    %239 = vmatprep.mubr.f32.mxu0 0.0
    %240 = vmatmul.mubr.f32.gmra.mrb[0].mxu0 %v88
    %v241 = vpop.f32.mrb[0].mxu0
    %v242 = vadd.f32 0.0, %v241
    %v243 = vpop.f32.mrb[0].mxu0
    %v244 = vadd.f32 0.0, %v243
    %245 = vmatprep.mubr.f32.mxu0 0.0
    %246 = vmatmul.mubr.f32.gmra.mrb[0].mxu0 %v89
    %v247 = vpop.f32.mrb[0].mxu0
    %v248 = vadd.f32 0.0, %v247
    %v249 = vpop.f32.mrb[0].mxu0
    %v250 = vadd.f32 0.0, %v249
    %251 = vmatprep.mubr.f32.mxu0 0.0
    %252 = vmatmul.mubr.f32.gmra.mrb[0].mxu0 %v90
    %v253 = vpop.f32.mrb[0].mxu0
    %v254 = vadd.f32 0.0, %v253
    %v255 = vpop.f32.mrb[0].mxu0
    %v256 = vadd.f32 0.0, %v255
    %257 = vmatprep.mubr.f32.mxu0 0.0
    %258 = vmatmul.mubr.f32.gmra.mrb[0].mxu0 %v91
    %v259 = vpop.f32.mrb[0].mxu0
    %v260 = vadd.f32 0.0, %v259
    %v261 = vpop.f32.mrb[0].mxu0
    %v262 = vadd.f32 0.0, %v261
    %263 = vmatprep.mubr.f32.mxu0 0.0
    %264 = vmatmul.mubr.f32.gmra.mrb[0].mxu0 %v92
    %v265 = vpop.f32.mrb[0].mxu0
    %v266 = vadd.f32 0.0, %v265
    %v267 = vpop.f32.mrb[0].mxu0
    %v268 = vadd.f32 0.0, %v267
    %269 = vdwg.mxu0
    %270 = vmatprep.subr.mxu0 %v96
    %271 = vmatpush1.msra.mxu0 %v95
    %272 = vmatprep.subr.mxu0 %v100
    %273 = vmatpush1.msra.mxu0 %v99
    %274 = vmatprep.subr.mxu0 %v104
    %275 = vmatpush1.msra.mxu0 %v103
    %276 = vmatprep.subr.mxu0 %v108
    %277 = vmatpush1.msra.mxu0 %v107
    %278 = vmatprep.subr.mxu0 %v112
    %279 = vmatpush1.msra.mxu0 %v111
    %280 = vmatprep.subr.mxu0 %v116
    %281 = vmatpush1.msra.mxu0 %v115
    %282 = vmatprep.subr.mxu0 %v120
    %283 = vmatpush1.msra.mxu0 %v119
    %284 = vmatprep.subr.mxu0 %v124
    %285 = vmatpush1.msra.mxu0 %v123
    %286 = vmatprep.subr.mxu0 %v128
    %287 = vmatpush1.msra.mxu0 %v127
    %288 = vmatprep.subr.mxu0 %v132
    %289 = vmatpush1.msra.mxu0 %v131
    %290 = vmatprep.subr.mxu0 %v136
    %291 = vmatpush1.msra.mxu0 %v135
    %292 = vmatprep.subr.mxu0 %v140
    %293 = vmatpush1.msra.mxu0 %v139
    %294 = vmatprep.subr.mxu0 %v144
    %295 = vmatpush1.msra.mxu0 %v143
    %296 = vmatprep.subr.mxu0 %v148
    %297 = vmatpush1.msra.mxu0 %v147
    %298 = vmatprep.subr.mxu0 %v152
    %299 = vmatpush1.msra.mxu0 %v151
    %300 = vmatprep.subr.mxu0 %v156
    %301 = vmatpush1.msra.mxu0 %v155
    %302 = vmatprep.subr.mxu0 0.0
    %303 = vmatpush1.msra.mxu0 0.0
    %304 = vmatprep.subr.mxu0 0.0
    %305 = vmatpush1.msra.mxu0 0.0
    %306 = vmatprep.subr.mxu0 0.0
    %307 = vmatpush1.msra.mxu0 0.0
    %308 = vmatprep.subr.mxu0 0.0
    %309 = vmatpush1.msra.mxu0 0.0
    %310 = vmatprep.subr.mxu0 0.0
    %311 = vmatpush1.msra.mxu0 0.0
    %312 = vmatprep.subr.mxu0 0.0
    %313 = vmatpush1.msra.mxu0 0.0
    %314 = vmatprep.subr.mxu0 0.0
    %315 = vmatpush1.msra.mxu0 0.0
    %316 = vmatprep.subr.mxu0 0.0
    %317 = vmatpush1.msra.mxu0 0.0
    %318 = vmatprep.subr.mxu0 0.0
    %319 = vmatpush1.msra.mxu0 0.0
    %320 = vmatprep.subr.mxu0 0.0
    %321 = vmatpush1.msra.mxu0 0.0
    %322 = vmatprep.subr.mxu0 0.0
    %323 = vmatpush1.msra.mxu0 0.0
    %324 = vmatprep.subr.mxu0 0.0
    %325 = vmatpush1.msra.mxu0 0.0
    %326 = vmatprep.subr.mxu0 0.0
    %327 = vmatpush1.msra.mxu0 0.0
    %328 = vmatprep.subr.mxu0 0.0
    %329 = vmatpush1.msra.mxu0 0.0
    %330 = vmatprep.subr.mxu0 0.0
    %331 = vmatpush1.msra.mxu0 0.0
    %332 = vmatprep.subr.mxu0 0.0
    %333 = vmatpush1.msra.mxu0 0.0
    %334 = vmatprep.mubr.f32.mxu0 0.0
    %335 = vmatmul.mubr.f32.gmra.mrb[0].mxu0 %v85
    %v336 = vpop.f32.mrb[0].mxu0
    %v337 = vadd.f32 0.0, %v336
    %v338 = vpop.f32.mrb[0].mxu0
    %v339 = vadd.f32 0.0, %v338
    %340 = vmatprep.mubr.f32.mxu0 0.0
    %341 = vmatmul.mubr.f32.gmra.mrb[0].mxu0 %v86
    %v342 = vpop.f32.mrb[0].mxu0
    %v343 = vadd.f32 0.0, %v342
    %v344 = vpop.f32.mrb[0].mxu0
    %v345 = vadd.f32 0.0, %v344
    %346 = vmatprep.mubr.f32.mxu0 0.0
    %347 = vmatmul.mubr.f32.gmra.mrb[0].mxu0 %v87
    %v348 = vpop.f32.mrb[0].mxu0
    %v349 = vadd.f32 0.0, %v348
    %v350 = vpop.f32.mrb[0].mxu0
    %v351 = vadd.f32 0.0, %v350
    %352 = vmatprep.mubr.f32.mxu0 0.0
    %353 = vmatmul.mubr.f32.gmra.mrb[0].mxu0 %v88
    %v354 = vpop.f32.mrb[0].mxu0
    %v355 = vadd.f32 0.0, %v354
    %v356 = vpop.f32.mrb[0].mxu0
    %v357 = vadd.f32 0.0, %v356
    %358 = vmatprep.mubr.f32.mxu0 0.0
    %359 = vmatmul.mubr.f32.gmra.mrb[0].mxu0 %v89
    %v360 = vpop.f32.mrb[0].mxu0
    %v361 = vadd.f32 0.0, %v360
    %v362 = vpop.f32.mrb[0].mxu0
    %v363 = vadd.f32 0.0, %v362
    %364 = vmatprep.mubr.f32.mxu0 0.0
    %365 = vmatmul.mubr.f32.gmra.mrb[0].mxu0 %v90
    %v366 = vpop.f32.mrb[0].mxu0
    %v367 = vadd.f32 0.0, %v366
    %v368 = vpop.f32.mrb[0].mxu0
    %v369 = vadd.f32 0.0, %v368
    %370 = vmatprep.mubr.f32.mxu0 0.0
    %371 = vmatmul.mubr.f32.gmra.mrb[0].mxu0 %v91
    %v372 = vpop.f32.mrb[0].mxu0
    %v373 = vadd.f32 0.0, %v372
    %v374 = vpop.f32.mrb[0].mxu0
    %v375 = vadd.f32 0.0, %v374
    %376 = vmatprep.mubr.f32.mxu0 0.0
    %377 = vmatmul.mubr.f32.gmra.mrb[0].mxu0 %v92
    %v378 = vpop.f32.mrb[0].mxu0
    %v379 = vadd.f32 0.0, %v378
    %v380 = vpop.f32.mrb[0].mxu0
    %v381 = vadd.f32 0.0, %v380
    %382 = vdwg.mxu0
    %v383 = vld [vmem:[%s3] sm:$0xf]
    %v385 = vlaneseq
    %v386 = vshrl.u32 %v385, 7
    %v387 = vsub.s32 0, %v386
    %v388 = vrot.slane %v383, %v387
    %v389 = vlaneseq
    %v390 = vshrl.u32 %v389, 7
    %v391 = vsub.s32 1, %v390
    %v392 = vrot.slane %v383, %v391
    %v393 = vlaneseq
    %v394 = vshrl.u32 %v393, 7
    %v395 = vsub.s32 2, %v394
    %v396 = vrot.slane %v383, %v395
    %v397 = vlaneseq
    %v398 = vshrl.u32 %v397, 7
    %v399 = vsub.s32 3, %v398
    %v400 = vrot.slane %v383, %v399
    %v405 = vadd.f32 %v224, %v388
    %v406 = vadd.f32 %v226, %v392
    %v407 = vadd.f32 %v337, %v396
    %v408 = vadd.f32 %v339, %v400
    %v409 = vadd.f32 %v230, %v388
    %v410 = vadd.f32 %v232, %v392
    %v411 = vadd.f32 %v343, %v396
    %v412 = vadd.f32 %v345, %v400
    %v413 = vadd.f32 %v236, %v388
    %v414 = vadd.f32 %v238, %v392
    %v415 = vadd.f32 %v349, %v396
    %v416 = vadd.f32 %v351, %v400
    %v417 = vadd.f32 %v242, %v388
    %v418 = vadd.f32 %v244, %v392
    %v419 = vadd.f32 %v355, %v396
    %v420 = vadd.f32 %v357, %v400
    %v421 = vadd.f32 %v248, %v388
    %v422 = vadd.f32 %v250, %v392
    %v423 = vadd.f32 %v361, %v396
    %v424 = vadd.f32 %v363, %v400
    %v425 = vadd.f32 %v254, %v388
    %v426 = vadd.f32 %v256, %v392
    %v427 = vadd.f32 %v367, %v396
    %v428 = vadd.f32 %v369, %v400
    %v429 = vadd.f32 %v260, %v388
    %v430 = vadd.f32 %v262, %v392
    %v431 = vadd.f32 %v373, %v396
    %v432 = vadd.f32 %v375, %v400
    %v433 = vadd.f32 %v266, %v388
    %v434 = vadd.f32 %v268, %v392
    %v435 = vadd.f32 %v379, %v396
    %v436 = vadd.f32 %v381, %v400
    %437 = vst [vmem:[#allocation2] sm:$0xff] %v405
    %438 = vst [vmem:[#allocation2 + $0x8] sm:$0xff] %v406
    %439 = vst [vmem:[#allocation2 + $0x10] sm:$0xff] %v407
    %440 = vst [vmem:[#allocation2 + $0x18] sm:$0xff] %v408
    %441 = vst [vmem:[#allocation2 + $0x20] sm:$0xff] %v409
    %442 = vst [vmem:[#allocation2 + $0x28] sm:$0xff] %v410
    %443 = vst [vmem:[#allocation2 + $0x30] sm:$0xff] %v411
    %444 = vst [vmem:[#allocation2 + $0x38] sm:$0xff] %v412
    %445 = vst [vmem:[#allocation2 + $0x40] sm:$0xff] %v413
    %446 = vst [vmem:[#allocation2 + $0x48] sm:$0xff] %v414
    %447 = vst [vmem:[#allocation2 + $0x50] sm:$0xff] %v415
    %448 = vst [vmem:[#allocation2 + $0x58] sm:$0xff] %v416
    %449 = vst [vmem:[#allocation2 + $0x60] sm:$0xff] %v417
    %450 = vst [vmem:[#allocation2 + $0x68] sm:$0xff] %v418
    %451 = vst [vmem:[#allocation2 + $0x70] sm:$0xff] %v419
    %452 = vst [vmem:[#allocation2 + $0x78] sm:$0xff] %v420
    %453 = vst [vmem:[#allocation2 + $0x80] sm:$0xff] %v421
    %454 = vst [vmem:[#allocation2 + $0x88] sm:$0xff] %v422
    %455 = vst [vmem:[#allocation2 + $0x90] sm:$0xff] %v423
    %456 = vst [vmem:[#allocation2 + $0x98] sm:$0xff] %v424
    %457 = vst [vmem:[#allocation2 + $0xa0] sm:$0xff] %v425
    %458 = vst [vmem:[#allocation2 + $0xa8] sm:$0xff] %v426
    %459 = vst [vmem:[#allocation2 + $0xb0] sm:$0xff] %v427
    %460 = vst [vmem:[#allocation2 + $0xb8] sm:$0xff] %v428
    %461 = vst [vmem:[#allocation2 + $0xc0] sm:$0xff] %v429
    %462 = vst [vmem:[#allocation2 + $0xc8] sm:$0xff] %v430
    %463 = vst [vmem:[#allocation2 + $0xd0] sm:$0xff] %v431
    %464 = vst [vmem:[#allocation2 + $0xd8] sm:$0xff] %v432
    %465 = vst [vmem:[#allocation2 + $0xe0] sm:$0xff] %v433
    %466 = vst [vmem:[#allocation2 + $0xe8] sm:$0xff] %v434
    %467 = vst [vmem:[#allocation2 + $0xf0] sm:$0xff] %v435
    %468 = vst [vmem:[#allocation2 + $0xf8] sm:$0xff] %v436
    %v469 = vld [vmem:[#allocation10] sm:$0xff]
    %v470 = vld [vmem:[#allocation10 + $0x8] sm:$0xff]
    %v471 = vld [vmem:[#allocation10 + $0x10] sm:$0xff]
    %v472 = vld [vmem:[#allocation10 + $0x18] sm:$0xff]
    %v473 = vld [vmem:[#allocation10 + $0x20] sm:$0xff]
    %v474 = vld [vmem:[#allocation10 + $0x28] sm:$0xff]
    %v475 = vld [vmem:[#allocation10 + $0x30] sm:$0xff]
    %v476 = vld [vmem:[#allocation10 + $0x38] sm:$0xff]
    %v477 = vld [vmem:[#allocation10 + $0x40] sm:$0xff]
    %v478 = vld [vmem:[#allocation10 + $0x48] sm:$0xff]
    %v479 = vld [vmem:[#allocation10 + $0x50] sm:$0xff]
    %v480 = vld [vmem:[#allocation10 + $0x58] sm:$0xff]
    %v481 = vld [vmem:[#allocation10 + $0x60] sm:$0xff]
    %v482 = vld [vmem:[#allocation10 + $0x68] sm:$0xff]
    %v483 = vld [vmem:[#allocation10 + $0x70] sm:$0xff]
    %v484 = vld [vmem:[#allocation10 + $0x78] sm:$0xff]
    %v485 = vld [vmem:[#allocation10 + $0x80] sm:$0xff]
    %v486 = vld [vmem:[#allocation10 + $0x88] sm:$0xff]
    %v487 = vld [vmem:[#allocation10 + $0x90] sm:$0xff]
    %v488 = vld [vmem:[#allocation10 + $0x98] sm:$0xff]
    %v489 = vld [vmem:[#allocation10 + $0xa0] sm:$0xff]
    %v490 = vld [vmem:[#allocation10 + $0xa8] sm:$0xff]
    %v491 = vld [vmem:[#allocation10 + $0xb0] sm:$0xff]
    %v492 = vld [vmem:[#allocation10 + $0xb8] sm:$0xff]
    %v493 = vld [vmem:[#allocation10 + $0xc0] sm:$0xff]
    %v494 = vld [vmem:[#allocation10 + $0xc8] sm:$0xff]
    %v495 = vld [vmem:[#allocation10 + $0xd0] sm:$0xff]
    %v496 = vld [vmem:[#allocation10 + $0xd8] sm:$0xff]
    %v497 = vld [vmem:[#allocation10 + $0xe0] sm:$0xff]
    %v498 = vld [vmem:[#allocation10 + $0xe8] sm:$0xff]
    %v499 = vld [vmem:[#allocation10 + $0xf0] sm:$0xff]
    %v500 = vld [vmem:[#allocation10 + $0xf8] sm:$0xff]
    %v501 = vld [vmem:[#allocation10 + $0x100] sm:$0xff]
    %v502 = vld [vmem:[#allocation10 + $0x108] sm:$0xff]
    %v503 = vld [vmem:[#allocation10 + $0x110] sm:$0xff]
    %v504 = vld [vmem:[#allocation10 + $0x118] sm:$0xff]
    %v505 = vld [vmem:[#allocation10 + $0x120] sm:$0xff]
    %v506 = vld [vmem:[#allocation10 + $0x128] sm:$0xff]
    %v507 = vld [vmem:[#allocation10 + $0x130] sm:$0xff]
    %v508 = vld [vmem:[#allocation10 + $0x138] sm:$0xff]
    %v509 = vld [vmem:[#allocation10 + $0x140] sm:$0xff]
    %v510 = vld [vmem:[#allocation10 + $0x148] sm:$0xff]
    %v511 = vld [vmem:[#allocation10 + $0x150] sm:$0xff]
    %v512 = vld [vmem:[#allocation10 + $0x158] sm:$0xff]
    %v513 = vld [vmem:[#allocation10 + $0x160] sm:$0xff]
    %v514 = vld [vmem:[#allocation10 + $0x168] sm:$0xff]
    %v515 = vld [vmem:[#allocation10 + $0x170] sm:$0xff]
    %v516 = vld [vmem:[#allocation10 + $0x178] sm:$0xff]
    %v517 = vld [vmem:[#allocation10 + $0x180] sm:$0xff]
    %v518 = vld [vmem:[#allocation10 + $0x188] sm:$0xff]
    %v519 = vld [vmem:[#allocation10 + $0x190] sm:$0xff]
    %v520 = vld [vmem:[#allocation10 + $0x198] sm:$0xff]
    %v521 = vld [vmem:[#allocation10 + $0x1a0] sm:$0xff]
    %v522 = vld [vmem:[#allocation10 + $0x1a8] sm:$0xff]
    %v523 = vld [vmem:[#allocation10 + $0x1b0] sm:$0xff]
    %v524 = vld [vmem:[#allocation10 + $0x1b8] sm:$0xff]
    %v525 = vld [vmem:[#allocation10 + $0x1c0] sm:$0xff]
    %v526 = vld [vmem:[#allocation10 + $0x1c8] sm:$0xff]
    %v527 = vld [vmem:[#allocation10 + $0x1d0] sm:$0xff]
    %v528 = vld [vmem:[#allocation10 + $0x1d8] sm:$0xff]
    %v529 = vld [vmem:[#allocation10 + $0x1e0] sm:$0xff]
    %v530 = vld [vmem:[#allocation10 + $0x1e8] sm:$0xff]
    %v531 = vld [vmem:[#allocation10 + $0x1f0] sm:$0xff]
    %v532 = vld [vmem:[#allocation10 + $0x1f8] sm:$0xff]
    loop: start=0, step=1, limit=2
    $region46: #{tpu_custom_call.1} parent=1 // loop_pre_header
      _
    $region47: #{tpu_custom_call.1} parent=1 // loop_header
      %s534 = sphi 0, %s538
      %p535 = scmp.ge.s32.totalorder %s534, 2
    $region48: #{tpu_custom_call.1} parent=1 // loop_header_branch
      %537 = sbr.rel (%p535) target = $region52
    $region49: #{tpu_custom_call.1} parent=1 // loop_body
      %s539 = smul.u32 %s534, 4
      %s540 = smul.u32 %s539, 4
      %s541 = smul.addr %s540, 8
      %s542 = scalar_lea.vmem [#allocation2], %s541
      %v543 = vld [vmem:[%s542] sm:$0xff]
      %v544 = vld [vmem:[%s542 + $0x8] sm:$0xff]
      %v545 = vld [vmem:[%s542 + $0x10] sm:$0xff]
      %v546 = vld [vmem:[%s542 + $0x18] sm:$0xff]
      %v547 = vld [vmem:[#allocation3] sm:$0xff]
      %548 = vmatprep.subr.mxu0 %v470
      %549 = vmatpush1.msra.mxu0 %v469
      %550 = vmatprep.subr.mxu0 %v474
      %551 = vmatpush1.msra.mxu0 %v473
      %552 = vmatprep.subr.mxu0 %v478
      %553 = vmatpush1.msra.mxu0 %v477
      %554 = vmatprep.subr.mxu0 %v482
      %555 = vmatpush1.msra.mxu0 %v481
      %556 = vmatprep.subr.mxu0 %v486
      %557 = vmatpush1.msra.mxu0 %v485
      %558 = vmatprep.subr.mxu0 %v490
      %559 = vmatpush1.msra.mxu0 %v489
      %560 = vmatprep.subr.mxu0 %v494
      %561 = vmatpush1.msra.mxu0 %v493
      %562 = vmatprep.subr.mxu0 %v498
      %563 = vmatpush1.msra.mxu0 %v497
      %564 = vmatprep.subr.mxu0 %v502
      %565 = vmatpush1.msra.mxu0 %v501
      %566 = vmatprep.subr.mxu0 %v506
      %567 = vmatpush1.msra.mxu0 %v505
      %568 = vmatprep.subr.mxu0 %v510
      %569 = vmatpush1.msra.mxu0 %v509
      %570 = vmatprep.subr.mxu0 %v514
      %571 = vmatpush1.msra.mxu0 %v513
      %572 = vmatprep.subr.mxu0 %v518
      %573 = vmatpush1.msra.mxu0 %v517
      %574 = vmatprep.subr.mxu0 %v522
      %575 = vmatpush1.msra.mxu0 %v521
      %576 = vmatprep.subr.mxu0 %v526
      %577 = vmatpush1.msra.mxu0 %v525
      %578 = vmatprep.subr.mxu0 %v530
      %579 = vmatpush1.msra.mxu0 %v529
      %580 = vmatprep.subr.mxu0 0.0
      %581 = vmatpush1.msra.mxu0 0.0
      %582 = vmatprep.subr.mxu0 0.0
      %583 = vmatpush1.msra.mxu0 0.0
      %584 = vmatprep.subr.mxu0 0.0
      %585 = vmatpush1.msra.mxu0 0.0
      %586 = vmatprep.subr.mxu0 0.0
      %587 = vmatpush1.msra.mxu0 0.0
      %588 = vmatprep.subr.mxu0 0.0
      %589 = vmatpush1.msra.mxu0 0.0
      %590 = vmatprep.subr.mxu0 0.0
      %591 = vmatpush1.msra.mxu0 0.0
      %592 = vmatprep.subr.mxu0 0.0
      %593 = vmatpush1.msra.mxu0 0.0
      %594 = vmatprep.subr.mxu0 0.0
      %595 = vmatpush1.msra.mxu0 0.0
      %596 = vmatprep.subr.mxu0 0.0
      %597 = vmatpush1.msra.mxu0 0.0
      %598 = vmatprep.subr.mxu0 0.0
      %599 = vmatpush1.msra.mxu0 0.0
      %600 = vmatprep.subr.mxu0 0.0
      %601 = vmatpush1.msra.mxu0 0.0
      %602 = vmatprep.subr.mxu0 0.0
      %603 = vmatpush1.msra.mxu0 0.0
      %604 = vmatprep.subr.mxu0 0.0
      %605 = vmatpush1.msra.mxu0 0.0
      %606 = vmatprep.subr.mxu0 0.0
      %607 = vmatpush1.msra.mxu0 0.0
      %608 = vmatprep.subr.mxu0 0.0
      %609 = vmatpush1.msra.mxu0 0.0
      %610 = vmatprep.subr.mxu0 0.0
      %611 = vmatpush1.msra.mxu0 0.0
      %612 = vmatprep.mubr.f32.mxu0 0.0
      %613 = vmatmul.mubr.f32.gmra.mrb[0].mxu0 %v547
      %v614 = vpop.f32.mrb[0].mxu0
      %v615 = vadd.f32 0.0, %v614
      %v616 = vpop.f32.mrb[0].mxu0
      %v617 = vadd.f32 0.0, %v616
      %618 = vdwg.mxu0
      %619 = vmatprep.subr.mxu0 %v472
      %620 = vmatpush1.msra.mxu0 %v471
      %621 = vmatprep.subr.mxu0 %v476
      %622 = vmatpush1.msra.mxu0 %v475
      %623 = vmatprep.subr.mxu0 %v480
      %624 = vmatpush1.msra.mxu0 %v479
      %625 = vmatprep.subr.mxu0 %v484
      %626 = vmatpush1.msra.mxu0 %v483
      %627 = vmatprep.subr.mxu0 %v488
      %628 = vmatpush1.msra.mxu0 %v487
      %629 = vmatprep.subr.mxu0 %v492
      %630 = vmatpush1.msra.mxu0 %v491
      %631 = vmatprep.subr.mxu0 %v496
      %632 = vmatpush1.msra.mxu0 %v495
      %633 = vmatprep.subr.mxu0 %v500
      %634 = vmatpush1.msra.mxu0 %v499
      %635 = vmatprep.subr.mxu0 %v504
      %636 = vmatpush1.msra.mxu0 %v503
      %637 = vmatprep.subr.mxu0 %v508
      %638 = vmatpush1.msra.mxu0 %v507
      %639 = vmatprep.subr.mxu0 %v512
      %640 = vmatpush1.msra.mxu0 %v511
      %641 = vmatprep.subr.mxu0 %v516
      %642 = vmatpush1.msra.mxu0 %v515
      %643 = vmatprep.subr.mxu0 %v520
      %644 = vmatpush1.msra.mxu0 %v519
      %645 = vmatprep.subr.mxu0 %v524
      %646 = vmatpush1.msra.mxu0 %v523
      %647 = vmatprep.subr.mxu0 %v528
      %648 = vmatpush1.msra.mxu0 %v527
      %649 = vmatprep.subr.mxu0 %v532
      %650 = vmatpush1.msra.mxu0 %v531
      %651 = vmatprep.subr.mxu0 0.0
      %652 = vmatpush1.msra.mxu0 0.0
      %653 = vmatprep.subr.mxu0 0.0
      %654 = vmatpush1.msra.mxu0 0.0
      %655 = vmatprep.subr.mxu0 0.0
      %656 = vmatpush1.msra.mxu0 0.0
      %657 = vmatprep.subr.mxu0 0.0
      %658 = vmatpush1.msra.mxu0 0.0
      %659 = vmatprep.subr.mxu0 0.0
      %660 = vmatpush1.msra.mxu0 0.0
      %661 = vmatprep.subr.mxu0 0.0
      %662 = vmatpush1.msra.mxu0 0.0
      %663 = vmatprep.subr.mxu0 0.0
      %664 = vmatpush1.msra.mxu0 0.0
      %665 = vmatprep.subr.mxu0 0.0
      %666 = vmatpush1.msra.mxu0 0.0
      %667 = vmatprep.subr.mxu0 0.0
      %668 = vmatpush1.msra.mxu0 0.0
      %669 = vmatprep.subr.mxu0 0.0
      %670 = vmatpush1.msra.mxu0 0.0
      %671 = vmatprep.subr.mxu0 0.0
      %672 = vmatpush1.msra.mxu0 0.0
      %673 = vmatprep.subr.mxu0 0.0
      %674 = vmatpush1.msra.mxu0 0.0
      %675 = vmatprep.subr.mxu0 0.0
      %676 = vmatpush1.msra.mxu0 0.0
      %677 = vmatprep.subr.mxu0 0.0
      %678 = vmatpush1.msra.mxu0 0.0
      %679 = vmatprep.subr.mxu0 0.0
      %680 = vmatpush1.msra.mxu0 0.0
      %681 = vmatprep.subr.mxu0 0.0
      %682 = vmatpush1.msra.mxu0 0.0
      %683 = vmatprep.mubr.f32.mxu0 0.0
      %684 = vmatmul.mubr.f32.gmra.mrb[0].mxu0 %v547
      %v685 = vpop.f32.mrb[0].mxu0
      %v686 = vadd.f32 0.0, %v685
      %v687 = vpop.f32.mrb[0].mxu0
      %v688 = vadd.f32 0.0, %v687
      %689 = vdwg.mxu0
      %v690 = vadd.f32 %v543, %v615
      %v691 = vadd.f32 %v544, %v617
      %v692 = vadd.f32 %v545, %v686
      %v693 = vadd.f32 %v546, %v688
      %v694 = vxor.u32 %v690, 2147483648
      %v695 = vxor.u32 %v691, 2147483648
      %v696 = vxor.u32 %v692, 2147483648
      %v697 = vmul.f32 %v694, 1.442695
      %v698 = vpow.pop %v697
      %v699 = vmul.f32 %v695, 1.442695
      %v700 = vpow.pop %v699
      %v701 = vmul.f32 %v696, 1.442695
      %v702 = vpow.pop %v701
      %v703 = vadd.f32 %v698, 1.0
      %v704 = vadd.f32 %v700, 1.0
      %v705 = vadd.f32 %v702, 1.0
      %v706 = vrcp.pop %v703
      %v707 = vmul.f32 1.0, %v706
      %v708 = vrcp.pop %v704
      %v709 = vmul.f32 1.0, %v708
      %v710 = vrcp.pop %v705
      %v711 = vmul.f32 1.0, %v710
      %v712 = vtanh.pop %v693
      %v713 = vld [vmem:[#allocation4] sm:$0xff]
      %v714 = vmul.f32 %v709, %v713
      %v715 = vmul.f32 %v707, %v712
      %v716 = vadd.f32 %v714, %v715
      %v717 = vtanh.pop %v716
      %v718 = vmul.f32 %v711, %v717
      %719 = vst [vmem:[#allocation4] sm:$0xff] %v716
      %720 = vst [vmem:[#allocation3] sm:$0xff] %v718
      %s721 = sadd.s32 %s539, 1
      %s722 = smul.u32 %s721, 4
      %s723 = smul.addr %s722, 8
      %s724 = scalar_lea.vmem [#allocation2], %s723
      %v725 = vld [vmem:[%s724] sm:$0xff]
      %v726 = vld [vmem:[%s724 + $0x8] sm:$0xff]
      %v727 = vld [vmem:[%s724 + $0x10] sm:$0xff]
      %v728 = vld [vmem:[%s724 + $0x18] sm:$0xff]
      %v729 = vld [vmem:[#allocation3] sm:$0xff]
      %730 = vmatprep.subr.mxu0 %v470
      %731 = vmatpush1.msra.mxu0 %v469
      %732 = vmatprep.subr.mxu0 %v474
      %733 = vmatpush1.msra.mxu0 %v473
      %734 = vmatprep.subr.mxu0 %v478
      %735 = vmatpush1.msra.mxu0 %v477
      %736 = vmatprep.subr.mxu0 %v482
      %737 = vmatpush1.msra.mxu0 %v481
      %738 = vmatprep.subr.mxu0 %v486
      %739 = vmatpush1.msra.mxu0 %v485
      %740 = vmatprep.subr.mxu0 %v490
      %741 = vmatpush1.msra.mxu0 %v489
      %742 = vmatprep.subr.mxu0 %v494
      %743 = vmatpush1.msra.mxu0 %v493
      %744 = vmatprep.subr.mxu0 %v498
      %745 = vmatpush1.msra.mxu0 %v497
      %746 = vmatprep.subr.mxu0 %v502
      %747 = vmatpush1.msra.mxu0 %v501
      %748 = vmatprep.subr.mxu0 %v506
      %749 = vmatpush1.msra.mxu0 %v505
      %750 = vmatprep.subr.mxu0 %v510
      %751 = vmatpush1.msra.mxu0 %v509
      %752 = vmatprep.subr.mxu0 %v514
      %753 = vmatpush1.msra.mxu0 %v513
      %754 = vmatprep.subr.mxu0 %v518
      %755 = vmatpush1.msra.mxu0 %v517
      %756 = vmatprep.subr.mxu0 %v522
      %757 = vmatpush1.msra.mxu0 %v521
      %758 = vmatprep.subr.mxu0 %v526
      %759 = vmatpush1.msra.mxu0 %v525
      %760 = vmatprep.subr.mxu0 %v530
      %761 = vmatpush1.msra.mxu0 %v529
      %762 = vmatprep.subr.mxu0 0.0
      %763 = vmatpush1.msra.mxu0 0.0
      %764 = vmatprep.subr.mxu0 0.0
      %765 = vmatpush1.msra.mxu0 0.0
      %766 = vmatprep.subr.mxu0 0.0
      %767 = vmatpush1.msra.mxu0 0.0
      %768 = vmatprep.subr.mxu0 0.0
      %769 = vmatpush1.msra.mxu0 0.0
      %770 = vmatprep.subr.mxu0 0.0
      %771 = vmatpush1.msra.mxu0 0.0
      %772 = vmatprep.subr.mxu0 0.0
      %773 = vmatpush1.msra.mxu0 0.0
      %774 = vmatprep.subr.mxu0 0.0
      %775 = vmatpush1.msra.mxu0 0.0
      %776 = vmatprep.subr.mxu0 0.0
      %777 = vmatpush1.msra.mxu0 0.0
      %778 = vmatprep.subr.mxu0 0.0
      %779 = vmatpush1.msra.mxu0 0.0
      %780 = vmatprep.subr.mxu0 0.0
      %781 = vmatpush1.msra.mxu0 0.0
      %782 = vmatprep.subr.mxu0 0.0
      %783 = vmatpush1.msra.mxu0 0.0
      %784 = vmatprep.subr.mxu0 0.0
      %785 = vmatpush1.msra.mxu0 0.0
      %786 = vmatprep.subr.mxu0 0.0
      %787 = vmatpush1.msra.mxu0 0.0
      %788 = vmatprep.subr.mxu0 0.0
      %789 = vmatpush1.msra.mxu0 0.0
      %790 = vmatprep.subr.mxu0 0.0
      %791 = vmatpush1.msra.mxu0 0.0
      %792 = vmatprep.subr.mxu0 0.0
      %793 = vmatpush1.msra.mxu0 0.0
      %794 = vmatprep.mubr.f32.mxu0 0.0
      %795 = vmatmul.mubr.f32.gmra.mrb[0].mxu0 %v729
      %v796 = vpop.f32.mrb[0].mxu0
      %v797 = vadd.f32 0.0, %v796
      %v798 = vpop.f32.mrb[0].mxu0
      %v799 = vadd.f32 0.0, %v798
      %800 = vdwg.mxu0
      %801 = vmatprep.subr.mxu0 %v472
      %802 = vmatpush1.msra.mxu0 %v471
      %803 = vmatprep.subr.mxu0 %v476
      %804 = vmatpush1.msra.mxu0 %v475
      %805 = vmatprep.subr.mxu0 %v480
      %806 = vmatpush1.msra.mxu0 %v479
      %807 = vmatprep.subr.mxu0 %v484
      %808 = vmatpush1.msra.mxu0 %v483
      %809 = vmatprep.subr.mxu0 %v488
      %810 = vmatpush1.msra.mxu0 %v487
      %811 = vmatprep.subr.mxu0 %v492
      %812 = vmatpush1.msra.mxu0 %v491
      %813 = vmatprep.subr.mxu0 %v496
      %814 = vmatpush1.msra.mxu0 %v495
      %815 = vmatprep.subr.mxu0 %v500
      %816 = vmatpush1.msra.mxu0 %v499
      %817 = vmatprep.subr.mxu0 %v504
      %818 = vmatpush1.msra.mxu0 %v503
      %819 = vmatprep.subr.mxu0 %v508
      %820 = vmatpush1.msra.mxu0 %v507
      %821 = vmatprep.subr.mxu0 %v512
      %822 = vmatpush1.msra.mxu0 %v511
      %823 = vmatprep.subr.mxu0 %v516
      %824 = vmatpush1.msra.mxu0 %v515
      %825 = vmatprep.subr.mxu0 %v520
      %826 = vmatpush1.msra.mxu0 %v519
      %827 = vmatprep.subr.mxu0 %v524
      %828 = vmatpush1.msra.mxu0 %v523
      %829 = vmatprep.subr.mxu0 %v528
      %830 = vmatpush1.msra.mxu0 %v527
      %831 = vmatprep.subr.mxu0 %v532
      %832 = vmatpush1.msra.mxu0 %v531
      %833 = vmatprep.subr.mxu0 0.0
      %834 = vmatpush1.msra.mxu0 0.0
      %835 = vmatprep.subr.mxu0 0.0
      %836 = vmatpush1.msra.mxu0 0.0
      %837 = vmatprep.subr.mxu0 0.0
      %838 = vmatpush1.msra.mxu0 0.0
      %839 = vmatprep.subr.mxu0 0.0
      %840 = vmatpush1.msra.mxu0 0.0
      %841 = vmatprep.subr.mxu0 0.0
      %842 = vmatpush1.msra.mxu0 0.0
      %843 = vmatprep.subr.mxu0 0.0
      %844 = vmatpush1.msra.mxu0 0.0
      %845 = vmatprep.subr.mxu0 0.0
      %846 = vmatpush1.msra.mxu0 0.0
      %847 = vmatprep.subr.mxu0 0.0
      %848 = vmatpush1.msra.mxu0 0.0
      %849 = vmatprep.subr.mxu0 0.0
      %850 = vmatpush1.msra.mxu0 0.0
      %851 = vmatprep.subr.mxu0 0.0
      %852 = vmatpush1.msra.mxu0 0.0
      %853 = vmatprep.subr.mxu0 0.0
      %854 = vmatpush1.msra.mxu0 0.0
      %855 = vmatprep.subr.mxu0 0.0
      %856 = vmatpush1.msra.mxu0 0.0
      %857 = vmatprep.subr.mxu0 0.0
      %858 = vmatpush1.msra.mxu0 0.0
      %859 = vmatprep.subr.mxu0 0.0
      %860 = vmatpush1.msra.mxu0 0.0
      %861 = vmatprep.subr.mxu0 0.0
      %862 = vmatpush1.msra.mxu0 0.0
      %863 = vmatprep.subr.mxu0 0.0
      %864 = vmatpush1.msra.mxu0 0.0
      %865 = vmatprep.mubr.f32.mxu0 0.0
      %866 = vmatmul.mubr.f32.gmra.mrb[0].mxu0 %v729
      %v867 = vpop.f32.mrb[0].mxu0
      %v868 = vadd.f32 0.0, %v867
      %v869 = vpop.f32.mrb[0].mxu0
      %v870 = vadd.f32 0.0, %v869
      %871 = vdwg.mxu0
      %v872 = vadd.f32 %v725, %v797
      %v873 = vadd.f32 %v726, %v799
      %v874 = vadd.f32 %v727, %v868
      %v875 = vadd.f32 %v728, %v870
      %v876 = vxor.u32 %v872, 2147483648
      %v877 = vxor.u32 %v873, 2147483648
      %v878 = vxor.u32 %v874, 2147483648
      %v879 = vmul.f32 %v876, 1.442695
      %v880 = vpow.pop %v879
      %v881 = vmul.f32 %v877, 1.442695
      %v882 = vpow.pop %v881
      %v883 = vmul.f32 %v878, 1.442695
      %v884 = vpow.pop %v883
      %v885 = vadd.f32 %v880, 1.0
      %v886 = vadd.f32 %v882, 1.0
      %v887 = vadd.f32 %v884, 1.0
      %v888 = vrcp.pop %v885
      %v889 = vmul.f32 1.0, %v888
      %v890 = vrcp.pop %v886
      %v891 = vmul.f32 1.0, %v890
      %v892 = vrcp.pop %v887
      %v893 = vmul.f32 1.0, %v892
      %v894 = vtanh.pop %v875
      %v895 = vld [vmem:[#allocation4] sm:$0xff]
      %v896 = vmul.f32 %v891, %v895
      %v897 = vmul.f32 %v889, %v894
      %v898 = vadd.f32 %v896, %v897
      %v899 = vtanh.pop %v898
      %v900 = vmul.f32 %v893, %v899
      %901 = vst [vmem:[#allocation4] sm:$0xff] %v898
      %902 = vst [vmem:[#allocation3] sm:$0xff] %v900
      %s903 = sadd.s32 %s539, 2
      %s904 = smul.u32 %s903, 4
      %s905 = smul.addr %s904, 8
      %s906 = scalar_lea.vmem [#allocation2], %s905
      %v907 = vld [vmem:[%s906] sm:$0xff]
      %v908 = vld [vmem:[%s906 + $0x8] sm:$0xff]
      %v909 = vld [vmem:[%s906 + $0x10] sm:$0xff]
      %v910 = vld [vmem:[%s906 + $0x18] sm:$0xff]
      %v911 = vld [vmem:[#allocation3] sm:$0xff]
      %912 = vmatprep.subr.mxu0 %v470
      %913 = vmatpush1.msra.mxu0 %v469
      %914 = vmatprep.subr.mxu0 %v474
      %915 = vmatpush1.msra.mxu0 %v473
      %916 = vmatprep.subr.mxu0 %v478
      %917 = vmatpush1.msra.mxu0 %v477
      %918 = vmatprep.subr.mxu0 %v482
      %919 = vmatpush1.msra.mxu0 %v481
      %920 = vmatprep.subr.mxu0 %v486
      %921 = vmatpush1.msra.mxu0 %v485
      %922 = vmatprep.subr.mxu0 %v490
      %923 = vmatpush1.msra.mxu0 %v489
      %924 = vmatprep.subr.mxu0 %v494
      %925 = vmatpush1.msra.mxu0 %v493
      %926 = vmatprep.subr.mxu0 %v498
      %927 = vmatpush1.msra.mxu0 %v497
      %928 = vmatprep.subr.mxu0 %v502
      %929 = vmatpush1.msra.mxu0 %v501
      %930 = vmatprep.subr.mxu0 %v506
      %931 = vmatpush1.msra.mxu0 %v505
      %932 = vmatprep.subr.mxu0 %v510
      %933 = vmatpush1.msra.mxu0 %v509
      %934 = vmatprep.subr.mxu0 %v514
      %935 = vmatpush1.msra.mxu0 %v513
      %936 = vmatprep.subr.mxu0 %v518
      %937 = vmatpush1.msra.mxu0 %v517
      %938 = vmatprep.subr.mxu0 %v522
      %939 = vmatpush1.msra.mxu0 %v521
      %940 = vmatprep.subr.mxu0 %v526
      %941 = vmatpush1.msra.mxu0 %v525
      %942 = vmatprep.subr.mxu0 %v530
      %943 = vmatpush1.msra.mxu0 %v529
      %944 = vmatprep.subr.mxu0 0.0
      %945 = vmatpush1.msra.mxu0 0.0
      %946 = vmatprep.subr.mxu0 0.0
      %947 = vmatpush1.msra.mxu0 0.0
      %948 = vmatprep.subr.mxu0 0.0
      %949 = vmatpush1.msra.mxu0 0.0
      %950 = vmatprep.subr.mxu0 0.0
      %951 = vmatpush1.msra.mxu0 0.0
      %952 = vmatprep.subr.mxu0 0.0
      %953 = vmatpush1.msra.mxu0 0.0
      %954 = vmatprep.subr.mxu0 0.0
      %955 = vmatpush1.msra.mxu0 0.0
      %956 = vmatprep.subr.mxu0 0.0
      %957 = vmatpush1.msra.mxu0 0.0
      %958 = vmatprep.subr.mxu0 0.0
      %959 = vmatpush1.msra.mxu0 0.0
      %960 = vmatprep.subr.mxu0 0.0
      %961 = vmatpush1.msra.mxu0 0.0
      %962 = vmatprep.subr.mxu0 0.0
      %963 = vmatpush1.msra.mxu0 0.0
      %964 = vmatprep.subr.mxu0 0.0
      %965 = vmatpush1.msra.mxu0 0.0
      %966 = vmatprep.subr.mxu0 0.0
      %967 = vmatpush1.msra.mxu0 0.0
      %968 = vmatprep.subr.mxu0 0.0
      %969 = vmatpush1.msra.mxu0 0.0
      %970 = vmatprep.subr.mxu0 0.0
      %971 = vmatpush1.msra.mxu0 0.0
      %972 = vmatprep.subr.mxu0 0.0
      %973 = vmatpush1.msra.mxu0 0.0
      %974 = vmatprep.subr.mxu0 0.0
      %975 = vmatpush1.msra.mxu0 0.0
      %976 = vmatprep.mubr.f32.mxu0 0.0
      %977 = vmatmul.mubr.f32.gmra.mrb[0].mxu0 %v911
      %v978 = vpop.f32.mrb[0].mxu0
      %v979 = vadd.f32 0.0, %v978
      %v980 = vpop.f32.mrb[0].mxu0
      %v981 = vadd.f32 0.0, %v980
      %982 = vdwg.mxu0
      %983 = vmatprep.subr.mxu0 %v472
      %984 = vmatpush1.msra.mxu0 %v471
      %985 = vmatprep.subr.mxu0 %v476
      %986 = vmatpush1.msra.mxu0 %v475
      %987 = vmatprep.subr.mxu0 %v480
      %988 = vmatpush1.msra.mxu0 %v479
      %989 = vmatprep.subr.mxu0 %v484
      %990 = vmatpush1.msra.mxu0 %v483
      %991 = vmatprep.subr.mxu0 %v488
      %992 = vmatpush1.msra.mxu0 %v487
      %993 = vmatprep.subr.mxu0 %v492
      %994 = vmatpush1.msra.mxu0 %v491
      %995 = vmatprep.subr.mxu0 %v496
      %996 = vmatpush1.msra.mxu0 %v495
      %997 = vmatprep.subr.mxu0 %v500
      %998 = vmatpush1.msra.mxu0 %v499
      %999 = vmatprep.subr.mxu0 %v504
      %1000 = vmatpush1.msra.mxu0 %v503
      %1001 = vmatprep.subr.mxu0 %v508
      %1002 = vmatpush1.msra.mxu0 %v507
      %1003 = vmatprep.subr.mxu0 %v512
      %1004 = vmatpush1.msra.mxu0 %v511
      %1005 = vmatprep.subr.mxu0 %v516
      %1006 = vmatpush1.msra.mxu0 %v515
      %1007 = vmatprep.subr.mxu0 %v520
      %1008 = vmatpush1.msra.mxu0 %v519
      %1009 = vmatprep.subr.mxu0 %v524
      %1010 = vmatpush1.msra.mxu0 %v523
      %1011 = vmatprep.subr.mxu0 %v528
      %1012 = vmatpush1.msra.mxu0 %v527
      %1013 = vmatprep.subr.mxu0 %v532
      %1014 = vmatpush1.msra.mxu0 %v531
      %1015 = vmatprep.subr.mxu0 0.0
      %1016 = vmatpush1.msra.mxu0 0.0
      %1017 = vmatprep.subr.mxu0 0.0
      %1018 = vmatpush1.msra.mxu0 0.0
      %1019 = vmatprep.subr.mxu0 0.0
      %1020 = vmatpush1.msra.mxu0 0.0
      %1021 = vmatprep.subr.mxu0 0.0
      %1022 = vmatpush1.msra.mxu0 0.0
      %1023 = vmatprep.subr.mxu0 0.0
      %1024 = vmatpush1.msra.mxu0 0.0
      %1025 = vmatprep.subr.mxu0 0.0
      %1026 = vmatpush1.msra.mxu0 0.0
      %1027 = vmatprep.subr.mxu0 0.0
      %1028 = vmatpush1.msra.mxu0 0.0
      %1029 = vmatprep.subr.mxu0 0.0
      %1030 = vmatpush1.msra.mxu0 0.0
      %1031 = vmatprep.subr.mxu0 0.0
      %1032 = vmatpush1.msra.mxu0 0.0
      %1033 = vmatprep.subr.mxu0 0.0
      %1034 = vmatpush1.msra.mxu0 0.0
      %1035 = vmatprep.subr.mxu0 0.0
      %1036 = vmatpush1.msra.mxu0 0.0
      %1037 = vmatprep.subr.mxu0 0.0
      %1038 = vmatpush1.msra.mxu0 0.0
      %1039 = vmatprep.subr.mxu0 0.0
      %1040 = vmatpush1.msra.mxu0 0.0
      %1041 = vmatprep.subr.mxu0 0.0
      %1042 = vmatpush1.msra.mxu0 0.0
      %1043 = vmatprep.subr.mxu0 0.0
      %1044 = vmatpush1.msra.mxu0 0.0
      %1045 = vmatprep.subr.mxu0 0.0
      %1046 = vmatpush1.msra.mxu0 0.0
      %1047 = vmatprep.mubr.f32.mxu0 0.0
      %1048 = vmatmul.mubr.f32.gmra.mrb[0].mxu0 %v911
      %v1049 = vpop.f32.mrb[0].mxu0
      %v1050 = vadd.f32 0.0, %v1049
      %v1051 = vpop.f32.mrb[0].mxu0
      %v1052 = vadd.f32 0.0, %v1051
      %1053 = vdwg.mxu0
      %v1054 = vadd.f32 %v907, %v979
      %v1055 = vadd.f32 %v908, %v981
      %v1056 = vadd.f32 %v909, %v1050
      %v1057 = vadd.f32 %v910, %v1052
      %v1058 = vxor.u32 %v1054, 2147483648
      %v1059 = vxor.u32 %v1055, 2147483648
      %v1060 = vxor.u32 %v1056, 2147483648
      %v1061 = vmul.f32 %v1058, 1.442695
      %v1062 = vpow.pop %v1061
      %v1063 = vmul.f32 %v1059, 1.442695
      %v1064 = vpow.pop %v1063
      %v1065 = vmul.f32 %v1060, 1.442695
      %v1066 = vpow.pop %v1065
      %v1067 = vadd.f32 %v1062, 1.0
      %v1068 = vadd.f32 %v1064, 1.0
      %v1069 = vadd.f32 %v1066, 1.0
      %v1070 = vrcp.pop %v1067
      %v1071 = vmul.f32 1.0, %v1070
      %v1072 = vrcp.pop %v1068
      %v1073 = vmul.f32 1.0, %v1072
      %v1074 = vrcp.pop %v1069
      %v1075 = vmul.f32 1.0, %v1074
      %v1076 = vtanh.pop %v1057
      %v1077 = vld [vmem:[#allocation4] sm:$0xff]
      %v1078 = vmul.f32 %v1073, %v1077
      %v1079 = vmul.f32 %v1071, %v1076
      %v1080 = vadd.f32 %v1078, %v1079
      %v1081 = vtanh.pop %v1080
      %v1082 = vmul.f32 %v1075, %v1081
      %1083 = vst [vmem:[#allocation4] sm:$0xff] %v1080
      %1084 = vst [vmem:[#allocation3] sm:$0xff] %v1082
      %s1085 = sadd.s32 %s539, 3
      %s1086 = smul.u32 %s1085, 4
      %s1087 = smul.addr %s1086, 8
      %s1088 = scalar_lea.vmem [#allocation2], %s1087
      %v1089 = vld [vmem:[%s1088] sm:$0xff]
      %v1090 = vld [vmem:[%s1088 + $0x8] sm:$0xff]
      %v1091 = vld [vmem:[%s1088 + $0x10] sm:$0xff]
      %v1092 = vld [vmem:[%s1088 + $0x18] sm:$0xff]
      %v1093 = vld [vmem:[#allocation3] sm:$0xff]
      %1094 = vmatprep.subr.mxu0 %v470
      %1095 = vmatpush1.msra.mxu0 %v469
      %1096 = vmatprep.subr.mxu0 %v474
      %1097 = vmatpush1.msra.mxu0 %v473
      %1098 = vmatprep.subr.mxu0 %v478
      %1099 = vmatpush1.msra.mxu0 %v477
      %1100 = vmatprep.subr.mxu0 %v482
      %1101 = vmatpush1.msra.mxu0 %v481
      %1102 = vmatprep.subr.mxu0 %v486
      %1103 = vmatpush1.msra.mxu0 %v485
      %1104 = vmatprep.subr.mxu0 %v490
      %1105 = vmatpush1.msra.mxu0 %v489
      %1106 = vmatprep.subr.mxu0 %v494
      %1107 = vmatpush1.msra.mxu0 %v493
      %1108 = vmatprep.subr.mxu0 %v498
      %1109 = vmatpush1.msra.mxu0 %v497
      %1110 = vmatprep.subr.mxu0 %v502
      %1111 = vmatpush1.msra.mxu0 %v501
      %1112 = vmatprep.subr.mxu0 %v506
      %1113 = vmatpush1.msra.mxu0 %v505
      %1114 = vmatprep.subr.mxu0 %v510
      %1115 = vmatpush1.msra.mxu0 %v509
      %1116 = vmatprep.subr.mxu0 %v514
      %1117 = vmatpush1.msra.mxu0 %v513
      %1118 = vmatprep.subr.mxu0 %v518
      %1119 = vmatpush1.msra.mxu0 %v517
      %1120 = vmatprep.subr.mxu0 %v522
      %1121 = vmatpush1.msra.mxu0 %v521
      %1122 = vmatprep.subr.mxu0 %v526
      %1123 = vmatpush1.msra.mxu0 %v525
      %1124 = vmatprep.subr.mxu0 %v530
      %1125 = vmatpush1.msra.mxu0 %v529
      %1126 = vmatprep.subr.mxu0 0.0
      %1127 = vmatpush1.msra.mxu0 0.0
      %1128 = vmatprep.subr.mxu0 0.0
      %1129 = vmatpush1.msra.mxu0 0.0
      %1130 = vmatprep.subr.mxu0 0.0
      %1131 = vmatpush1.msra.mxu0 0.0
      %1132 = vmatprep.subr.mxu0 0.0
      %1133 = vmatpush1.msra.mxu0 0.0
      %1134 = vmatprep.subr.mxu0 0.0
      %1135 = vmatpush1.msra.mxu0 0.0
      %1136 = vmatprep.subr.mxu0 0.0
      %1137 = vmatpush1.msra.mxu0 0.0
      %1138 = vmatprep.subr.mxu0 0.0
      %1139 = vmatpush1.msra.mxu0 0.0
      %1140 = vmatprep.subr.mxu0 0.0
      %1141 = vmatpush1.msra.mxu0 0.0
      %1142 = vmatprep.subr.mxu0 0.0
      %1143 = vmatpush1.msra.mxu0 0.0
      %1144 = vmatprep.subr.mxu0 0.0
      %1145 = vmatpush1.msra.mxu0 0.0
      %1146 = vmatprep.subr.mxu0 0.0
      %1147 = vmatpush1.msra.mxu0 0.0
      %1148 = vmatprep.subr.mxu0 0.0
      %1149 = vmatpush1.msra.mxu0 0.0
      %1150 = vmatprep.subr.mxu0 0.0
      %1151 = vmatpush1.msra.mxu0 0.0
      %1152 = vmatprep.subr.mxu0 0.0
      %1153 = vmatpush1.msra.mxu0 0.0
      %1154 = vmatprep.subr.mxu0 0.0
      %1155 = vmatpush1.msra.mxu0 0.0
      %1156 = vmatprep.subr.mxu0 0.0
      %1157 = vmatpush1.msra.mxu0 0.0
      %1158 = vmatprep.mubr.f32.mxu0 0.0
      %1159 = vmatmul.mubr.f32.gmra.mrb[0].mxu0 %v1093
      %v1160 = vpop.f32.mrb[0].mxu0
      %v1161 = vadd.f32 0.0, %v1160
      %v1162 = vpop.f32.mrb[0].mxu0
      %v1163 = vadd.f32 0.0, %v1162
      %1164 = vdwg.mxu0
      %1165 = vmatprep.subr.mxu0 %v472
      %1166 = vmatpush1.msra.mxu0 %v471
      %1167 = vmatprep.subr.mxu0 %v476
      %1168 = vmatpush1.msra.mxu0 %v475
      %1169 = vmatprep.subr.mxu0 %v480
      %1170 = vmatpush1.msra.mxu0 %v479
      %1171 = vmatprep.subr.mxu0 %v484
      %1172 = vmatpush1.msra.mxu0 %v483
      %1173 = vmatprep.subr.mxu0 %v488
      %1174 = vmatpush1.msra.mxu0 %v487
      %1175 = vmatprep.subr.mxu0 %v492
      %1176 = vmatpush1.msra.mxu0 %v491
      %1177 = vmatprep.subr.mxu0 %v496
      %1178 = vmatpush1.msra.mxu0 %v495
      %1179 = vmatprep.subr.mxu0 %v500
      %1180 = vmatpush1.msra.mxu0 %v499
      %1181 = vmatprep.subr.mxu0 %v504
      %1182 = vmatpush1.msra.mxu0 %v503
      %1183 = vmatprep.subr.mxu0 %v508
      %1184 = vmatpush1.msra.mxu0 %v507
      %1185 = vmatprep.subr.mxu0 %v512
      %1186 = vmatpush1.msra.mxu0 %v511
      %1187 = vmatprep.subr.mxu0 %v516
      %1188 = vmatpush1.msra.mxu0 %v515
      %1189 = vmatprep.subr.mxu0 %v520
      %1190 = vmatpush1.msra.mxu0 %v519
      %1191 = vmatprep.subr.mxu0 %v524
      %1192 = vmatpush1.msra.mxu0 %v523
      %1193 = vmatprep.subr.mxu0 %v528
      %1194 = vmatpush1.msra.mxu0 %v527
      %1195 = vmatprep.subr.mxu0 %v532
      %1196 = vmatpush1.msra.mxu0 %v531
      %1197 = vmatprep.subr.mxu0 0.0
      %1198 = vmatpush1.msra.mxu0 0.0
      %1199 = vmatprep.subr.mxu0 0.0
      %1200 = vmatpush1.msra.mxu0 0.0
      %1201 = vmatprep.subr.mxu0 0.0
      %1202 = vmatpush1.msra.mxu0 0.0
      %1203 = vmatprep.subr.mxu0 0.0
      %1204 = vmatpush1.msra.mxu0 0.0
      %1205 = vmatprep.subr.mxu0 0.0
      %1206 = vmatpush1.msra.mxu0 0.0
      %1207 = vmatprep.subr.mxu0 0.0
      %1208 = vmatpush1.msra.mxu0 0.0
      %1209 = vmatprep.subr.mxu0 0.0
      %1210 = vmatpush1.msra.mxu0 0.0
      %1211 = vmatprep.subr.mxu0 0.0
      %1212 = vmatpush1.msra.mxu0 0.0
      %1213 = vmatprep.subr.mxu0 0.0
      %1214 = vmatpush1.msra.mxu0 0.0
      %1215 = vmatprep.subr.mxu0 0.0
      %1216 = vmatpush1.msra.mxu0 0.0
      %1217 = vmatprep.subr.mxu0 0.0
      %1218 = vmatpush1.msra.mxu0 0.0
      %1219 = vmatprep.subr.mxu0 0.0
      %1220 = vmatpush1.msra.mxu0 0.0
      %1221 = vmatprep.subr.mxu0 0.0
      %1222 = vmatpush1.msra.mxu0 0.0
      %1223 = vmatprep.subr.mxu0 0.0
      %1224 = vmatpush1.msra.mxu0 0.0
      %1225 = vmatprep.subr.mxu0 0.0
      %1226 = vmatpush1.msra.mxu0 0.0
      %1227 = vmatprep.subr.mxu0 0.0
      %1228 = vmatpush1.msra.mxu0 0.0
      %1229 = vmatprep.mubr.f32.mxu0 0.0
      %1230 = vmatmul.mubr.f32.gmra.mrb[0].mxu0 %v1093
      %v1231 = vpop.f32.mrb[0].mxu0
      %v1232 = vadd.f32 0.0, %v1231
      %v1233 = vpop.f32.mrb[0].mxu0
      %v1234 = vadd.f32 0.0, %v1233
      %1235 = vdwg.mxu0
      %v1236 = vadd.f32 %v1089, %v1161
      %v1237 = vadd.f32 %v1090, %v1163
      %v1238 = vadd.f32 %v1091, %v1232
      %v1239 = vadd.f32 %v1092, %v1234
      %v1240 = vxor.u32 %v1236, 2147483648
      %v1241 = vxor.u32 %v1237, 2147483648
      %v1242 = vxor.u32 %v1238, 2147483648
      %v1243 = vmul.f32 %v1240, 1.442695
      %v1244 = vpow.pop %v1243
      %v1245 = vmul.f32 %v1241, 1.442695
      %v1246 = vpow.pop %v1245
      %v1247 = vmul.f32 %v1242, 1.442695
      %v1248 = vpow.pop %v1247
      %v1249 = vadd.f32 %v1244, 1.0
      %v1250 = vadd.f32 %v1246, 1.0
      %v1251 = vadd.f32 %v1248, 1.0
      %v1252 = vrcp.pop %v1249
      %v1253 = vmul.f32 1.0, %v1252
      %v1254 = vrcp.pop %v1250
      %v1255 = vmul.f32 1.0, %v1254
      %v1256 = vrcp.pop %v1251
      %v1257 = vmul.f32 1.0, %v1256
      %v1258 = vtanh.pop %v1239
      %v1259 = vld [vmem:[#allocation4] sm:$0xff]
      %v1260 = vmul.f32 %v1255, %v1259
      %v1261 = vmul.f32 %v1253, %v1258
      %v1262 = vadd.f32 %v1260, %v1261
      %v1263 = vtanh.pop %v1262
      %v1264 = vmul.f32 %v1257, %v1263
      %1265 = vst [vmem:[#allocation4] sm:$0xff] %v1262
      %1266 = vst [vmem:[#allocation3] sm:$0xff] %v1264
    $region50: #{tpu_custom_call.1} parent=1 // loop_footer
      %s538 = sadd.s32 1, %s534
    $region51: #{tpu_custom_call.1} parent=1 // loop_footer_branch
      %533 = sbr.rel target = $region47
    $region52: #{tpu_custom_call.1} parent=1 // loop_exit
      _
    // Predicated region
    $region53: #{tpu_custom_call.1} parent=1 // pred_check
      %p1267 = pneg %p79
    $region54: #{tpu_custom_call.1} parent=1 // pred_check_branch
      %1269 = sbr.rel (%p1267) target = $region56
    $region55: #{tpu_custom_call.1} parent=1 // pred_region
      %v1270 = vld [vmem:[#allocation3] sm:$0xff]
      %v1271 = vld [vmem:[#allocation11] sm:$0xff]
      %v1272 = vld [vmem:[#allocation11 + $0x8] sm:$0xff]
      %v1273 = vld [vmem:[#allocation11 + $0x10] sm:$0xff]
      %v1274 = vld [vmem:[#allocation11 + $0x18] sm:$0xff]
      %v1275 = vld [vmem:[#allocation11 + $0x20] sm:$0xff]
      %v1276 = vld [vmem:[#allocation11 + $0x28] sm:$0xff]
      %v1277 = vld [vmem:[#allocation11 + $0x30] sm:$0xff]
      %v1278 = vld [vmem:[#allocation11 + $0x38] sm:$0xff]
      %v1279 = vld [vmem:[#allocation11 + $0x40] sm:$0xff]
      %v1280 = vld [vmem:[#allocation11 + $0x48] sm:$0xff]
      %v1281 = vld [vmem:[#allocation11 + $0x50] sm:$0xff]
      %v1282 = vld [vmem:[#allocation11 + $0x58] sm:$0xff]
      %v1283 = vld [vmem:[#allocation11 + $0x60] sm:$0xff]
      %v1284 = vld [vmem:[#allocation11 + $0x68] sm:$0xff]
      %v1285 = vld [vmem:[#allocation11 + $0x70] sm:$0xff]
      %v1286 = vld [vmem:[#allocation11 + $0x78] sm:$0xff]
      %v1287 = vld [vmem:[%s5] sm:$0x1]
      %v1289 = vlaneseq
      %v1290 = vshrl.u32 %v1289, 7
      %v1291 = vsub.s32 0, %v1290
      %v1292 = vrot.slane %v1287, %v1291
      %1294 = vmatprep.subr.mxu0 0.0
      %1295 = vmatpush1.msra.mxu0 %v1271
      %1296 = vmatprep.subr.mxu0 0.0
      %1297 = vmatpush1.msra.mxu0 %v1272
      %1298 = vmatprep.subr.mxu0 0.0
      %1299 = vmatpush1.msra.mxu0 %v1273
      %1300 = vmatprep.subr.mxu0 0.0
      %1301 = vmatpush1.msra.mxu0 %v1274
      %1302 = vmatprep.subr.mxu0 0.0
      %1303 = vmatpush1.msra.mxu0 %v1275
      %1304 = vmatprep.subr.mxu0 0.0
      %1305 = vmatpush1.msra.mxu0 %v1276
      %1306 = vmatprep.subr.mxu0 0.0
      %1307 = vmatpush1.msra.mxu0 %v1277
      %1308 = vmatprep.subr.mxu0 0.0
      %1309 = vmatpush1.msra.mxu0 %v1278
      %1310 = vmatprep.subr.mxu0 0.0
      %1311 = vmatpush1.msra.mxu0 %v1279
      %1312 = vmatprep.subr.mxu0 0.0
      %1313 = vmatpush1.msra.mxu0 %v1280
      %1314 = vmatprep.subr.mxu0 0.0
      %1315 = vmatpush1.msra.mxu0 %v1281
      %1316 = vmatprep.subr.mxu0 0.0
      %1317 = vmatpush1.msra.mxu0 %v1282
      %1318 = vmatprep.subr.mxu0 0.0
      %1319 = vmatpush1.msra.mxu0 %v1283
      %1320 = vmatprep.subr.mxu0 0.0
      %1321 = vmatpush1.msra.mxu0 %v1284
      %1322 = vmatprep.subr.mxu0 0.0
      %1323 = vmatpush1.msra.mxu0 %v1285
      %1324 = vmatprep.subr.mxu0 0.0
      %1325 = vmatpush1.msra.mxu0 %v1286
      %1326 = vmatprep.subr.mxu0 0.0
      %1327 = vmatpush1.msra.mxu0 0.0
      %1328 = vmatprep.subr.mxu0 0.0
      %1329 = vmatpush1.msra.mxu0 0.0
      %1330 = vmatprep.subr.mxu0 0.0
      %1331 = vmatpush1.msra.mxu0 0.0
      %1332 = vmatprep.subr.mxu0 0.0
      %1333 = vmatpush1.msra.mxu0 0.0
      %1334 = vmatprep.subr.mxu0 0.0
      %1335 = vmatpush1.msra.mxu0 0.0
      %1336 = vmatprep.subr.mxu0 0.0
      %1337 = vmatpush1.msra.mxu0 0.0
      %1338 = vmatprep.subr.mxu0 0.0
      %1339 = vmatpush1.msra.mxu0 0.0
      %1340 = vmatprep.subr.mxu0 0.0
      %1341 = vmatpush1.msra.mxu0 0.0
      %1342 = vmatprep.subr.mxu0 0.0
      %1343 = vmatpush1.msra.mxu0 0.0
      %1344 = vmatprep.subr.mxu0 0.0
      %1345 = vmatpush1.msra.mxu0 0.0
      %1346 = vmatprep.subr.mxu0 0.0
      %1347 = vmatpush1.msra.mxu0 0.0
      %1348 = vmatprep.subr.mxu0 0.0
      %1349 = vmatpush1.msra.mxu0 0.0
      %1350 = vmatprep.subr.mxu0 0.0
      %1351 = vmatpush1.msra.mxu0 0.0
      %1352 = vmatprep.subr.mxu0 0.0
      %1353 = vmatpush1.msra.mxu0 0.0
      %1354 = vmatprep.subr.mxu0 0.0
      %1355 = vmatpush1.msra.mxu0 0.0
      %1356 = vmatprep.subr.mxu0 0.0
      %1357 = vmatpush1.msra.mxu0 0.0
      %1358 = vmatprep.mubr.f32.mxu0 0.0
      %1359 = vmatmul.mubr.f32.gmra.mrb[0].mxu0 %v1270
      %v1360 = vpop.f32.mrb[0].mxu0
      %v1361 = vadd.f32 %v1292, %v1360
      %v1362 = vpop.f32.mrb[0].mxu0
      %1363 = vdwg.mxu0
      %1364 = vst [vmem:[#allocation13] sm:$0xff] %v1361
    $region56: #{tpu_custom_call.1} parent=1 // pred_fallthru
      _
    // Predicated region
    $region57: #{tpu_custom_call.1} parent=1 // pred_check
      _
    $region58: #{tpu_custom_call.1} parent=1 // pred_check_branch
      %1366 = sbr.rel (0) target = $region60
    $region59: #{tpu_custom_call.1} parent=1 // pred_region
      %s1368 = ssub.s32 128, 128
      %1369 = vsyncadd [#allocation7], %s1368
      %s1371 = sshll.u32 [#allocation13], 4
      %s1372 = int_to_ptr.vmem [resolvable:$true] %s1371
      %1374 = dma.vmem_to_hbm [thread:$0]  %s1372, 128, %s6, [#allocation7]
    $region60: #{tpu_custom_call.1} parent=1 // pred_fallthru
      _
    // Predicated region
    $region61: #{tpu_custom_call.1} parent=1 // pred_check
      _
    $region62: #{tpu_custom_call.1} parent=1 // pred_check_branch
      %1376 = sbr.rel (0) target = $region64
    $region63: #{tpu_custom_call.1} parent=1 // pred_region
      %1377 = dma.done [#allocation7], 128
    $region64: #{tpu_custom_call.1} parent=1 // pred_fallthru
      _
    %1378 = vsyncpa [#allocation6], 1
    %1379 = vsyncpa [#allocation9], 1
    %1380 = vsyncpa [#allocation12], 1
    %1381 = vsyncpa [#allocation7], 1

// kernel: tpu_custom_call.1
$region0: #{tpu_custom_call.1}
  #allocation0 [shape = 'u32[]', space=smem, size = 0x4, offset = 0x4, fixed_abs, tag = 'smem constant byte address 0x4 - core index']
  #allocation1 [shape = 'u32[144,128]{1,0:T(1,128)}', space=vmem, size = 0x12000, scoped, tag = 'internal scratch']
  #allocation2 [shape = 'f32[8,8,512]{2,1,0:T(8,128)}', space=vmem, size = 0x20000, scoped, tag = 'scratch operand']
  #allocation3 [shape = 'f32[8,128]{1,0:T(8,128)}', space=vmem, size = 0x1000, scoped, tag = 'scratch operand']
  #allocation4 [shape = 'f32[8,128]{1,0:T(8,128)}', space=vmem, size = 0x1000, scoped, tag = 'scratch operand']
  %s0 = inlined_call_operand.hbm [shape: f32[8,8,128], index: 0, kind: input, shape index: {}]
  %s1 = inlined_call_operand.hbm [shape: f32[128,512], index: 1, kind: input, shape index: {}]
  %s2 = inlined_call_operand.hbm [shape: f32[128,512], index: 2, kind: input, shape index: {}]
  %s3 = inlined_call_operand.vmem [shape: f32[1,512], index: 3, kind: input, shape index: {}]
  %s4 = inlined_call_operand.hbm [shape: f32[128,128], index: 4, kind: input, shape index: {}]
  %s5 = inlined_call_operand.vmem [shape: f32[1,128], index: 5, kind: input, shape index: {}]
  %s6 = inlined_call_operand.hbm [shape: f32[8,128], index: 6, kind: output, shape index: {}]
  %s7 = sld [smem:[#allocation0]]
  $region65: #{tpu_custom_call.1} parent=0
    _
  %s9 = ssub.s32 1, %s7
  %s10 = scalar_select 0, %s9, %s7
  $region1: #{tpu_custom_call.1} parent=0
    #allocation5 [shape = 'u8[32768]{0}', space=vmem, size = 0x8000, scoped, tag = 'input window, operand 0, single buffered']
    #allocation6 [shape = 's32[1]{0}', space=sflag, size = 0x4, scoped, tag = 'scoped memory for tpu_custom_call.1']
    #allocation7 [shape = 's32[1]{0}', space=sflag, size = 0x4, scoped, tag = 'scoped memory for tpu_custom_call.1']
    #allocation8 [shape = 'u8[262144]{0}', space=vmem, size = 0x40000, scoped, tag = 'input window, operand 1, single buffered']
    #allocation9 [shape = 's32[1]{0}', space=sflag, size = 0x4, scoped, tag = 'scoped memory for tpu_custom_call.1']
    #allocation10 [shape = 'u8[262144]{0}', space=vmem, size = 0x40000, scoped, tag = 'input window, operand 2, single buffered']
    #allocation11 [shape = 'u8[65536]{0}', space=vmem, size = 0x10000, scoped, tag = 'input window, operand 4, single buffered']
    #allocation12 [shape = 's32[1]{0}', space=sflag, size = 0x4, scoped, tag = 'scoped memory for tpu_custom_call.1']
    #allocation13 [shape = 'u8[4096]{0}', space=vmem, size = 0x1000, scoped, tag = 'output window, operand 0, single buffered']
    %11 = vsyncpa [#allocation6], 0
    %12 = vsyncpa [#allocation9], 0
    %13 = vsyncpa [#allocation12], 0
    %14 = vsyncpa [#allocation7], 0
    // Predicated region
    $region2: #{tpu_custom_call.1} parent=1 // pred_check
      _
    $region3: #{tpu_custom_call.1} parent=1 // pred_check_branch
      %16 = sbr.rel (0) target = $region5
    $region4: #{tpu_custom_call.1} parent=1 // pred_region
      %s18 = ssub.s32 1024, 1024
      %19 = vsyncadd [#allocation6], %s18
      %s20 = sshll.u32 [#allocation5], 4
      %s21 = int_to_ptr.vmem [resolvable:$true] %s20
      %26 = dma.hbm_to_vmem [thread:$0]  %s0, 1024, %s21, [#allocation6], 128, 128, 8
    $region5: #{tpu_custom_call.1} parent=1 // pred_fallthru
      _
    // Predicated region
    $region6: #{tpu_custom_call.1} parent=1 // pred_check
      _
    $region7: #{tpu_custom_call.1} parent=1 // pred_check_branch
      %28 = sbr.rel (0) target = $region9
    $region8: #{tpu_custom_call.1} parent=1 // pred_region
      %s30 = ssub.s32 8192, 8192
      %31 = vsyncadd [#allocation9], %s30
      %s32 = sshll.u32 [#allocation8], 4
      %s33 = int_to_ptr.vmem [resolvable:$true] %s32
      %38 = dma.hbm_to_vmem [thread:$0]  %s1, 8192, %s33, [#allocation9], 512, 512, 32
    $region9: #{tpu_custom_call.1} parent=1 // pred_fallthru
      _
    // Predicated region
    $region10: #{tpu_custom_call.1} parent=1 // pred_check
      _
    $region11: #{tpu_custom_call.1} parent=1 // pred_check_branch
      %40 = sbr.rel (0) target = $region13
    $region12: #{tpu_custom_call.1} parent=1 // pred_region
      %s42 = ssub.s32 8192, 8192
      %43 = vsyncadd [#allocation9], %s42
      %s44 = sshll.u32 [#allocation10], 4
      %s45 = int_to_ptr.vmem [resolvable:$true] %s44
      %50 = dma.hbm_to_vmem [thread:$0]  %s2, 8192, %s45, [#allocation9], 512, 512, 32
    $region13: #{tpu_custom_call.1} parent=1 // pred_fallthru
      _
    // Predicated region
    $region14: #{tpu_custom_call.1} parent=1 // pred_check
      _
    $region15: #{tpu_custom_call.1} parent=1 // pred_check_branch
      %52 = sbr.rel (0) target = $region17
    $region16: #{tpu_custom_call.1} parent=1 // pred_region
      _
    $region17: #{tpu_custom_call.1} parent=1 // pred_fallthru
      _
    // Predicated region
    $region18: #{tpu_custom_call.1} parent=1 // pred_check
      _
    $region19: #{tpu_custom_call.1} parent=1 // pred_check_branch
      %54 = sbr.rel (0) target = $region21
    $region20: #{tpu_custom_call.1} parent=1 // pred_region
      %s56 = ssub.s32 2048, 2048
      %57 = vsyncadd [#allocation12], %s56
      %s58 = sshll.u32 [#allocation11], 4
      %s59 = int_to_ptr.vmem [resolvable:$true] %s58
      %64 = dma.hbm_to_vmem [thread:$0]  %s4, 2048, %s59, [#allocation12], 128, 128, 8
    $region21: #{tpu_custom_call.1} parent=1 // pred_fallthru
      _
    // Predicated region
    $region22: #{tpu_custom_call.1} parent=1 // pred_check
      _
    $region23: #{tpu_custom_call.1} parent=1 // pred_check_branch
      %66 = sbr.rel (0) target = $region25
    $region24: #{tpu_custom_call.1} parent=1 // pred_region
      _
    $region25: #{tpu_custom_call.1} parent=1 // pred_fallthru
      _
    // Predicated region
    $region26: #{tpu_custom_call.1} parent=1 // pred_check
      _
    $region27: #{tpu_custom_call.1} parent=1 // pred_check_branch
      %68 = sbr.rel (0) target = $region29
    $region28: #{tpu_custom_call.1} parent=1 // pred_region
      %69 = dma.done [#allocation6], 1024
    $region29: #{tpu_custom_call.1} parent=1 // pred_fallthru
      _
    // Predicated region
    $region30: #{tpu_custom_call.1} parent=1 // pred_check
      _
    $region31: #{tpu_custom_call.1} parent=1 // pred_check_branch
      %71 = sbr.rel (0) target = $region33
    $region32: #{tpu_custom_call.1} parent=1 // pred_region
      %72 = dma.done [#allocation9], 8192
    $region33: #{tpu_custom_call.1} parent=1 // pred_fallthru
      _
    // Predicated region
    $region34: #{tpu_custom_call.1} parent=1 // pred_check
      _
    $region35: #{tpu_custom_call.1} parent=1 // pred_check_branch
      %74 = sbr.rel (0) target = $region37
    $region36: #{tpu_custom_call.1} parent=1 // pred_region
      %75 = dma.done [#allocation9], 8192
    $region37: #{tpu_custom_call.1} parent=1 // pred_fallthru
      _
    // Predicated region
    $region38: #{tpu_custom_call.1} parent=1 // pred_check
      _
    $region39: #{tpu_custom_call.1} parent=1 // pred_check_branch
      %77 = sbr.rel (0) target = $region41
    $region40: #{tpu_custom_call.1} parent=1 // pred_region
      %78 = dma.done [#allocation12], 2048
    $region41: #{tpu_custom_call.1} parent=1 // pred_fallthru
      _
    %p79 = scmp.eq.s32.totalorder 0, 0
    // Predicated region
    $region42: #{tpu_custom_call.1} parent=1 // pred_check
      %p80 = pneg %p79
    $region43: #{tpu_custom_call.1} parent=1 // pred_check_branch
      %82 = sbr.rel (%p80) target = $region45
    $region44: #{tpu_custom_call.1} parent=1 // pred_region
      %83 = vst [vmem:[#allocation3] sm:$0xff] 0.0
      %84 = vst [vmem:[#allocation4] sm:$0xff] 0.0
    $region45: #{tpu_custom_call.1} parent=1 // pred_fallthru
      _
    %v85 = vld [vmem:[#allocation5] sm:$0xff]
    %v86 = vld [vmem:[#allocation5 + $0x8] sm:$0xff]
    %v87 = vld [vmem:[#allocation5 + $0x10] sm:$0xff]
    %v88 = vld [vmem:[#allocation5 + $0x18] sm:$0xff]
    %v89 = vld [vmem:[#allocation5 + $0x20] sm:$0xff]
    %v90 = vld [vmem:[#allocation5 + $0x28] sm:$0xff]
    %v91 = vld [vmem:[#allocation5 + $0x30] sm:$0xff]
    %v92 = vld [vmem:[#allocation5 + $0x38] sm:$0xff]
    %v93 = vld [vmem:[#allocation8] sm:$0xff]
    %v94 = vld [vmem:[#allocation8 + $0x8] sm:$0xff]
    %v95 = vld [vmem:[#allocation8 + $0x10] sm:$0xff]
    %v96 = vld [vmem:[#allocation8 + $0x18] sm:$0xff]
    %v97 = vld [vmem:[#allocation8 + $0x20] sm:$0xff]
    %v98 = vld [vmem:[#allocation8 + $0x28] sm:$0xff]
    %v99 = vld [vmem:[#allocation8 + $0x30] sm:$0xff]
    %v100 = vld [vmem:[#allocation8 + $0x38] sm:$0xff]
    %v101 = vld [vmem:[#allocation8 + $0x40] sm:$0xff]
    %v102 = vld [vmem:[#allocation8 + $0x48] sm:$0xff]
    %v103 = vld [vmem:[#allocation8 + $0x50] sm:$0xff]
    %v104 = vld [vmem:[#allocation8 + $0x58] sm:$0xff]
    %v105 = vld [vmem:[#allocation8 + $0x60] sm:$0xff]
    %v106 = vld [vmem:[#allocation8 + $0x68] sm:$0xff]
    %v107 = vld [vmem:[#allocation8 + $0x70] sm:$0xff]
    %v108 = vld [vmem:[#allocation8 + $0x78] sm:$0xff]
    %v109 = vld [vmem:[#allocation8 + $0x80] sm:$0xff]
    %v110 = vld [vmem:[#allocation8 + $0x88] sm:$0xff]
    %v111 = vld [vmem:[#allocation8 + $0x90] sm:$0xff]
    %v112 = vld [vmem:[#allocation8 + $0x98] sm:$0xff]
    %v113 = vld [vmem:[#allocation8 + $0xa0] sm:$0xff]
    %v114 = vld [vmem:[#allocation8 + $0xa8] sm:$0xff]
    %v115 = vld [vmem:[#allocation8 + $0xb0] sm:$0xff]
    %v116 = vld [vmem:[#allocation8 + $0xb8] sm:$0xff]
    %v117 = vld [vmem:[#allocation8 + $0xc0] sm:$0xff]
    %v118 = vld [vmem:[#allocation8 + $0xc8] sm:$0xff]
    %v119 = vld [vmem:[#allocation8 + $0xd0] sm:$0xff]
    %v120 = vld [vmem:[#allocation8 + $0xd8] sm:$0xff]
    %v121 = vld [vmem:[#allocation8 + $0xe0] sm:$0xff]
    %v122 = vld [vmem:[#allocation8 + $0xe8] sm:$0xff]
    %v123 = vld [vmem:[#allocation8 + $0xf0] sm:$0xff]
    %v124 = vld [vmem:[#allocation8 + $0xf8] sm:$0xff]
    %v125 = vld [vmem:[#allocation8 + $0x100] sm:$0xff]
    %v126 = vld [vmem:[#allocation8 + $0x108] sm:$0xff]
    %v127 = vld [vmem:[#allocation8 + $0x110] sm:$0xff]
    %v128 = vld [vmem:[#allocation8 + $0x118] sm:$0xff]
    %v129 = vld [vmem:[#allocation8 + $0x120] sm:$0xff]
    %v130 = vld [vmem:[#allocation8 + $0x128] sm:$0xff]
    %v131 = vld [vmem:[#allocation8 + $0x130] sm:$0xff]
    %v132 = vld [vmem:[#allocation8 + $0x138] sm:$0xff]
    %v133 = vld [vmem:[#allocation8 + $0x140] sm:$0xff]
    %v134 = vld [vmem:[#allocation8 + $0x148] sm:$0xff]
    %v135 = vld [vmem:[#allocation8 + $0x150] sm:$0xff]
    %v136 = vld [vmem:[#allocation8 + $0x158] sm:$0xff]
    %v137 = vld [vmem:[#allocation8 + $0x160] sm:$0xff]
    %v138 = vld [vmem:[#allocation8 + $0x168] sm:$0xff]
    %v139 = vld [vmem:[#allocation8 + $0x170] sm:$0xff]
    %v140 = vld [vmem:[#allocation8 + $0x178] sm:$0xff]
    %v141 = vld [vmem:[#allocation8 + $0x180] sm:$0xff]
    %v142 = vld [vmem:[#allocation8 + $0x188] sm:$0xff]
    %v143 = vld [vmem:[#allocation8 + $0x190] sm:$0xff]
    %v144 = vld [vmem:[#allocation8 + $0x198] sm:$0xff]
    %v145 = vld [vmem:[#allocation8 + $0x1a0] sm:$0xff]
    %v146 = vld [vmem:[#allocation8 + $0x1a8] sm:$0xff]
    %v147 = vld [vmem:[#allocation8 + $0x1b0] sm:$0xff]
    %v148 = vld [vmem:[#allocation8 + $0x1b8] sm:$0xff]
    %v149 = vld [vmem:[#allocation8 + $0x1c0] sm:$0xff]
    %v150 = vld [vmem:[#allocation8 + $0x1c8] sm:$0xff]
    %v151 = vld [vmem:[#allocation8 + $0x1d0] sm:$0xff]
    %v152 = vld [vmem:[#allocation8 + $0x1d8] sm:$0xff]
    %v153 = vld [vmem:[#allocation8 + $0x1e0] sm:$0xff]
    %v154 = vld [vmem:[#allocation8 + $0x1e8] sm:$0xff]
    %v155 = vld [vmem:[#allocation8 + $0x1f0] sm:$0xff]
    %v156 = vld [vmem:[#allocation8 + $0x1f8] sm:$0xff]
    %157 = vmatprep.subr.mxu0 %v94
    %158 = vmatpush1.msra.mxu0 %v93
    %159 = vmatprep.subr.mxu0 %v98
    %160 = vmatpush1.msra.mxu0 %v97
    %161 = vmatprep.subr.mxu0 %v102
    %162 = vmatpush1.msra.mxu0 %v101
    %163 = vmatprep.subr.mxu0 %v106
    %164 = vmatpush1.msra.mxu0 %v105
    %165 = vmatprep.subr.mxu0 %v110
    %166 = vmatpush1.msra.mxu0 %v109
    %167 = vmatprep.subr.mxu0 %v114
    %168 = vmatpush1.msra.mxu0 %v113
    %169 = vmatprep.subr.mxu0 %v118
    %170 = vmatpush1.msra.mxu0 %v117
    %171 = vmatprep.subr.mxu0 %v122
    %172 = vmatpush1.msra.mxu0 %v121
    %173 = vmatprep.subr.mxu0 %v126
    %174 = vmatpush1.msra.mxu0 %v125
    %175 = vmatprep.subr.mxu0 %v130
    %176 = vmatpush1.msra.mxu0 %v129
    %177 = vmatprep.subr.mxu0 %v134
    %178 = vmatpush1.msra.mxu0 %v133
    %179 = vmatprep.subr.mxu0 %v138
    %180 = vmatpush1.msra.mxu0 %v137
    %181 = vmatprep.subr.mxu0 %v142
    %182 = vmatpush1.msra.mxu0 %v141
    %183 = vmatprep.subr.mxu0 %v146
    %184 = vmatpush1.msra.mxu0 %v145
    %185 = vmatprep.subr.mxu0 %v150
    %186 = vmatpush1.msra.mxu0 %v149
    %187 = vmatprep.subr.mxu0 %v154
    %188 = vmatpush1.msra.mxu0 %v153
    %189 = vmatprep.subr.mxu0 0.0
    %190 = vmatpush1.msra.mxu0 0.0
    %191 = vmatprep.subr.mxu0 0.0
    %192 = vmatpush1.msra.mxu0 0.0
    %193 = vmatprep.subr.mxu0 0.0
    %194 = vmatpush1.msra.mxu0 0.0
    %195 = vmatprep.subr.mxu0 0.0
    %196 = vmatpush1.msra.mxu0 0.0
    %197 = vmatprep.subr.mxu0 0.0
    %198 = vmatpush1.msra.mxu0 0.0
    %199 = vmatprep.subr.mxu0 0.0
    %200 = vmatpush1.msra.mxu0 0.0
    %201 = vmatprep.subr.mxu0 0.0
    %202 = vmatpush1.msra.mxu0 0.0
    %203 = vmatprep.subr.mxu0 0.0
    %204 = vmatpush1.msra.mxu0 0.0
    %205 = vmatprep.subr.mxu0 0.0
    %206 = vmatpush1.msra.mxu0 0.0
    %207 = vmatprep.subr.mxu0 0.0
    %208 = vmatpush1.msra.mxu0 0.0
    %209 = vmatprep.subr.mxu0 0.0
    %210 = vmatpush1.msra.mxu0 0.0
    %211 = vmatprep.subr.mxu0 0.0
    %212 = vmatpush1.msra.mxu0 0.0
    %213 = vmatprep.subr.mxu0 0.0
    %214 = vmatpush1.msra.mxu0 0.0
    %215 = vmatprep.subr.mxu0 0.0
    %216 = vmatpush1.msra.mxu0 0.0
    %217 = vmatprep.subr.mxu0 0.0
    %218 = vmatpush1.msra.mxu0 0.0
    %219 = vmatprep.subr.mxu0 0.0
    %220 = vmatpush1.msra.mxu0 0.0
    %221 = vmatprep.mubr.f32.mxu0 0.0
    %222 = vmatmul.mubr.f32.gmra.mrb[0].mxu0 %v85
    %v223 = vpop.f32.mrb[0].mxu0
    %v224 = vadd.f32 0.0, %v223
    %v225 = vpop.f32.mrb[0].mxu0
    %v226 = vadd.f32 0.0, %v225
    %227 = vmatprep.mubr.f32.mxu0 0.0
    %228 = vmatmul.mubr.f32.gmra.mrb[0].mxu0 %v86
    %v229 = vpop.f32.mrb[0].mxu0
    %v230 = vadd.f32 0.0, %v229
    %v231 = vpop.f32.mrb[0].mxu0
    %v232 = vadd.f32 0.0, %v231
    %233 = vmatprep.mubr.f32.mxu0 0.0
    %234 = vmatmul.mubr.f32.gmra.mrb[0].mxu0 %v87
    %v235 = vpop.f32.mrb[0].mxu0
    %v236 = vadd.f32 0.0, %v235
    %v237 = vpop.f32.mrb[0].mxu0
    %v238 = vadd.f32 0.0, %v237
    %239 = vmatprep.mubr.f32.mxu0 0.0
    %240 = vmatmul.mubr.f32.gmra.mrb[0].mxu0 %v88
    %v241 = vpop.f32.mrb[0].mxu0
    %v242 = vadd.f32 0.0, %v241
    %v243 = vpop.f32.mrb[0].mxu0
    %v244 = vadd.f32 0.0, %v243
    %245 = vmatprep.mubr.f32.mxu0 0.0
    %246 = vmatmul.mubr.f32.gmra.mrb[0].mxu0 %v89
    %v247 = vpop.f32.mrb[0].mxu0
    %v248 = vadd.f32 0.0, %v247
    %v249 = vpop.f32.mrb[0].mxu0
    %v250 = vadd.f32 0.0, %v249
    %251 = vmatprep.mubr.f32.mxu0 0.0
    %252 = vmatmul.mubr.f32.gmra.mrb[0].mxu0 %v90
    %v253 = vpop.f32.mrb[0].mxu0
    %v254 = vadd.f32 0.0, %v253
    %v255 = vpop.f32.mrb[0].mxu0
    %v256 = vadd.f32 0.0, %v255
    %257 = vmatprep.mubr.f32.mxu0 0.0
    %258 = vmatmul.mubr.f32.gmra.mrb[0].mxu0 %v91
    %v259 = vpop.f32.mrb[0].mxu0
    %v260 = vadd.f32 0.0, %v259
    %v261 = vpop.f32.mrb[0].mxu0
    %v262 = vadd.f32 0.0, %v261
    %263 = vmatprep.mubr.f32.mxu0 0.0
    %264 = vmatmul.mubr.f32.gmra.mrb[0].mxu0 %v92
    %v265 = vpop.f32.mrb[0].mxu0
    %v266 = vadd.f32 0.0, %v265
    %v267 = vpop.f32.mrb[0].mxu0
    %v268 = vadd.f32 0.0, %v267
    %269 = vdwg.mxu0
    %270 = vmatprep.subr.mxu0 %v96
    %271 = vmatpush1.msra.mxu0 %v95
    %272 = vmatprep.subr.mxu0 %v100
    %273 = vmatpush1.msra.mxu0 %v99
    %274 = vmatprep.subr.mxu0 %v104
    %275 = vmatpush1.msra.mxu0 %v103
    %276 = vmatprep.subr.mxu0 %v108
    %277 = vmatpush1.msra.mxu0 %v107
    %278 = vmatprep.subr.mxu0 %v112
    %279 = vmatpush1.msra.mxu0 %v111
    %280 = vmatprep.subr.mxu0 %v116
    %281 = vmatpush1.msra.mxu0 %v115
    %282 = vmatprep.subr.mxu0 %v120
    %283 = vmatpush1.msra.mxu0 %v119
    %284 = vmatprep.subr.mxu0 %v124
    %285 = vmatpush1.msra.mxu0 %v123
    %286 = vmatprep.subr.mxu0 %v128
    %287 = vmatpush1.msra.mxu0 %v127
    %288 = vmatprep.subr.mxu0 %v132
    %289 = vmatpush1.msra.mxu0 %v131
    %290 = vmatprep.subr.mxu0 %v136
    %291 = vmatpush1.msra.mxu0 %v135
    %292 = vmatprep.subr.mxu0 %v140
    %293 = vmatpush1.msra.mxu0 %v139
    %294 = vmatprep.subr.mxu0 %v144
    %295 = vmatpush1.msra.mxu0 %v143
    %296 = vmatprep.subr.mxu0 %v148
    %297 = vmatpush1.msra.mxu0 %v147
    %298 = vmatprep.subr.mxu0 %v152
    %299 = vmatpush1.msra.mxu0 %v151
    %300 = vmatprep.subr.mxu0 %v156
    %301 = vmatpush1.msra.mxu0 %v155
    %302 = vmatprep.subr.mxu0 0.0
    %303 = vmatpush1.msra.mxu0 0.0
    %304 = vmatprep.subr.mxu0 0.0
    %305 = vmatpush1.msra.mxu0 0.0
    %306 = vmatprep.subr.mxu0 0.0
    %307 = vmatpush1.msra.mxu0 0.0
    %308 = vmatprep.subr.mxu0 0.0
    %309 = vmatpush1.msra.mxu0 0.0
    %310 = vmatprep.subr.mxu0 0.0
    %311 = vmatpush1.msra.mxu0 0.0
    %312 = vmatprep.subr.mxu0 0.0
    %313 = vmatpush1.msra.mxu0 0.0
    %314 = vmatprep.subr.mxu0 0.0
    %315 = vmatpush1.msra.mxu0 0.0
    %316 = vmatprep.subr.mxu0 0.0
    %317 = vmatpush1.msra.mxu0 0.0
    %318 = vmatprep.subr.mxu0 0.0
    %319 = vmatpush1.msra.mxu0 0.0
    %320 = vmatprep.subr.mxu0 0.0
    %321 = vmatpush1.msra.mxu0 0.0
    %322 = vmatprep.subr.mxu0 0.0
    %323 = vmatpush1.msra.mxu0 0.0
    %324 = vmatprep.subr.mxu0 0.0
    %325 = vmatpush1.msra.mxu0 0.0
    %326 = vmatprep.subr.mxu0 0.0
    %327 = vmatpush1.msra.mxu0 0.0
    %328 = vmatprep.subr.mxu0 0.0
    %329 = vmatpush1.msra.mxu0 0.0
    %330 = vmatprep.subr.mxu0 0.0
    %331 = vmatpush1.msra.mxu0 0.0
    %332 = vmatprep.subr.mxu0 0.0
    %333 = vmatpush1.msra.mxu0 0.0
    %334 = vmatprep.mubr.f32.mxu0 0.0
    %335 = vmatmul.mubr.f32.gmra.mrb[0].mxu0 %v85
    %v336 = vpop.f32.mrb[0].mxu0
    %v337 = vadd.f32 0.0, %v336
    %v338 = vpop.f32.mrb[0].mxu0
    %v339 = vadd.f32 0.0, %v338
    %340 = vmatprep.mubr.f32.mxu0 0.0
    %341 = vmatmul.mubr.f32.gmra.mrb[0].mxu0 %v86
    %v342 = vpop.f32.mrb[0].mxu0
    %v343 = vadd.f32 0.0, %v342
    %v344 = vpop.f32.mrb[0].mxu0
    %v345 = vadd.f32 0.0, %v344
    %346 = vmatprep.mubr.f32.mxu0 0.0
    %347 = vmatmul.mubr.f32.gmra.mrb[0].mxu0 %v87
    %v348 = vpop.f32.mrb[0].mxu0
    %v349 = vadd.f32 0.0, %v348
    %v350 = vpop.f32.mrb[0].mxu0
    %v351 = vadd.f32 0.0, %v350
    %352 = vmatprep.mubr.f32.mxu0 0.0
    %353 = vmatmul.mubr.f32.gmra.mrb[0].mxu0 %v88
    %v354 = vpop.f32.mrb[0].mxu0
    %v355 = vadd.f32 0.0, %v354
    %v356 = vpop.f32.mrb[0].mxu0
    %v357 = vadd.f32 0.0, %v356
    %358 = vmatprep.mubr.f32.mxu0 0.0
    %359 = vmatmul.mubr.f32.gmra.mrb[0].mxu0 %v89
    %v360 = vpop.f32.mrb[0].mxu0
    %v361 = vadd.f32 0.0, %v360
    %v362 = vpop.f32.mrb[0].mxu0
    %v363 = vadd.f32 0.0, %v362
    %364 = vmatprep.mubr.f32.mxu0 0.0
    %365 = vmatmul.mubr.f32.gmra.mrb[0].mxu0 %v90
    %v366 = vpop.f32.mrb[0].mxu0
    %v367 = vadd.f32 0.0, %v366
    %v368 = vpop.f32.mrb[0].mxu0
    %v369 = vadd.f32 0.0, %v368
    %370 = vmatprep.mubr.f32.mxu0 0.0
    %371 = vmatmul.mubr.f32.gmra.mrb[0].mxu0 %v91
    %v372 = vpop.f32.mrb[0].mxu0
    %v373 = vadd.f32 0.0, %v372
    %v374 = vpop.f32.mrb[0].mxu0
    %v375 = vadd.f32 0.0, %v374
    %376 = vmatprep.mubr.f32.mxu0 0.0
    %377 = vmatmul.mubr.f32.gmra.mrb[0].mxu0 %v92
    %v378 = vpop.f32.mrb[0].mxu0
    %v379 = vadd.f32 0.0, %v378
    %v380 = vpop.f32.mrb[0].mxu0
    %v381 = vadd.f32 0.0, %v380
    %382 = vdwg.mxu0
    %v383 = vld [vmem:[%s3] sm:$0xf]
    %v385 = vlaneseq
    %v386 = vshrl.u32 %v385, 7
    %v387 = vsub.s32 0, %v386
    %v388 = vrot.slane %v383, %v387
    %v389 = vlaneseq
    %v390 = vshrl.u32 %v389, 7
    %v391 = vsub.s32 1, %v390
    %v392 = vrot.slane %v383, %v391
    %v393 = vlaneseq
    %v394 = vshrl.u32 %v393, 7
    %v395 = vsub.s32 2, %v394
    %v396 = vrot.slane %v383, %v395
    %v397 = vlaneseq
    %v398 = vshrl.u32 %v397, 7
    %v399 = vsub.s32 3, %v398
    %v400 = vrot.slane %v383, %v399
    %v405 = vadd.f32 %v224, %v388
    %v406 = vadd.f32 %v226, %v392
    %v407 = vadd.f32 %v337, %v396
    %v408 = vadd.f32 %v339, %v400
    %v409 = vadd.f32 %v230, %v388
    %v410 = vadd.f32 %v232, %v392
    %v411 = vadd.f32 %v343, %v396
    %v412 = vadd.f32 %v345, %v400
    %v413 = vadd.f32 %v236, %v388
    %v414 = vadd.f32 %v238, %v392
    %v415 = vadd.f32 %v349, %v396
    %v416 = vadd.f32 %v351, %v400
    %v417 = vadd.f32 %v242, %v388
    %v418 = vadd.f32 %v244, %v392
    %v419 = vadd.f32 %v355, %v396
    %v420 = vadd.f32 %v357, %v400
    %v421 = vadd.f32 %v248, %v388
    %v422 = vadd.f32 %v250, %v392
    %v423 = vadd.f32 %v361, %v396
    %v424 = vadd.f32 %v363, %v400
    %v425 = vadd.f32 %v254, %v388
    %v426 = vadd.f32 %v256, %v392
    %v427 = vadd.f32 %v367, %v396
    %v428 = vadd.f32 %v369, %v400
    %v429 = vadd.f32 %v260, %v388
    %v430 = vadd.f32 %v262, %v392
    %v431 = vadd.f32 %v373, %v396
    %v432 = vadd.f32 %v375, %v400
    %v433 = vadd.f32 %v266, %v388
    %v434 = vadd.f32 %v268, %v392
    %v435 = vadd.f32 %v379, %v396
    %v436 = vadd.f32 %v381, %v400
    %437 = vst [vmem:[#allocation2] sm:$0xff] %v405
    %438 = vst [vmem:[#allocation2 + $0x8] sm:$0xff] %v406
    %439 = vst [vmem:[#allocation2 + $0x10] sm:$0xff] %v407
    %440 = vst [vmem:[#allocation2 + $0x18] sm:$0xff] %v408
    %441 = vst [vmem:[#allocation2 + $0x20] sm:$0xff] %v409
    %442 = vst [vmem:[#allocation2 + $0x28] sm:$0xff] %v410
    %443 = vst [vmem:[#allocation2 + $0x30] sm:$0xff] %v411
    %444 = vst [vmem:[#allocation2 + $0x38] sm:$0xff] %v412
    %445 = vst [vmem:[#allocation2 + $0x40] sm:$0xff] %v413
    %446 = vst [vmem:[#allocation2 + $0x48] sm:$0xff] %v414
    %447 = vst [vmem:[#allocation2 + $0x50] sm:$0xff] %v415
    %448 = vst [vmem:[#allocation2 + $0x58] sm:$0xff] %v416
    %449 = vst [vmem:[#allocation2 + $0x60] sm:$0xff] %v417
    %450 = vst [vmem:[#allocation2 + $0x68] sm:$0xff] %v418
    %451 = vst [vmem:[#allocation2 + $0x70] sm:$0xff] %v419
    %452 = vst [vmem:[#allocation2 + $0x78] sm:$0xff] %v420
    %453 = vst [vmem:[#allocation2 + $0x80] sm:$0xff] %v421
    %454 = vst [vmem:[#allocation2 + $0x88] sm:$0xff] %v422
    %455 = vst [vmem:[#allocation2 + $0x90] sm:$0xff] %v423
    %456 = vst [vmem:[#allocation2 + $0x98] sm:$0xff] %v424
    %457 = vst [vmem:[#allocation2 + $0xa0] sm:$0xff] %v425
    %458 = vst [vmem:[#allocation2 + $0xa8] sm:$0xff] %v426
    %459 = vst [vmem:[#allocation2 + $0xb0] sm:$0xff] %v427
    %460 = vst [vmem:[#allocation2 + $0xb8] sm:$0xff] %v428
    %461 = vst [vmem:[#allocation2 + $0xc0] sm:$0xff] %v429
    %462 = vst [vmem:[#allocation2 + $0xc8] sm:$0xff] %v430
    %463 = vst [vmem:[#allocation2 + $0xd0] sm:$0xff] %v431
    %464 = vst [vmem:[#allocation2 + $0xd8] sm:$0xff] %v432
    %465 = vst [vmem:[#allocation2 + $0xe0] sm:$0xff] %v433
    %466 = vst [vmem:[#allocation2 + $0xe8] sm:$0xff] %v434
    %467 = vst [vmem:[#allocation2 + $0xf0] sm:$0xff] %v435
    %468 = vst [vmem:[#allocation2 + $0xf8] sm:$0xff] %v436
    %v469 = vld [vmem:[#allocation10] sm:$0xff]
    %v470 = vld [vmem:[#allocation10 + $0x8] sm:$0xff]
    %v471 = vld [vmem:[#allocation10 + $0x10] sm:$0xff]
    %v472 = vld [vmem:[#allocation10 + $0x18] sm:$0xff]
    %v473 = vld [vmem:[#allocation10 + $0x20] sm:$0xff]
    %v474 = vld [vmem:[#allocation10 + $0x28] sm:$0xff]
    %v475 = vld [vmem:[#allocation10 + $0x30] sm:$0xff]
    %v476 = vld [vmem:[#allocation10 + $0x38] sm:$0xff]
    %v477 = vld [vmem:[#allocation10 + $0x40] sm:$0xff]
    %v478 = vld [vmem:[#allocation10 + $0x48] sm:$0xff]
    %v479 = vld [vmem:[#allocation10 + $0x50] sm:$0xff]
    %v480 = vld [vmem:[#allocation10 + $0x58] sm:$0xff]
    %v481 = vld [vmem:[#allocation10 + $0x60] sm:$0xff]
    %v482 = vld [vmem:[#allocation10 + $0x68] sm:$0xff]
    %v483 = vld [vmem:[#allocation10 + $0x70] sm:$0xff]
    %v484 = vld [vmem:[#allocation10 + $0x78] sm:$0xff]
    %v485 = vld [vmem:[#allocation10 + $0x80] sm:$0xff]
    %v486 = vld [vmem:[#allocation10 + $0x88] sm:$0xff]
    %v487 = vld [vmem:[#allocation10 + $0x90] sm:$0xff]
    %v488 = vld [vmem:[#allocation10 + $0x98] sm:$0xff]
    %v489 = vld [vmem:[#allocation10 + $0xa0] sm:$0xff]
    %v490 = vld [vmem:[#allocation10 + $0xa8] sm:$0xff]
    %v491 = vld [vmem:[#allocation10 + $0xb0] sm:$0xff]
    %v492 = vld [vmem:[#allocation10 + $0xb8] sm:$0xff]
    %v493 = vld [vmem:[#allocation10 + $0xc0] sm:$0xff]
    %v494 = vld [vmem:[#allocation10 + $0xc8] sm:$0xff]
    %v495 = vld [vmem:[#allocation10 + $0xd0] sm:$0xff]
    %v496 = vld [vmem:[#allocation10 + $0xd8] sm:$0xff]
    %v497 = vld [vmem:[#allocation10 + $0xe0] sm:$0xff]
    %v498 = vld [vmem:[#allocation10 + $0xe8] sm:$0xff]
    %v499 = vld [vmem:[#allocation10 + $0xf0] sm:$0xff]
    %v500 = vld [vmem:[#allocation10 + $0xf8] sm:$0xff]
    %v501 = vld [vmem:[#allocation10 + $0x100] sm:$0xff]
    %v502 = vld [vmem:[#allocation10 + $0x108] sm:$0xff]
    %v503 = vld [vmem:[#allocation10 + $0x110] sm:$0xff]
    %v504 = vld [vmem:[#allocation10 + $0x118] sm:$0xff]
    %v505 = vld [vmem:[#allocation10 + $0x120] sm:$0xff]
    %v506 = vld [vmem:[#allocation10 + $0x128] sm:$0xff]
    %v507 = vld [vmem:[#allocation10 + $0x130] sm:$0xff]
    %v508 = vld [vmem:[#allocation10 + $0x138] sm:$0xff]
    %v509 = vld [vmem:[#allocation10 + $0x140] sm:$0xff]
    %v510 = vld [vmem:[#allocation10 + $0x148] sm:$0xff]
    %v511 = vld [vmem:[#allocation10 + $0x150] sm:$0xff]
    %v512 = vld [vmem:[#allocation10 + $0x158] sm:$0xff]
    %v513 = vld [vmem:[#allocation10 + $0x160] sm:$0xff]
    %v514 = vld [vmem:[#allocation10 + $0x168] sm:$0xff]
    %v515 = vld [vmem:[#allocation10 + $0x170] sm:$0xff]
    %v516 = vld [vmem:[#allocation10 + $0x178] sm:$0xff]
    %v517 = vld [vmem:[#allocation10 + $0x180] sm:$0xff]
    %v518 = vld [vmem:[#allocation10 + $0x188] sm:$0xff]
    %v519 = vld [vmem:[#allocation10 + $0x190] sm:$0xff]
    %v520 = vld [vmem:[#allocation10 + $0x198] sm:$0xff]
    %v521 = vld [vmem:[#allocation10 + $0x1a0] sm:$0xff]
    %v522 = vld [vmem:[#allocation10 + $0x1a8] sm:$0xff]
    %v523 = vld [vmem:[#allocation10 + $0x1b0] sm:$0xff]
    %v524 = vld [vmem:[#allocation10 + $0x1b8] sm:$0xff]
    %v525 = vld [vmem:[#allocation10 + $0x1c0] sm:$0xff]
    %v526 = vld [vmem:[#allocation10 + $0x1c8] sm:$0xff]
    %v527 = vld [vmem:[#allocation10 + $0x1d0] sm:$0xff]
    %v528 = vld [vmem:[#allocation10 + $0x1d8] sm:$0xff]
    %v529 = vld [vmem:[#allocation10 + $0x1e0] sm:$0xff]
    %v530 = vld [vmem:[#allocation10 + $0x1e8] sm:$0xff]
    %v531 = vld [vmem:[#allocation10 + $0x1f0] sm:$0xff]
    %v532 = vld [vmem:[#allocation10 + $0x1f8] sm:$0xff]
    loop: start=0, step=1, limit=2
    $region46: #{tpu_custom_call.1} parent=1 // loop_pre_header
      _
    $region47: #{tpu_custom_call.1} parent=1 // loop_header
      %s534 = sphi 0, %s538
      %p535 = scmp.ge.s32.totalorder %s534, 2
    $region48: #{tpu_custom_call.1} parent=1 // loop_header_branch
      %537 = sbr.rel (%p535) target = $region52
    $region49: #{tpu_custom_call.1} parent=1 // loop_body
      %s539 = smul.u32 %s534, 4
      %s540 = smul.u32 %s539, 4
      %s541 = smul.addr %s540, 8
      %s542 = scalar_lea.vmem [#allocation2], %s541
      %v543 = vld [vmem:[%s542] sm:$0xff]
      %v544 = vld [vmem:[%s542 + $0x8] sm:$0xff]
      %v545 = vld [vmem:[%s542 + $0x10] sm:$0xff]
      %v546 = vld [vmem:[%s542 + $0x18] sm:$0xff]
      %v547 = vld [vmem:[#allocation3] sm:$0xff]
      %548 = vmatprep.subr.mxu0 %v470
      %549 = vmatpush1.msra.mxu0 %v469
      %550 = vmatprep.subr.mxu0 %v474
      %551 = vmatpush1.msra.mxu0 %v473
      %552 = vmatprep.subr.mxu0 %v478
      %553 = vmatpush1.msra.mxu0 %v477
      %554 = vmatprep.subr.mxu0 %v482
      %555 = vmatpush1.msra.mxu0 %v481
      %556 = vmatprep.subr.mxu0 %v486
      %557 = vmatpush1.msra.mxu0 %v485
      %558 = vmatprep.subr.mxu0 %v490
      %559 = vmatpush1.msra.mxu0 %v489
      %560 = vmatprep.subr.mxu0 %v494
      %561 = vmatpush1.msra.mxu0 %v493
      %562 = vmatprep.subr.mxu0 %v498
      %563 = vmatpush1.msra.mxu0 %v497
      %564 = vmatprep.subr.mxu0 %v502
      %565 = vmatpush1.msra.mxu0 %v501
      %566 = vmatprep.subr.mxu0 %v506
      %567 = vmatpush1.msra.mxu0 %v505
      %568 = vmatprep.subr.mxu0 %v510
      %569 = vmatpush1.msra.mxu0 %v509
      %570 = vmatprep.subr.mxu0 %v514
      %571 = vmatpush1.msra.mxu0 %v513
      %572 = vmatprep.subr.mxu0 %v518
      %573 = vmatpush1.msra.mxu0 %v517
      %574 = vmatprep.subr.mxu0 %v522
      %575 = vmatpush1.msra.mxu0 %v521
      %576 = vmatprep.subr.mxu0 %v526
      %577 = vmatpush1.msra.mxu0 %v525
      %578 = vmatprep.subr.mxu0 %v530
      %579 = vmatpush1.msra.mxu0 %v529
      %580 = vmatprep.subr.mxu0 0.0
      %581 = vmatpush1.msra.mxu0 0.0
      %582 = vmatprep.subr.mxu0 0.0
      %583 = vmatpush1.msra.mxu0 0.0
      %584 = vmatprep.subr.mxu0 0.0
      %585 = vmatpush1.msra.mxu0 0.0
      %586 = vmatprep.subr.mxu0 0.0
      %587 = vmatpush1.msra.mxu0 0.0
      %588 = vmatprep.subr.mxu0 0.0
      %589 = vmatpush1.msra.mxu0 0.0
      %590 = vmatprep.subr.mxu0 0.0
      %591 = vmatpush1.msra.mxu0 0.0
      %592 = vmatprep.subr.mxu0 0.0
      %593 = vmatpush1.msra.mxu0 0.0
      %594 = vmatprep.subr.mxu0 0.0
      %595 = vmatpush1.msra.mxu0 0.0
      %596 = vmatprep.subr.mxu0 0.0
      %597 = vmatpush1.msra.mxu0 0.0
      %598 = vmatprep.subr.mxu0 0.0
      %599 = vmatpush1.msra.mxu0 0.0
      %600 = vmatprep.subr.mxu0 0.0
      %601 = vmatpush1.msra.mxu0 0.0
      %602 = vmatprep.subr.mxu0 0.0
      %603 = vmatpush1.msra.mxu0 0.0
      %604 = vmatprep.subr.mxu0 0.0
      %605 = vmatpush1.msra.mxu0 0.0
      %606 = vmatprep.subr.mxu0 0.0
      %607 = vmatpush1.msra.mxu0 0.0
      %608 = vmatprep.subr.mxu0 0.0
      %609 = vmatpush1.msra.mxu0 0.0
      %610 = vmatprep.subr.mxu0 0.0
      %611 = vmatpush1.msra.mxu0 0.0
      %612 = vmatprep.mubr.f32.mxu0 0.0
      %613 = vmatmul.mubr.f32.gmra.mrb[0].mxu0 %v547
      %v614 = vpop.f32.mrb[0].mxu0
      %v615 = vadd.f32 0.0, %v614
      %v616 = vpop.f32.mrb[0].mxu0
      %v617 = vadd.f32 0.0, %v616
      %618 = vdwg.mxu0
      %619 = vmatprep.subr.mxu0 %v472
      %620 = vmatpush1.msra.mxu0 %v471
      %621 = vmatprep.subr.mxu0 %v476
      %622 = vmatpush1.msra.mxu0 %v475
      %623 = vmatprep.subr.mxu0 %v480
      %624 = vmatpush1.msra.mxu0 %v479
      %625 = vmatprep.subr.mxu0 %v484
      %626 = vmatpush1.msra.mxu0 %v483
      %627 = vmatprep.subr.mxu0 %v488
      %628 = vmatpush1.msra.mxu0 %v487
      %629 = vmatprep.subr.mxu0 %v492
      %630 = vmatpush1.msra.mxu0 %v491
      %631 = vmatprep.subr.mxu0 %v496
      %632 = vmatpush1.msra.mxu0 %v495
      %633 = vmatprep.subr.mxu0 %v500
      %634 = vmatpush1.msra.mxu0 %v499
      %635 = vmatprep.subr.mxu0 %v504
      %636 = vmatpush1.msra.mxu0 %v503
      %637 = vmatprep.subr.mxu0 %v508
      %638 = vmatpush1.msra.mxu0 %v507
      %639 = vmatprep.subr.mxu0 %v512
      %640 = vmatpush1.msra.mxu0 %v511
      %641 = vmatprep.subr.mxu0 %v516
      %642 = vmatpush1.msra.mxu0 %v515
      %643 = vmatprep.subr.mxu0 %v520
      %644 = vmatpush1.msra.mxu0 %v519
      %645 = vmatprep.subr.mxu0 %v524
      %646 = vmatpush1.msra.mxu0 %v523
      %647 = vmatprep.subr.mxu0 %v528
      %648 = vmatpush1.msra.mxu0 %v527
      %649 = vmatprep.subr.mxu0 %v532
      %650 = vmatpush1.msra.mxu0 %v531
      %651 = vmatprep.subr.mxu0 0.0
      %652 = vmatpush1.msra.mxu0 0.0
      %653 = vmatprep.subr.mxu0 0.0
      %654 = vmatpush1.msra.mxu0 0.0
      %655 = vmatprep.subr.mxu0 0.0
      %656 = vmatpush1.msra.mxu0 0.0
      %657 = vmatprep.subr.mxu0 0.0
      %658 = vmatpush1.msra.mxu0 0.0
      %659 = vmatprep.subr.mxu0 0.0
      %660 = vmatpush1.msra.mxu0 0.0
      %661 = vmatprep.subr.mxu0 0.0
      %662 = vmatpush1.msra.mxu0 0.0
      %663 = vmatprep.subr.mxu0 0.0
      %664 = vmatpush1.msra.mxu0 0.0
      %665 = vmatprep.subr.mxu0 0.0
      %666 = vmatpush1.msra.mxu0 0.0
      %667 = vmatprep.subr.mxu0 0.0
      %668 = vmatpush1.msra.mxu0 0.0
      %669 = vmatprep.subr.mxu0 0.0
      %670 = vmatpush1.msra.mxu0 0.0
      %671 = vmatprep.subr.mxu0 0.0
      %672 = vmatpush1.msra.mxu0 0.0
      %673 = vmatprep.subr.mxu0 0.0
      %674 = vmatpush1.msra.mxu0 0.0
      %675 = vmatprep.subr.mxu0 0.0
      %676 = vmatpush1.msra.mxu0 0.0
      %677 = vmatprep.subr.mxu0 0.0
      %678 = vmatpush1.msra.mxu0 0.0
      %679 = vmatprep.subr.mxu0 0.0
      %680 = vmatpush1.msra.mxu0 0.0
      %681 = vmatprep.subr.mxu0 0.0
      %682 = vmatpush1.msra.mxu0 0.0
      %683 = vmatprep.mubr.f32.mxu0 0.0
      %684 = vmatmul.mubr.f32.gmra.mrb[0].mxu0 %v547
      %v685 = vpop.f32.mrb[0].mxu0
      %v686 = vadd.f32 0.0, %v685
      %v687 = vpop.f32.mrb[0].mxu0
      %v688 = vadd.f32 0.0, %v687
      %689 = vdwg.mxu0
      %v690 = vadd.f32 %v543, %v615
      %v691 = vadd.f32 %v544, %v617
      %v692 = vadd.f32 %v545, %v686
      %v693 = vadd.f32 %v546, %v688
      %v694 = vxor.u32 %v690, 2147483648
      %v695 = vxor.u32 %v691, 2147483648
      %v696 = vxor.u32 %v692, 2147483648
      %v697 = vmul.f32 %v694, 1.442695
      %v698 = vpow.pop %v697
      %v699 = vmul.f32 %v695, 1.442695
      %v700 = vpow.pop %v699
      %v701 = vmul.f32 %v696, 1.442695
      %v702 = vpow.pop %v701
      %v703 = vadd.f32 %v698, 1.0
      %v704 = vadd.f32 %v700, 1.0
      %v705 = vadd.f32 %v702, 1.0
      %v706 = vrcp.pop %v703
      %v707 = vmul.f32 1.0, %v706
      %v708 = vrcp.pop %v704
      %v709 = vmul.f32 1.0, %v708
      %v710 = vrcp.pop %v705
      %v711 = vmul.f32 1.0, %v710
      %v712 = vtanh.pop %v693
      %v713 = vld [vmem:[#allocation4] sm:$0xff]
      %v714 = vmul.f32 %v709, %v713
      %v715 = vmul.f32 %v707, %v712
      %v716 = vadd.f32 %v714, %v715
      %v717 = vtanh.pop %v716
      %v718 = vmul.f32 %v711, %v717
      %719 = vst [vmem:[#allocation4] sm:$0xff] %v716
      %720 = vst [vmem:[#allocation3] sm:$0xff] %v718
      %s721 = sadd.s32 %s539, 1
      %s722 = smul.u32 %s721, 4
      %s723 = smul.addr %s722, 8
      %s724 = scalar_lea.vmem [#allocation2], %s723
      %v725 = vld [vmem:[%s724] sm:$0xff]
      %v726 = vld [vmem:[%s724 + $0x8] sm:$0xff]
      %v727 = vld [vmem:[%s724 + $0x10] sm:$0xff]
      %v728 = vld [vmem:[%s724 + $0x18] sm:$0xff]
      %v729 = vld [vmem:[#allocation3] sm:$0xff]
      %730 = vmatprep.subr.mxu0 %v470
      %731 = vmatpush1.msra.mxu0 %v469
      %732 = vmatprep.subr.mxu0 %v474
      %733 = vmatpush1.msra.mxu0 %v473
      %734 = vmatprep.subr.mxu0 %v478
      %735 = vmatpush1.msra.mxu0 %v477
      %736 = vmatprep.subr.mxu0 %v482
      %737 = vmatpush1.msra.mxu0 %v481
      %738 = vmatprep.subr.mxu0 %v486
      %739 = vmatpush1.msra.mxu0 %v485
      %740 = vmatprep.subr.mxu0 %v490
      %741 = vmatpush1.msra.mxu0 %v489
      %742 = vmatprep.subr.mxu0 %v494
      %743 = vmatpush1.msra.mxu0 %v493
      %744 = vmatprep.subr.mxu0 %v498
      %745 = vmatpush1.msra.mxu0 %v497
      %746 = vmatprep.subr.mxu0 %v502
      %747 = vmatpush1.msra.mxu0 %v501
      %748 = vmatprep.subr.mxu0 %v506
      %749 = vmatpush1.msra.mxu0 %v505
      %750 = vmatprep.subr.mxu0 %v510
      %751 = vmatpush1.msra.mxu0 %v509
      %752 = vmatprep.subr.mxu0 %v514
      %753 = vmatpush1.msra.mxu0 %v513
      %754 = vmatprep.subr.mxu0 %v518
      %755 = vmatpush1.msra.mxu0 %v517
      %756 = vmatprep.subr.mxu0 %v522
      %757 = vmatpush1.msra.mxu0 %v521
      %758 = vmatprep.subr.mxu0 %v526
      %759 = vmatpush1.msra.mxu0 %v525
      %760 = vmatprep.subr.mxu0 %v530
      %761 = vmatpush1.msra.mxu0 %v529
      %762 = vmatprep.subr.mxu0 0.0
      %763 = vmatpush1.msra.mxu0 0.0
      %764 = vmatprep.subr.mxu0 0.0
      %765 = vmatpush1.msra.mxu0 0.0
      %766 = vmatprep.subr.mxu0 0.0
      %767 = vmatpush1.msra.mxu0 0.0
      %768 = vmatprep.subr.mxu0 0.0
      %769 = vmatpush1.msra.mxu0 0.0
      %770 = vmatprep.subr.mxu0 0.0
      %771 = vmatpush1.msra.mxu0 0.0
      %772 = vmatprep.subr.mxu0 0.0
      %773 = vmatpush1.msra.mxu0 0.0
      %774 = vmatprep.subr.mxu0 0.0
      %775 = vmatpush1.msra.mxu0 0.0
      %776 = vmatprep.subr.mxu0 0.0
      %777 = vmatpush1.msra.mxu0 0.0
      %778 = vmatprep.subr.mxu0 0.0
      %779 = vmatpush1.msra.mxu0 0.0
      %780 = vmatprep.subr.mxu0 0.0
      %781 = vmatpush1.msra.mxu0 0.0
      %782 = vmatprep.subr.mxu0 0.0
      %783 = vmatpush1.msra.mxu0 0.0
      %784 = vmatprep.subr.mxu0 0.0
      %785 = vmatpush1.msra.mxu0 0.0
      %786 = vmatprep.subr.mxu0 0.0
      %787 = vmatpush1.msra.mxu0 0.0
      %788 = vmatprep.subr.mxu0 0.0
      %789 = vmatpush1.msra.mxu0 0.0
      %790 = vmatprep.subr.mxu0 0.0
      %791 = vmatpush1.msra.mxu0 0.0
      %792 = vmatprep.subr.mxu0 0.0
      %793 = vmatpush1.msra.mxu0 0.0
      %794 = vmatprep.mubr.f32.mxu0 0.0
      %795 = vmatmul.mubr.f32.gmra.mrb[0].mxu0 %v729
      %v796 = vpop.f32.mrb[0].mxu0
      %v797 = vadd.f32 0.0, %v796
      %v798 = vpop.f32.mrb[0].mxu0
      %v799 = vadd.f32 0.0, %v798
      %800 = vdwg.mxu0
      %801 = vmatprep.subr.mxu0 %v472
      %802 = vmatpush1.msra.mxu0 %v471
      %803 = vmatprep.subr.mxu0 %v476
      %804 = vmatpush1.msra.mxu0 %v475
      %805 = vmatprep.subr.mxu0 %v480
      %806 = vmatpush1.msra.mxu0 %v479
      %807 = vmatprep.subr.mxu0 %v484
      %808 = vmatpush1.msra.mxu0 %v483
      %809 = vmatprep.subr.mxu0 %v488
      %810 = vmatpush1.msra.mxu0 %v487
      %811 = vmatprep.subr.mxu0 %v492
      %812 = vmatpush1.msra.mxu0 %v491
      %813 = vmatprep.subr.mxu0 %v496
      %814 = vmatpush1.msra.mxu0 %v495
      %815 = vmatprep.subr.mxu0 %v500
      %816 = vmatpush1.msra.mxu0 %v499
      %817 = vmatprep.subr.mxu0 %v504
      %818 = vmatpush1.msra.mxu0 %v503
      %819 = vmatprep.subr.mxu0 %v508
      %820 = vmatpush1.msra.mxu0 %v507
      %821 = vmatprep.subr.mxu0 %v512
      %822 = vmatpush1.msra.mxu0 %v511
      %823 = vmatprep.subr.mxu0 %v516
      %824 = vmatpush1.msra.mxu0 %v515
      %825 = vmatprep.subr.mxu0 %v520
      %826 = vmatpush1.msra.mxu0 %v519
      %827 = vmatprep.subr.mxu0 %v524
      %828 = vmatpush1.msra.mxu0 %v523
      %829 = vmatprep.subr.mxu0 %v528
      %830 = vmatpush1.msra.mxu0 %v527
      %831 = vmatprep.subr.mxu0 %v532
      %832 = vmatpush1.msra.mxu0 %v531
      %833 = vmatprep.subr.mxu0 0.0
      %834 = vmatpush1.msra.mxu0 0.0
      %835 = vmatprep.subr.mxu0 0.0
      %836 = vmatpush1.msra.mxu0 0.0
      %837 = vmatprep.subr.mxu0 0.0
      %838 = vmatpush1.msra.mxu0 0.0
      %839 = vmatprep.subr.mxu0 0.0
      %840 = vmatpush1.msra.mxu0 0.0
      %841 = vmatprep.subr.mxu0 0.0
      %842 = vmatpush1.msra.mxu0 0.0
      %843 = vmatprep.subr.mxu0 0.0
      %844 = vmatpush1.msra.mxu0 0.0
      %845 = vmatprep.subr.mxu0 0.0
      %846 = vmatpush1.msra.mxu0 0.0
      %847 = vmatprep.subr.mxu0 0.0
      %848 = vmatpush1.msra.mxu0 0.0
      %849 = vmatprep.subr.mxu0 0.0
      %850 = vmatpush1.msra.mxu0 0.0
      %851 = vmatprep.subr.mxu0 0.0
      %852 = vmatpush1.msra.mxu0 0.0
      %853 = vmatprep.subr.mxu0 0.0
      %854 = vmatpush1.msra.mxu0 0.0
      %855 = vmatprep.subr.mxu0 0.0
      %856 = vmatpush1.msra.mxu0 0.0
      %857 = vmatprep.subr.mxu0 0.0
      %858 = vmatpush1.msra.mxu0 0.0
      %859 = vmatprep.subr.mxu0 0.0
      %860 = vmatpush1.msra.mxu0 0.0
      %861 = vmatprep.subr.mxu0 0.0
      %862 = vmatpush1.msra.mxu0 0.0
      %863 = vmatprep.subr.mxu0 0.0
      %864 = vmatpush1.msra.mxu0 0.0
      %865 = vmatprep.mubr.f32.mxu0 0.0
      %866 = vmatmul.mubr.f32.gmra.mrb[0].mxu0 %v729
      %v867 = vpop.f32.mrb[0].mxu0
      %v868 = vadd.f32 0.0, %v867
      %v869 = vpop.f32.mrb[0].mxu0
      %v870 = vadd.f32 0.0, %v869
      %871 = vdwg.mxu0
      %v872 = vadd.f32 %v725, %v797
      %v873 = vadd.f32 %v726, %v799
      %v874 = vadd.f32 %v727, %v868
      %v875 = vadd.f32 %v728, %v870
      %v876 = vxor.u32 %v872, 2147483648
      %v877 = vxor.u32 %v873, 2147483648
      %v878 = vxor.u32 %v874, 2147483648
      %v879 = vmul.f32 %v876, 1.442695
      %v880 = vpow.pop %v879
      %v881 = vmul.f32 %v877, 1.442695
      %v882 = vpow.pop %v881
      %v883 = vmul.f32 %v878, 1.442695
      %v884 = vpow.pop %v883
      %v885 = vadd.f32 %v880, 1.0
      %v886 = vadd.f32 %v882, 1.0
      %v887 = vadd.f32 %v884, 1.0
      %v888 = vrcp.pop %v885
      %v889 = vmul.f32 1.0, %v888
      %v890 = vrcp.pop %v886
      %v891 = vmul.f32 1.0, %v890
      %v892 = vrcp.pop %v887
      %v893 = vmul.f32 1.0, %v892
      %v894 = vtanh.pop %v875
      %v895 = vld [vmem:[#allocation4] sm:$0xff]
      %v896 = vmul.f32 %v891, %v895
      %v897 = vmul.f32 %v889, %v894
      %v898 = vadd.f32 %v896, %v897
      %v899 = vtanh.pop %v898
      %v900 = vmul.f32 %v893, %v899
      %901 = vst [vmem:[#allocation4] sm:$0xff] %v898
      %902 = vst [vmem:[#allocation3] sm:$0xff] %v900
      %s903 = sadd.s32 %s539, 2
      %s904 = smul.u32 %s903, 4
      %s905 = smul.addr %s904, 8
      %s906 = scalar_lea.vmem [#allocation2], %s905
      %v907 = vld [vmem:[%s906] sm:$0xff]
      %v908 = vld [vmem:[%s906 + $0x8] sm:$0xff]
      %v909 = vld [vmem:[%s906 + $0x10] sm:$0xff]
      %v910 = vld [vmem:[%s906 + $0x18] sm:$0xff]
      %v911 = vld [vmem:[#allocation3] sm:$0xff]
      %912 = vmatprep.subr.mxu0 %v470
      %913 = vmatpush1.msra.mxu0 %v469
      %914 = vmatprep.subr.mxu0 %v474
      %915 = vmatpush1.msra.mxu0 %v473
      %916 = vmatprep.subr.mxu0 %v478
      %917 = vmatpush1.msra.mxu0 %v477
      %918 = vmatprep.subr.mxu0 %v482
      %919 = vmatpush1.msra.mxu0 %v481
      %920 = vmatprep.subr.mxu0 %v486
      %921 = vmatpush1.msra.mxu0 %v485
      %922 = vmatprep.subr.mxu0 %v490
      %923 = vmatpush1.msra.mxu0 %v489
      %924 = vmatprep.subr.mxu0 %v494
      %925 = vmatpush1.msra.mxu0 %v493
      %926 = vmatprep.subr.mxu0 %v498
      %927 = vmatpush1.msra.mxu0 %v497
      %928 = vmatprep.subr.mxu0 %v502
      %929 = vmatpush1.msra.mxu0 %v501
      %930 = vmatprep.subr.mxu0 %v506
      %931 = vmatpush1.msra.mxu0 %v505
      %932 = vmatprep.subr.mxu0 %v510
      %933 = vmatpush1.msra.mxu0 %v509
      %934 = vmatprep.subr.mxu0 %v514
      %935 = vmatpush1.msra.mxu0 %v513
      %936 = vmatprep.subr.mxu0 %v518
      %937 = vmatpush1.msra.mxu0 %v517
      %938 = vmatprep.subr.mxu0 %v522
      %939 = vmatpush1.msra.mxu0 %v521
      %940 = vmatprep.subr.mxu0 %v526
      %941 = vmatpush1.msra.mxu0 %v525
      %942 = vmatprep.subr.mxu0 %v530
      %943 = vmatpush1.msra.mxu0 %v529
      %944 = vmatprep.subr.mxu0 0.0
      %945 = vmatpush1.msra.mxu0 0.0
      %946 = vmatprep.subr.mxu0 0.0
      %947 = vmatpush1.msra.mxu0 0.0
      %948 = vmatprep.subr.mxu0 0.0
      %949 = vmatpush1.msra.mxu0 0.0
      %950 = vmatprep.subr.mxu0 0.0
      %951 = vmatpush1.msra.mxu0 0.0
      %952 = vmatprep.subr.mxu0 0.0
      %953 = vmatpush1.msra.mxu0 0.0
      %954 = vmatprep.subr.mxu0 0.0
      %955 = vmatpush1.msra.mxu0 0.0
      %956 = vmatprep.subr.mxu0 0.0
      %957 = vmatpush1.msra.mxu0 0.0
      %958 = vmatprep.subr.mxu0 0.0
      %959 = vmatpush1.msra.mxu0 0.0
      %960 = vmatprep.subr.mxu0 0.0
      %961 = vmatpush1.msra.mxu0 0.0
      %962 = vmatprep.subr.mxu0 0.0
      %963 = vmatpush1.msra.mxu0 0.0
      %964 = vmatprep.subr.mxu0 0.0
      %965 = vmatpush1.msra.mxu0 0.0
      %966 = vmatprep.subr.mxu0 0.0
      %967 = vmatpush1.msra.mxu0 0.0
      %968 = vmatprep.subr.mxu0 0.0
      %969 = vmatpush1.msra.mxu0 0.0
      %970 = vmatprep.subr.mxu0 0.0
      %971 = vmatpush1.msra.mxu0 0.0
      %972 = vmatprep.subr.mxu0 0.0
      %973 = vmatpush1.msra.mxu0 0.0
      %974 = vmatprep.subr.mxu0 0.0
      %975 = vmatpush1.msra.mxu0 0.0
      %976 = vmatprep.mubr.f32.mxu0 0.0
      %977 = vmatmul.mubr.f32.gmra.mrb[0].mxu0 %v911
      %v978 = vpop.f32.mrb[0].mxu0
      %v979 = vadd.f32 0.0, %v978
      %v980 = vpop.f32.mrb[0].mxu0
      %v981 = vadd.f32 0.0, %v980
      %982 = vdwg.mxu0
      %983 = vmatprep.subr.mxu0 %v472
      %984 = vmatpush1.msra.mxu0 %v471
      %985 = vmatprep.subr.mxu0 %v476
      %986 = vmatpush1.msra.mxu0 %v475
      %987 = vmatprep.subr.mxu0 %v480
      %988 = vmatpush1.msra.mxu0 %v479
      %989 = vmatprep.subr.mxu0 %v484
      %990 = vmatpush1.msra.mxu0 %v483
      %991 = vmatprep.subr.mxu0 %v488
      %992 = vmatpush1.msra.mxu0 %v487
      %993 = vmatprep.subr.mxu0 %v492
      %994 = vmatpush1.msra.mxu0 %v491
      %995 = vmatprep.subr.mxu0 %v496
      %996 = vmatpush1.msra.mxu0 %v495
      %997 = vmatprep.subr.mxu0 %v500
      %998 = vmatpush1.msra.mxu0 %v499
      %999 = vmatprep.subr.mxu0 %v504
      %1000 = vmatpush1.msra.mxu0 %v503
      %1001 = vmatprep.subr.mxu0 %v508
      %1002 = vmatpush1.msra.mxu0 %v507
      %1003 = vmatprep.subr.mxu0 %v512
      %1004 = vmatpush1.msra.mxu0 %v511
      %1005 = vmatprep.subr.mxu0 %v516
      %1006 = vmatpush1.msra.mxu0 %v515
      %1007 = vmatprep.subr.mxu0 %v520
      %1008 = vmatpush1.msra.mxu0 %v519
      %1009 = vmatprep.subr.mxu0 %v524
      %1010 = vmatpush1.msra.mxu0 %v523
      %1011 = vmatprep.subr.mxu0 %v528
      %1012 = vmatpush1.msra.mxu0 %v527
      %1013 = vmatprep.subr.mxu0 %v532
      %1014 = vmatpush1.msra.mxu0 %v531
      %1015 = vmatprep.subr.mxu0 0.0
      %1016 = vmatpush1.msra.mxu0 0.0
      %1017 = vmatprep.subr.mxu0 0.0
      %1018 = vmatpush1.msra.mxu0 0.0
      %1019 = vmatprep.subr.mxu0 0.0
      %1020 = vmatpush1.msra.mxu0 0.0
      %1021 = vmatprep.subr.mxu0 0.0
      %1022 = vmatpush1.msra.mxu0 0.0
      %1023 = vmatprep.subr.mxu0 0.0
      %1024 = vmatpush1.msra.mxu0 0.0
      %1025 = vmatprep.subr.mxu0 0.0
      %1026 = vmatpush1.msra.mxu0 0.0
      %1027 = vmatprep.subr.mxu0 0.0
      %1028 = vmatpush1.msra.mxu0 0.0
      %1029 = vmatprep.subr.mxu0 0.0
      %1030 = vmatpush1.msra.mxu0 0.0
      %1031 = vmatprep.subr.mxu0 0.0
      %1032 = vmatpush1.msra.mxu0 0.0
      %1033 = vmatprep.subr.mxu0 0.0
      %1034 = vmatpush1.msra.mxu0 0.0
      %1035 = vmatprep.subr.mxu0 0.0
      %1036 = vmatpush1.msra.mxu0 0.0
      %1037 = vmatprep.subr.mxu0 0.0
      %1038 = vmatpush1.msra.mxu0 0.0
      %1039 = vmatprep.subr.mxu0 0.0
      %1040 = vmatpush1.msra.mxu0 0.0
      %1041 = vmatprep.subr.mxu0 0.0
      %1042 = vmatpush1.msra.mxu0 0.0
      %1043 = vmatprep.subr.mxu0 0.0
      %1044 = vmatpush1.msra.mxu0 0.0
      %1045 = vmatprep.subr.mxu0 0.0
      %1046 = vmatpush1.msra.mxu0 0.0
      %1047 = vmatprep.mubr.f32.mxu0 0.0
      %1048 = vmatmul.mubr.f32.gmra.mrb[0].mxu0 %v911
      %v1049 = vpop.f32.mrb[0].mxu0
      %v1050 = vadd.f32 0.0, %v1049
      %v1051 = vpop.f32.mrb[0].mxu0
      %v1052 = vadd.f32 0.0, %v1051
      %1053 = vdwg.mxu0
      %v1054 = vadd.f32 %v907, %v979
      %v1055 = vadd.f32 %v908, %v981
      %v1056 = vadd.f32 %v909, %v1050
      %v1057 = vadd.f32 %v910, %v1052
      %v1058 = vxor.u32 %v1054, 2147483648
      %v1059 = vxor.u32 %v1055, 2147483648
      %v1060 = vxor.u32 %v1056, 2147483648
      %v1061 = vmul.f32 %v1058, 1.442695
      %v1062 = vpow.pop %v1061
      %v1063 = vmul.f32 %v1059, 1.442695
      %v1064 = vpow.pop %v1063
      %v1065 = vmul.f32 %v1060, 1.442695
      %v1066 = vpow.pop %v1065
      %v1067 = vadd.f32 %v1062, 1.0
      %v1068 = vadd.f32 %v1064, 1.0
      %v1069 = vadd.f32 %v1066, 1.0
      %v1070 = vrcp.pop %v1067
      %v1071 = vmul.f32 1.0, %v1070
      %v1072 = vrcp.pop %v1068
      %v1073 = vmul.f32 1.0, %v1072
      %v1074 = vrcp.pop %v1069
      %v1075 = vmul.f32 1.0, %v1074
      %v1076 = vtanh.pop %v1057
      %v1077 = vld [vmem:[#allocation4] sm:$0xff]
      %v1078 = vmul.f32 %v1073, %v1077
      %v1079 = vmul.f32 %v1071, %v1076
      %v1080 = vadd.f32 %v1078, %v1079
      %v1081 = vtanh.pop %v1080
      %v1082 = vmul.f32 %v1075, %v1081
      %1083 = vst [vmem:[#allocation4] sm:$0xff] %v1080
      %1084 = vst [vmem:[#allocation3] sm:$0xff] %v1082
      %s1085 = sadd.s32 %s539, 3
      %s1086 = smul.u32 %s1085, 4
      %s1087 = smul.addr %s1086, 8
      %s1088 = scalar_lea.vmem [#allocation2], %s1087
      %v1089 = vld [vmem:[%s1088] sm:$0xff]
      %v1090 = vld [vmem:[%s1088 + $0x8] sm:$0xff]
      %v1091 = vld [vmem:[%s1088 + $0x10] sm:$0xff]
      %v1092 = vld [vmem:[%s1088 + $0x18] sm:$0xff]
      %v1093 = vld [vmem:[#allocation3] sm:$0xff]
      %1094 = vmatprep.subr.mxu0 %v470
      %1095 = vmatpush1.msra.mxu0 %v469
      %1096 = vmatprep.subr.mxu0 %v474
      %1097 = vmatpush1.msra.mxu0 %v473
      %1098 = vmatprep.subr.mxu0 %v478
      %1099 = vmatpush1.msra.mxu0 %v477
      %1100 = vmatprep.subr.mxu0 %v482
      %1101 = vmatpush1.msra.mxu0 %v481
      %1102 = vmatprep.subr.mxu0 %v486
      %1103 = vmatpush1.msra.mxu0 %v485
      %1104 = vmatprep.subr.mxu0 %v490
      %1105 = vmatpush1.msra.mxu0 %v489
      %1106 = vmatprep.subr.mxu0 %v494
      %1107 = vmatpush1.msra.mxu0 %v493
      %1108 = vmatprep.subr.mxu0 %v498
      %1109 = vmatpush1.msra.mxu0 %v497
      %1110 = vmatprep.subr.mxu0 %v502
      %1111 = vmatpush1.msra.mxu0 %v501
      %1112 = vmatprep.subr.mxu0 %v506
      %1113 = vmatpush1.msra.mxu0 %v505
      %1114 = vmatprep.subr.mxu0 %v510
      %1115 = vmatpush1.msra.mxu0 %v509
      %1116 = vmatprep.subr.mxu0 %v514
      %1117 = vmatpush1.msra.mxu0 %v513
      %1118 = vmatprep.subr.mxu0 %v518
      %1119 = vmatpush1.msra.mxu0 %v517
      %1120 = vmatprep.subr.mxu0 %v522
      %1121 = vmatpush1.msra.mxu0 %v521
      %1122 = vmatprep.subr.mxu0 %v526
      %1123 = vmatpush1.msra.mxu0 %v525
      %1124 = vmatprep.subr.mxu0 %v530
      %1125 = vmatpush1.msra.mxu0 %v529
      %1126 = vmatprep.subr.mxu0 0.0
      %1127 = vmatpush1.msra.mxu0 0.0
      %1128 = vmatprep.subr.mxu0 0.0
      %1129 = vmatpush1.msra.mxu0 0.0
      %1130 = vmatprep.subr.mxu0 0.0
      %1131 = vmatpush1.msra.mxu0 0.0
      %1132 = vmatprep.subr.mxu0 0.0
      %1133 = vmatpush1.msra.mxu0 0.0
      %1134 = vmatprep.subr.mxu0 0.0
      %1135 = vmatpush1.msra.mxu0 0.0
      %1136 = vmatprep.subr.mxu0 0.0
      %1137 = vmatpush1.msra.mxu0 0.0
      %1138 = vmatprep.subr.mxu0 0.0
      %1139 = vmatpush1.msra.mxu0 0.0
      %1140 = vmatprep.subr.mxu0 0.0
      %1141 = vmatpush1.msra.mxu0 0.0
      %1142 = vmatprep.subr.mxu0 0.0
      %1143 = vmatpush1.msra.mxu0 0.0
      %1144 = vmatprep.subr.mxu0 0.0
      %1145 = vmatpush1.msra.mxu0 0.0
      %1146 = vmatprep.subr.mxu0 0.0
      %1147 = vmatpush1.msra.mxu0 0.0
      %1148 = vmatprep.subr.mxu0 0.0
      %1149 = vmatpush1.msra.mxu0 0.0
      %1150 = vmatprep.subr.mxu0 0.0
      %1151 = vmatpush1.msra.mxu0 0.0
      %1152 = vmatprep.subr.mxu0 0.0
      %1153 = vmatpush1.msra.mxu0 0.0
      %1154 = vmatprep.subr.mxu0 0.0
      %1155 = vmatpush1.msra.mxu0 0.0
      %1156 = vmatprep.subr.mxu0 0.0
      %1157 = vmatpush1.msra.mxu0 0.0
      %1158 = vmatprep.mubr.f32.mxu0 0.0
      %1159 = vmatmul.mubr.f32.gmra.mrb[0].mxu0 %v1093
      %v1160 = vpop.f32.mrb[0].mxu0
      %v1161 = vadd.f32 0.0, %v1160
      %v1162 = vpop.f32.mrb[0].mxu0
      %v1163 = vadd.f32 0.0, %v1162
      %1164 = vdwg.mxu0
      %1165 = vmatprep.subr.mxu0 %v472
      %1166 = vmatpush1.msra.mxu0 %v471
      %1167 = vmatprep.subr.mxu0 %v476
      %1168 = vmatpush1.msra.mxu0 %v475
      %1169 = vmatprep.subr.mxu0 %v480
      %1170 = vmatpush1.msra.mxu0 %v479
      %1171 = vmatprep.subr.mxu0 %v484
      %1172 = vmatpush1.msra.mxu0 %v483
      %1173 = vmatprep.subr.mxu0 %v488
      %1174 = vmatpush1.msra.mxu0 %v487
      %1175 = vmatprep.subr.mxu0 %v492
      %1176 = vmatpush1.msra.mxu0 %v491
      %1177 = vmatprep.subr.mxu0 %v496
      %1178 = vmatpush1.msra.mxu0 %v495
      %1179 = vmatprep.subr.mxu0 %v500
      %1180 = vmatpush1.msra.mxu0 %v499
      %1181 = vmatprep.subr.mxu0 %v504
      %1182 = vmatpush1.msra.mxu0 %v503
      %1183 = vmatprep.subr.mxu0 %v508
      %1184 = vmatpush1.msra.mxu0 %v507
      %1185 = vmatprep.subr.mxu0 %v512
      %1186 = vmatpush1.msra.mxu0 %v511
      %1187 = vmatprep.subr.mxu0 %v516
      %1188 = vmatpush1.msra.mxu0 %v515
      %1189 = vmatprep.subr.mxu0 %v520
      %1190 = vmatpush1.msra.mxu0 %v519
      %1191 = vmatprep.subr.mxu0 %v524
      %1192 = vmatpush1.msra.mxu0 %v523
      %1193 = vmatprep.subr.mxu0 %v528
      %1194 = vmatpush1.msra.mxu0 %v527
      %1195 = vmatprep.subr.mxu0 %v532
      %1196 = vmatpush1.msra.mxu0 %v531
      %1197 = vmatprep.subr.mxu0 0.0
      %1198 = vmatpush1.msra.mxu0 0.0
      %1199 = vmatprep.subr.mxu0 0.0
      %1200 = vmatpush1.msra.mxu0 0.0
      %1201 = vmatprep.subr.mxu0 0.0
      %1202 = vmatpush1.msra.mxu0 0.0
      %1203 = vmatprep.subr.mxu0 0.0
      %1204 = vmatpush1.msra.mxu0 0.0
      %1205 = vmatprep.subr.mxu0 0.0
      %1206 = vmatpush1.msra.mxu0 0.0
      %1207 = vmatprep.subr.mxu0 0.0
      %1208 = vmatpush1.msra.mxu0 0.0
      %1209 = vmatprep.subr.mxu0 0.0
      %1210 = vmatpush1.msra.mxu0 0.0
      %1211 = vmatprep.subr.mxu0 0.0
      %1212 = vmatpush1.msra.mxu0 0.0
      %1213 = vmatprep.subr.mxu0 0.0
      %1214 = vmatpush1.msra.mxu0 0.0
      %1215 = vmatprep.subr.mxu0 0.0
      %1216 = vmatpush1.msra.mxu0 0.0
      %1217 = vmatprep.subr.mxu0 0.0
      %1218 = vmatpush1.msra.mxu0 0.0
      %1219 = vmatprep.subr.mxu0 0.0
      %1220 = vmatpush1.msra.mxu0 0.0
      %1221 = vmatprep.subr.mxu0 0.0
      %1222 = vmatpush1.msra.mxu0 0.0
      %1223 = vmatprep.subr.mxu0 0.0
      %1224 = vmatpush1.msra.mxu0 0.0
      %1225 = vmatprep.subr.mxu0 0.0
      %1226 = vmatpush1.msra.mxu0 0.0
      %1227 = vmatprep.subr.mxu0 0.0
      %1228 = vmatpush1.msra.mxu0 0.0
      %1229 = vmatprep.mubr.f32.mxu0 0.0
      %1230 = vmatmul.mubr.f32.gmra.mrb[0].mxu0 %v1093
      %v1231 = vpop.f32.mrb[0].mxu0
      %v1232 = vadd.f32 0.0, %v1231
      %v1233 = vpop.f32.mrb[0].mxu0
      %v1234 = vadd.f32 0.0, %v1233
      %1235 = vdwg.mxu0
      %v1236 = vadd.f32 %v1089, %v1161
      %v1237 = vadd.f32 %v1090, %v1163
      %v1238 = vadd.f32 %v1091, %v1232
      %v1239 = vadd.f32 %v1092, %v1234
      %v1240 = vxor.u32 %v1236, 2147483648
      %v1241 = vxor.u32 %v1237, 2147483648
      %v1242 = vxor.u32 %v1238, 2147483648
      %v1243 = vmul.f32 %v1240, 1.442695
      %v1244 = vpow.pop %v1243
      %v1245 = vmul.f32 %v1241, 1.442695
      %v1246 = vpow.pop %v1245
      %v1247 = vmul.f32 %v1242, 1.442695
      %v1248 = vpow.pop %v1247
      %v1249 = vadd.f32 %v1244, 1.0
      %v1250 = vadd.f32 %v1246, 1.0
      %v1251 = vadd.f32 %v1248, 1.0
      %v1252 = vrcp.pop %v1249
      %v1253 = vmul.f32 1.0, %v1252
      %v1254 = vrcp.pop %v1250
      %v1255 = vmul.f32 1.0, %v1254
      %v1256 = vrcp.pop %v1251
      %v1257 = vmul.f32 1.0, %v1256
      %v1258 = vtanh.pop %v1239
      %v1259 = vld [vmem:[#allocation4] sm:$0xff]
      %v1260 = vmul.f32 %v1255, %v1259
      %v1261 = vmul.f32 %v1253, %v1258
      %v1262 = vadd.f32 %v1260, %v1261
      %v1263 = vtanh.pop %v1262
      %v1264 = vmul.f32 %v1257, %v1263
      %1265 = vst [vmem:[#allocation4] sm:$0xff] %v1262
      %1266 = vst [vmem:[#allocation3] sm:$0xff] %v1264
    $region50: #{tpu_custom_call.1} parent=1 // loop_footer
      %s538 = sadd.s32 1, %s534
    $region51: #{tpu_custom_call.1} parent=1 // loop_footer_branch
      %533 = sbr.rel target = $region47
    $region52: #{tpu_custom_call.1} parent=1 // loop_exit
      _
    // Predicated region
    $region53: #{tpu_custom_call.1} parent=1 // pred_check
      %p1267 = pneg %p79
    $region54: #{tpu_custom_call.1} parent=1 // pred_check_branch
      %1269 = sbr.rel (%p1267) target = $region56
    $region55: #{tpu_custom_call.1} parent=1 // pred_region
      %v1270 = vld [vmem:[#allocation3] sm:$0xff]
      %v1271 = vld [vmem:[#allocation11] sm:$0xff]
      %v1272 = vld [vmem:[#allocation11 + $0x8] sm:$0xff]
      %v1273 = vld [vmem:[#allocation11 + $0x10] sm:$0xff]
      %v1274 = vld [vmem:[#allocation11 + $0x18] sm:$0xff]
      %v1275 = vld [vmem:[#allocation11 + $0x20] sm:$0xff]
      %v1276 = vld [vmem:[#allocation11 + $0x28] sm:$0xff]
      %v1277 = vld [vmem:[#allocation11 + $0x30] sm:$0xff]
      %v1278 = vld [vmem:[#allocation11 + $0x38] sm:$0xff]
      %v1279 = vld [vmem:[#allocation11 + $0x40] sm:$0xff]
      %v1280 = vld [vmem:[#allocation11 + $0x48] sm:$0xff]
      %v1281 = vld [vmem:[#allocation11 + $0x50] sm:$0xff]
      %v1282 = vld [vmem:[#allocation11 + $0x58] sm:$0xff]
      %v1283 = vld [vmem:[#allocation11 + $0x60] sm:$0xff]
      %v1284 = vld [vmem:[#allocation11 + $0x68] sm:$0xff]
      %v1285 = vld [vmem:[#allocation11 + $0x70] sm:$0xff]
      %v1286 = vld [vmem:[#allocation11 + $0x78] sm:$0xff]
      %v1287 = vld [vmem:[%s5] sm:$0x1]
      %v1289 = vlaneseq
      %v1290 = vshrl.u32 %v1289, 7
      %v1291 = vsub.s32 0, %v1290
      %v1292 = vrot.slane %v1287, %v1291
      %1294 = vmatprep.subr.mxu0 0.0
      %1295 = vmatpush1.msra.mxu0 %v1271
      %1296 = vmatprep.subr.mxu0 0.0
      %1297 = vmatpush1.msra.mxu0 %v1272
      %1298 = vmatprep.subr.mxu0 0.0
      %1299 = vmatpush1.msra.mxu0 %v1273
      %1300 = vmatprep.subr.mxu0 0.0
      %1301 = vmatpush1.msra.mxu0 %v1274
      %1302 = vmatprep.subr.mxu0 0.0
      %1303 = vmatpush1.msra.mxu0 %v1275
      %1304 = vmatprep.subr.mxu0 0.0
      %1305 = vmatpush1.msra.mxu0 %v1276
      %1306 = vmatprep.subr.mxu0 0.0
      %1307 = vmatpush1.msra.mxu0 %v1277
      %1308 = vmatprep.subr.mxu0 0.0
      %1309 = vmatpush1.msra.mxu0 %v1278
      %1310 = vmatprep.subr.mxu0 0.0
      %1311 = vmatpush1.msra.mxu0 %v1279
      %1312 = vmatprep.subr.mxu0 0.0
      %1313 = vmatpush1.msra.mxu0 %v1280
      %1314 = vmatprep.subr.mxu0 0.0
      %1315 = vmatpush1.msra.mxu0 %v1281
      %1316 = vmatprep.subr.mxu0 0.0
      %1317 = vmatpush1.msra.mxu0 %v1282
      %1318 = vmatprep.subr.mxu0 0.0
      %1319 = vmatpush1.msra.mxu0 %v1283
      %1320 = vmatprep.subr.mxu0 0.0
      %1321 = vmatpush1.msra.mxu0 %v1284
      %1322 = vmatprep.subr.mxu0 0.0
      %1323 = vmatpush1.msra.mxu0 %v1285
      %1324 = vmatprep.subr.mxu0 0.0
      %1325 = vmatpush1.msra.mxu0 %v1286
      %1326 = vmatprep.subr.mxu0 0.0
      %1327 = vmatpush1.msra.mxu0 0.0
      %1328 = vmatprep.subr.mxu0 0.0
      %1329 = vmatpush1.msra.mxu0 0.0
      %1330 = vmatprep.subr.mxu0 0.0
      %1331 = vmatpush1.msra.mxu0 0.0
      %1332 = vmatprep.subr.mxu0 0.0
      %1333 = vmatpush1.msra.mxu0 0.0
      %1334 = vmatprep.subr.mxu0 0.0
      %1335 = vmatpush1.msra.mxu0 0.0
      %1336 = vmatprep.subr.mxu0 0.0
      %1337 = vmatpush1.msra.mxu0 0.0
      %1338 = vmatprep.subr.mxu0 0.0
      %1339 = vmatpush1.msra.mxu0 0.0
      %1340 = vmatprep.subr.mxu0 0.0
      %1341 = vmatpush1.msra.mxu0 0.0
      %1342 = vmatprep.subr.mxu0 0.0
      %1343 = vmatpush1.msra.mxu0 0.0
      %1344 = vmatprep.subr.mxu0 0.0
      %1345 = vmatpush1.msra.mxu0 0.0
      %1346 = vmatprep.subr.mxu0 0.0
      %1347 = vmatpush1.msra.mxu0 0.0
      %1348 = vmatprep.subr.mxu0 0.0
      %1349 = vmatpush1.msra.mxu0 0.0
      %1350 = vmatprep.subr.mxu0 0.0
      %1351 = vmatpush1.msra.mxu0 0.0
      %1352 = vmatprep.subr.mxu0 0.0
      %1353 = vmatpush1.msra.mxu0 0.0
      %1354 = vmatprep.subr.mxu0 0.0
      %1355 = vmatpush1.msra.mxu0 0.0
      %1356 = vmatprep.subr.mxu0 0.0
      %1357 = vmatpush1.msra.mxu0 0.0
      %1358 = vmatprep.mubr.f32.mxu0 0.0
      %1359 = vmatmul.mubr.f32.gmra.mrb[0].mxu0 %v1270
      %v1360 = vpop.f32.mrb[0].mxu0
      %v1361 = vadd.f32 %v1292, %v1360
      %v1362 = vpop.f32.mrb[0].mxu0
      %1363 = vdwg.mxu0
      %1364 = vst [vmem:[#allocation13] sm:$0xff] %v1361
    $region56: #{tpu_custom_call.1} parent=1 // pred_fallthru
      _
    // Predicated region
    $region57: #{tpu_custom_call.1} parent=1 // pred_check
      _
    $region58: #{tpu_custom_call.1} parent=1 // pred_check_branch
      %1366 = sbr.rel (0) target = $region60
    $region59: #{tpu_custom_call.1} parent=1 // pred_region
      %s1368 = ssub.s32 128, 128
      %1369 = vsyncadd [#allocation7], %s1368
      %s1371 = sshll.u32 [#allocation13], 4
      %s1372 = int_to_ptr.vmem [resolvable:$true] %s1371
      %1374 = dma.vmem_to_hbm [thread:$0]  %s1372, 128, %s6, [#allocation7]
    $region60: #{tpu_custom_call.1} parent=1 // pred_fallthru
      _
    // Predicated region
    $region61: #{tpu_custom_call.1} parent=1 // pred_check
      _
    $region62: #{tpu_custom_call.1} parent=1 // pred_check_branch
      %1376 = sbr.rel (0) target = $region64
    $region63: #{tpu_custom_call.1} parent=1 // pred_region
      %1377 = dma.done [#allocation7], 128
    $region64: #{tpu_custom_call.1} parent=1 // pred_fallthru
      _
    %1378 = vsyncpa [#allocation6], 1
    %1379 = vsyncpa [#allocation9], 1
    %1380 = vsyncpa [#allocation12], 1
    %1381 = vsyncpa [#allocation7], 1

</llo_original>
